<compile_context>
chip_gen: v7x
topology: tpu7x:2x2x1
jax: 0.10.0
libtpu: 0.0.40
codegen_flags: <defaults>
</compile_context>

<pallas_src>
import functools

import jax
import jax.numpy as jnp
from jax.experimental import pallas as pl
from jax.experimental.pallas import tpu as pltpu

EPS = 1e-5  # PyTorch BatchNorm default eps


def _decoder_kernel(xT_ref, lw_ref, lb_ref,
                    w1_ref, p1_ref, w2_ref, p2_ref,
                    w3_ref, p3_ref, w4_ref, p4_ref,
                    cw_ref, cs_ref, o_ref):
    """Whole PolicyDecoder forward (pre-softmax), transposed (C, pixels) layout."""
    xT = xT_ref[...]                                            # (DIM, B) f32

    # ---- Linear(dim, 4*grid) + ReLU, one small matmul per 2x2 sub-position g0 ----
    parts = []
    for g in range(4):
        y = jnp.dot(lw_ref[g], xT, preferred_element_type=jnp.float32)
        parts.append(jnp.maximum(y + lb_ref[g], 0.0))           # (grid, B)
    act = jnp.concatenate(parts, axis=1)                        # (grid, 4B), col = g0*B + b

    # ---- 4 x [ConvTranspose2d(k=2, s=2) + BatchNorm2d(train) + ReLU] ----
    for w_ref, p_ref in ((w1_ref, p1_ref), (w2_ref, p2_ref),
                         (w3_ref, p3_ref), (w4_ref, p4_ref)):
        bias, gamma, beta = p_ref[0], p_ref[1], p_ref[2]        # (Cout, 1) each
        m = act.shape[1]                                        # B * H_in * W_in
        cnt = 4.0 * m                                           # B * H_out * W_out
        # One matmul per (di, dj) sub-position; no pixel shuffle between layers.
        ys = [jnp.dot(w_ref[g], act, preferred_element_type=jnp.float32) + bias
              for g in range(4)]                                # 4 x (Cout, m)
        # BN batch stats per channel: two lane-dense reductions over full tiles.
        mean = jnp.sum(ys[0] + ys[1] + ys[2] + ys[3],
                       axis=1, keepdims=True) / cnt             # (Cout, 1)
        cs = [y - mean for y in ys]
        var = jnp.sum(cs[0] * cs[0] + cs[1] * cs[1] + cs[2] * cs[2] + cs[3] * cs[3],
                      axis=1, keepdims=True) / cnt              # (Cout, 1), biased
        scale = gamma * jax.lax.rsqrt(var + EPS)                # (Cout, 1)
        act = jnp.concatenate(
            [jnp.maximum(c * scale + beta, 0.0) for c in cs],
            axis=1)                                             # (Cout, 4m), new pixels (g, p)

    # ---- Conv2d(grid//16, 1, k=1) + BatchNorm2d(1) + ReLU — VPU/XLU only ----
    y = jnp.sum(act * cw_ref[...], axis=0, keepdims=True) + cs_ref[0]   # (1, B*grid*grid)
    n = y.shape[1]
    mean = jnp.sum(y, axis=1, keepdims=True) / n
    c = y - mean
    var = jnp.sum(c * c, axis=1, keepdims=True) / n
    inv = jax.lax.rsqrt(var + EPS)
    o_ref[...] = jnp.maximum(c * (cs_ref[1] * inv) + cs_ref[2], 0.0)    # lane-dense output


def _pack_params(params, dim, grid):
    """Rearrange PyTorch-layout parameters for the transposed kernel layout."""
    # Linear: output feature f = c*4 + 2*h0 + w0  ->  stacked (g0, c, d)
    lw = jnp.transpose(params["lin_w"].reshape(dim, grid, 4), (2, 1, 0))      # (4, grid, dim)
    lb = jnp.transpose(params["lin_b"].reshape(grid, 4), (1, 0)).reshape(4, grid, 1)
    packed = [lw, lb]
    # ConvTranspose2d weight (Cin, Cout, 2, 2) -> (g=2*di+dj, Cout, Cin)
    for wt, bt, gamma, beta in params["deconv"]:
        cin, cout = wt.shape[0], wt.shape[1]
        w = jnp.transpose(wt, (2, 3, 1, 0)).reshape(4, cout, cin)
        p = jnp.stack([bt, gamma, beta]).reshape(3, cout, 1)
        packed += [w, p]
    cw = params["conv_w"][0, :, 0, 0].reshape(-1, 1)                           # (Cin_last, 1)
    cscal = jnp.stack([params["conv_b"][0], params["conv_gamma"][0],
                       params["conv_beta"][0]])                                # (3,) SMEM scalars
    packed += [cw, cscal]
    return packed


def policy_decoder_forward(params, x, *, grid):
    b, dim = x.shape
    assert grid == 32, "4 deconv(k=2,s=2) levels from 2x2 imply grid == 32"
    packed = _pack_params(params, dim, grid)

    vmem = pl.BlockSpec(memory_space=pltpu.MemorySpace.VMEM)
    smem = pl.BlockSpec(memory_space=pltpu.MemorySpace.SMEM)
    out = pl.pallas_call(
        _decoder_kernel,
        out_shape=jax.ShapeDtypeStruct((1, b * grid * grid), jnp.float32),
        in_specs=[vmem] * 12 + [smem],
        out_specs=vmem,
    )(x.T.astype(jnp.float32), *packed)

    # Single pixel-unshuffle: kernel pixel ordering (slow -> fast) is
    # (di4, dj4, di3, dj3, di2, dj2, di1, dj1, h0, w0, b); target is (b, H-bits, W-bits).
    o = out.reshape((2,) * 10 + (b,))
    o = jnp.transpose(o, (10, 8, 6, 4, 2, 0, 9, 7, 5, 3, 1))
    logits = o.reshape(b, grid * grid)
    return jax.nn.softmax(logits, axis=-1)


def init_params(key, dimension, grid):
    def nxt():
        nonlocal key
        key, sub = jax.random.split(key)
        return sub

    p = {}
    p["lin_w"] = jax.random.normal(nxt(), (dimension, 4 * grid),
                                   jnp.float32) / jnp.sqrt(float(dimension))
    p["lin_b"] = 0.05 * jax.random.normal(nxt(), (4 * grid,), jnp.float32)

    p["deconv"] = []
    c = grid
    for _ in range(4):
        cin, cout = c, c // 2
        wt = jax.random.normal(nxt(), (cin, cout, 2, 2),
                               jnp.float32) / jnp.sqrt(float(cin * 4))
        bt = 0.05 * jax.random.normal(nxt(), (cout,), jnp.float32)
        gamma = 1.0 + 0.1 * jax.random.normal(nxt(), (cout,), jnp.float32)
        beta = 0.1 * jax.random.normal(nxt(), (cout,), jnp.float32)
        p["deconv"].append((wt, bt, gamma, beta))
        c = cout

    cin = grid // 16
    p["conv_w"] = jax.random.normal(nxt(), (1, cin, 1, 1),
                                    jnp.float32) / jnp.sqrt(float(cin))
    p["conv_b"] = 0.05 * jax.random.normal(nxt(), (1,), jnp.float32)
    p["conv_gamma"] = 1.0 + 0.1 * jax.random.normal(nxt(), (1,), jnp.float32)
    p["conv_beta"] = 0.1 * jax.random.normal(nxt(), (1,), jnp.float32)
    return p


if __name__ == "__main__":
    B, DIM, GRID = 2, 16, 32  # grid must be 32 for the module's final reshape to hold
    key = jax.random.PRNGKey(0)
    kx, kp = jax.random.split(key)
    x = jax.random.normal(kx, (B, DIM), jnp.float32)
    params = init_params(kp, DIM, GRID)

    fwd = jax.jit(functools.partial(policy_decoder_forward, grid=GRID))
    out = jax.block_until_ready(fwd(params, x))

    assert out.shape == (B, GRID * GRID), out.shape
    assert bool(jnp.all(jnp.isfinite(out)))
    assert bool(jnp.allclose(jnp.sum(out, axis=-1), 1.0, atol=1e-4))
    print("KERNEL_OK")
</pallas_src>

<mosaic_0001>
module attributes {stable_mosaic.version = 11 : i64} {
  func.func @_decoder_kernel(%arg0: memref<16x2xf32, #tpu.memory_space<vmem>>, %arg1: memref<4x32x16xf32, #tpu.memory_space<vmem>>, %arg2: memref<4x32x1xf32, #tpu.memory_space<vmem>>, %arg3: memref<4x16x32xf32, #tpu.memory_space<vmem>>, %arg4: memref<3x16x1xf32, #tpu.memory_space<vmem>>, %arg5: memref<4x8x16xf32, #tpu.memory_space<vmem>>, %arg6: memref<3x8x1xf32, #tpu.memory_space<vmem>>, %arg7: memref<4x4x8xf32, #tpu.memory_space<vmem>>, %arg8: memref<3x4x1xf32, #tpu.memory_space<vmem>>, %arg9: memref<4x2x4xf32, #tpu.memory_space<vmem>>, %arg10: memref<3x2x1xf32, #tpu.memory_space<vmem>>, %arg11: memref<2x1xf32, #tpu.memory_space<vmem>>, %arg12: memref<3xf32, #tpu.memory_space<smem>>, %arg13: memref<1x2048xf32, #tpu.memory_space<vmem>>) attributes {dimension_semantics = [], scalar_prefetch = 0 : i64, scratch_operands = 0 : i64, tpu.core_type = #tpu.core_type<tc>} {
    %c0 = arith.constant 0 : index
    %c0_0 = arith.constant 0 : index
    %0 = vector.load %arg0[%c0, %c0_0] : memref<16x2xf32, #tpu.memory_space<vmem>>, vector<16x2xf32>
    %c0_1 = arith.constant 0 : index
    %c0_2 = arith.constant 0 : index
    %c0_3 = arith.constant 0 : index
    %1 = vector.load %arg1[%c0_1, %c0_2, %c0_3] : memref<4x32x16xf32, #tpu.memory_space<vmem>>, vector<1x32x16xf32>
    %2 = vector.shape_cast %1 : vector<1x32x16xf32> to vector<32x16xf32>
    %cst = arith.constant dense<0.000000e+00> : vector<32x2xf32>
    %3 = tpu.matmul %2, %0, %cst {dimension_numbers = #tpu.dot_dimension_numbers<[1], [0], [0], [1], [0, 0, 1, 1], [], []>} : vector<32x16xf32>, vector<16x2xf32>, vector<32x2xf32> -> vector<32x2xf32>
    %c0_4 = arith.constant 0 : index
    %c0_5 = arith.constant 0 : index
    %c0_6 = arith.constant 0 : index
    %4 = vector.load %arg2[%c0_4, %c0_5, %c0_6] : memref<4x32x1xf32, #tpu.memory_space<vmem>>, vector<1x32x1xf32>
    %5 = vector.shape_cast %4 : vector<1x32x1xf32> to vector<32x1xf32>
    %6 = vector.broadcast %5 : vector<32x1xf32> to vector<32x2xf32>
    %7 = arith.addf %3, %6 : vector<32x2xf32>
    %cst_7 = arith.constant 0.000000e+00 : f32
    %8 = vector.broadcast %cst_7 : f32 to vector<32x2xf32>
    %9 = arith.maximumf %7, %8 : vector<32x2xf32>
    %c1 = arith.constant 1 : index
    %c0_8 = arith.constant 0 : index
    %c0_9 = arith.constant 0 : index
    %10 = vector.load %arg1[%c1, %c0_8, %c0_9] : memref<4x32x16xf32, #tpu.memory_space<vmem>>, vector<1x32x16xf32>
    %11 = vector.shape_cast %10 : vector<1x32x16xf32> to vector<32x16xf32>
    %cst_10 = arith.constant dense<0.000000e+00> : vector<32x2xf32>
    %12 = tpu.matmul %11, %0, %cst_10 {dimension_numbers = #tpu.dot_dimension_numbers<[1], [0], [0], [1], [0, 0, 1, 1], [], []>} : vector<32x16xf32>, vector<16x2xf32>, vector<32x2xf32> -> vector<32x2xf32>
    %c1_11 = arith.constant 1 : index
    %c0_12 = arith.constant 0 : index
    %c0_13 = arith.constant 0 : index
    %13 = vector.load %arg2[%c1_11, %c0_12, %c0_13] : memref<4x32x1xf32, #tpu.memory_space<vmem>>, vector<1x32x1xf32>
    %14 = vector.shape_cast %13 : vector<1x32x1xf32> to vector<32x1xf32>
    %15 = vector.broadcast %14 : vector<32x1xf32> to vector<32x2xf32>
    %16 = arith.addf %12, %15 : vector<32x2xf32>
    %cst_14 = arith.constant 0.000000e+00 : f32
    %17 = vector.broadcast %cst_14 : f32 to vector<32x2xf32>
    %18 = arith.maximumf %16, %17 : vector<32x2xf32>
    %c2 = arith.constant 2 : index
    %c0_15 = arith.constant 0 : index
    %c0_16 = arith.constant 0 : index
    %19 = vector.load %arg1[%c2, %c0_15, %c0_16] : memref<4x32x16xf32, #tpu.memory_space<vmem>>, vector<1x32x16xf32>
    %20 = vector.shape_cast %19 : vector<1x32x16xf32> to vector<32x16xf32>
    %cst_17 = arith.constant dense<0.000000e+00> : vector<32x2xf32>
    %21 = tpu.matmul %20, %0, %cst_17 {dimension_numbers = #tpu.dot_dimension_numbers<[1], [0], [0], [1], [0, 0, 1, 1], [], []>} : vector<32x16xf32>, vector<16x2xf32>, vector<32x2xf32> -> vector<32x2xf32>
    %c2_18 = arith.constant 2 : index
    %c0_19 = arith.constant 0 : index
    %c0_20 = arith.constant 0 : index
    %22 = vector.load %arg2[%c2_18, %c0_19, %c0_20] : memref<4x32x1xf32, #tpu.memory_space<vmem>>, vector<1x32x1xf32>
    %23 = vector.shape_cast %22 : vector<1x32x1xf32> to vector<32x1xf32>
    %24 = vector.broadcast %23 : vector<32x1xf32> to vector<32x2xf32>
    %25 = arith.addf %21, %24 : vector<32x2xf32>
    %cst_21 = arith.constant 0.000000e+00 : f32
    %26 = vector.broadcast %cst_21 : f32 to vector<32x2xf32>
    %27 = arith.maximumf %25, %26 : vector<32x2xf32>
    %c3 = arith.constant 3 : index
    %c0_22 = arith.constant 0 : index
    %c0_23 = arith.constant 0 : index
    %28 = vector.load %arg1[%c3, %c0_22, %c0_23] : memref<4x32x16xf32, #tpu.memory_space<vmem>>, vector<1x32x16xf32>
    %29 = vector.shape_cast %28 : vector<1x32x16xf32> to vector<32x16xf32>
    %cst_24 = arith.constant dense<0.000000e+00> : vector<32x2xf32>
    %30 = tpu.matmul %29, %0, %cst_24 {dimension_numbers = #tpu.dot_dimension_numbers<[1], [0], [0], [1], [0, 0, 1, 1], [], []>} : vector<32x16xf32>, vector<16x2xf32>, vector<32x2xf32> -> vector<32x2xf32>
    %c3_25 = arith.constant 3 : index
    %c0_26 = arith.constant 0 : index
    %c0_27 = arith.constant 0 : index
    %31 = vector.load %arg2[%c3_25, %c0_26, %c0_27] : memref<4x32x1xf32, #tpu.memory_space<vmem>>, vector<1x32x1xf32>
    %32 = vector.shape_cast %31 : vector<1x32x1xf32> to vector<32x1xf32>
    %33 = vector.broadcast %32 : vector<32x1xf32> to vector<32x2xf32>
    %34 = arith.addf %30, %33 : vector<32x2xf32>
    %cst_28 = arith.constant 0.000000e+00 : f32
    %35 = vector.broadcast %cst_28 : f32 to vector<32x2xf32>
    %36 = arith.maximumf %34, %35 : vector<32x2xf32>
    %37 = tpu.concatenate %9, %18, %27, %36 in 1 : vector<32x2xf32>, vector<32x2xf32>, vector<32x2xf32>, vector<32x2xf32> -> vector<32x8xf32>
    %c0_29 = arith.constant 0 : index
    %c0_30 = arith.constant 0 : index
    %c0_31 = arith.constant 0 : index
    %38 = vector.load %arg4[%c0_29, %c0_30, %c0_31] : memref<3x16x1xf32, #tpu.memory_space<vmem>>, vector<1x16x1xf32>
    %39 = vector.shape_cast %38 : vector<1x16x1xf32> to vector<16x1xf32>
    %c1_32 = arith.constant 1 : index
    %c0_33 = arith.constant 0 : index
    %c0_34 = arith.constant 0 : index
    %40 = vector.load %arg4[%c1_32, %c0_33, %c0_34] : memref<3x16x1xf32, #tpu.memory_space<vmem>>, vector<1x16x1xf32>
    %41 = vector.shape_cast %40 : vector<1x16x1xf32> to vector<16x1xf32>
    %c2_35 = arith.constant 2 : index
    %c0_36 = arith.constant 0 : index
    %c0_37 = arith.constant 0 : index
    %42 = vector.load %arg4[%c2_35, %c0_36, %c0_37] : memref<3x16x1xf32, #tpu.memory_space<vmem>>, vector<1x16x1xf32>
    %43 = vector.shape_cast %42 : vector<1x16x1xf32> to vector<16x1xf32>
    %c0_38 = arith.constant 0 : index
    %c0_39 = arith.constant 0 : index
    %c0_40 = arith.constant 0 : index
    %44 = vector.load %arg3[%c0_38, %c0_39, %c0_40] : memref<4x16x32xf32, #tpu.memory_space<vmem>>, vector<1x16x32xf32>
    %45 = vector.shape_cast %44 : vector<1x16x32xf32> to vector<16x32xf32>
    %cst_41 = arith.constant dense<0.000000e+00> : vector<16x8xf32>
    %46 = tpu.matmul %45, %37, %cst_41 {dimension_numbers = #tpu.dot_dimension_numbers<[1], [0], [0], [1], [0, 0, 1, 1], [], []>} : vector<16x32xf32>, vector<32x8xf32>, vector<16x8xf32> -> vector<16x8xf32>
    %47 = vector.broadcast %39 : vector<16x1xf32> to vector<16x8xf32>
    %48 = arith.addf %46, %47 : vector<16x8xf32>
    %c1_42 = arith.constant 1 : index
    %c0_43 = arith.constant 0 : index
    %c0_44 = arith.constant 0 : index
    %49 = vector.load %arg3[%c1_42, %c0_43, %c0_44] : memref<4x16x32xf32, #tpu.memory_space<vmem>>, vector<1x16x32xf32>
    %50 = vector.shape_cast %49 : vector<1x16x32xf32> to vector<16x32xf32>
    %cst_45 = arith.constant dense<0.000000e+00> : vector<16x8xf32>
    %51 = tpu.matmul %50, %37, %cst_45 {dimension_numbers = #tpu.dot_dimension_numbers<[1], [0], [0], [1], [0, 0, 1, 1], [], []>} : vector<16x32xf32>, vector<32x8xf32>, vector<16x8xf32> -> vector<16x8xf32>
    %52 = vector.broadcast %39 : vector<16x1xf32> to vector<16x8xf32>
    %53 = arith.addf %51, %52 : vector<16x8xf32>
    %c2_46 = arith.constant 2 : index
    %c0_47 = arith.constant 0 : index
    %c0_48 = arith.constant 0 : index
    %54 = vector.load %arg3[%c2_46, %c0_47, %c0_48] : memref<4x16x32xf32, #tpu.memory_space<vmem>>, vector<1x16x32xf32>
    %55 = vector.shape_cast %54 : vector<1x16x32xf32> to vector<16x32xf32>
    %cst_49 = arith.constant dense<0.000000e+00> : vector<16x8xf32>
    %56 = tpu.matmul %55, %37, %cst_49 {dimension_numbers = #tpu.dot_dimension_numbers<[1], [0], [0], [1], [0, 0, 1, 1], [], []>} : vector<16x32xf32>, vector<32x8xf32>, vector<16x8xf32> -> vector<16x8xf32>
    %57 = vector.broadcast %39 : vector<16x1xf32> to vector<16x8xf32>
    %58 = arith.addf %56, %57 : vector<16x8xf32>
    %c3_50 = arith.constant 3 : index
    %c0_51 = arith.constant 0 : index
    %c0_52 = arith.constant 0 : index
    %59 = vector.load %arg3[%c3_50, %c0_51, %c0_52] : memref<4x16x32xf32, #tpu.memory_space<vmem>>, vector<1x16x32xf32>
    %60 = vector.shape_cast %59 : vector<1x16x32xf32> to vector<16x32xf32>
    %cst_53 = arith.constant dense<0.000000e+00> : vector<16x8xf32>
    %61 = tpu.matmul %60, %37, %cst_53 {dimension_numbers = #tpu.dot_dimension_numbers<[1], [0], [0], [1], [0, 0, 1, 1], [], []>} : vector<16x32xf32>, vector<32x8xf32>, vector<16x8xf32> -> vector<16x8xf32>
    %62 = vector.broadcast %39 : vector<16x1xf32> to vector<16x8xf32>
    %63 = arith.addf %61, %62 : vector<16x8xf32>
    %64 = arith.addf %48, %53 : vector<16x8xf32>
    %65 = arith.addf %64, %58 : vector<16x8xf32>
    %66 = arith.addf %65, %63 : vector<16x8xf32>
    %cst_54 = arith.constant dense<0.000000e+00> : vector<16xf32>
    %67 = vector.multi_reduction <add>, %66, %cst_54 [1] : vector<16x8xf32> to vector<16xf32>
    %68 = vector.shape_cast %67 : vector<16xf32> to vector<16x1xf32>
    %cst_55 = arith.constant 3.200000e+01 : f32
    %69 = vector.broadcast %cst_55 : f32 to vector<16x1xf32>
    %70 = arith.divf %68, %69 : vector<16x1xf32>
    %71 = vector.broadcast %70 : vector<16x1xf32> to vector<16x8xf32>
    %72 = arith.subf %48, %71 : vector<16x8xf32>
    %73 = vector.broadcast %70 : vector<16x1xf32> to vector<16x8xf32>
    %74 = arith.subf %53, %73 : vector<16x8xf32>
    %75 = vector.broadcast %70 : vector<16x1xf32> to vector<16x8xf32>
    %76 = arith.subf %58, %75 : vector<16x8xf32>
    %77 = vector.broadcast %70 : vector<16x1xf32> to vector<16x8xf32>
    %78 = arith.subf %63, %77 : vector<16x8xf32>
    %79 = arith.mulf %72, %72 : vector<16x8xf32>
    %80 = arith.mulf %74, %74 : vector<16x8xf32>
    %81 = arith.addf %79, %80 : vector<16x8xf32>
    %82 = arith.mulf %76, %76 : vector<16x8xf32>
    %83 = arith.addf %81, %82 : vector<16x8xf32>
    %84 = arith.mulf %78, %78 : vector<16x8xf32>
    %85 = arith.addf %83, %84 : vector<16x8xf32>
    %cst_56 = arith.constant dense<0.000000e+00> : vector<16xf32>
    %86 = vector.multi_reduction <add>, %85, %cst_56 [1] : vector<16x8xf32> to vector<16xf32>
    %87 = vector.shape_cast %86 : vector<16xf32> to vector<16x1xf32>
    %cst_57 = arith.constant 3.200000e+01 : f32
    %88 = vector.broadcast %cst_57 : f32 to vector<16x1xf32>
    %89 = arith.divf %87, %88 : vector<16x1xf32>
    %cst_58 = arith.constant 9.99999974E-6 : f32
    %90 = vector.broadcast %cst_58 : f32 to vector<16x1xf32>
    %91 = arith.addf %89, %90 : vector<16x1xf32>
    %92 = math.rsqrt %91 : vector<16x1xf32>
    %93 = arith.mulf %41, %92 : vector<16x1xf32>
    %94 = vector.broadcast %93 : vector<16x1xf32> to vector<16x8xf32>
    %95 = arith.mulf %72, %94 : vector<16x8xf32>
    %96 = vector.broadcast %43 : vector<16x1xf32> to vector<16x8xf32>
    %97 = arith.addf %95, %96 : vector<16x8xf32>
    %cst_59 = arith.constant 0.000000e+00 : f32
    %98 = vector.broadcast %cst_59 : f32 to vector<16x8xf32>
    %99 = arith.maximumf %97, %98 : vector<16x8xf32>
    %100 = vector.broadcast %93 : vector<16x1xf32> to vector<16x8xf32>
    %101 = arith.mulf %74, %100 : vector<16x8xf32>
    %102 = vector.broadcast %43 : vector<16x1xf32> to vector<16x8xf32>
    %103 = arith.addf %101, %102 : vector<16x8xf32>
    %cst_60 = arith.constant 0.000000e+00 : f32
    %104 = vector.broadcast %cst_60 : f32 to vector<16x8xf32>
    %105 = arith.maximumf %103, %104 : vector<16x8xf32>
    %106 = vector.broadcast %93 : vector<16x1xf32> to vector<16x8xf32>
    %107 = arith.mulf %76, %106 : vector<16x8xf32>
    %108 = vector.broadcast %43 : vector<16x1xf32> to vector<16x8xf32>
    %109 = arith.addf %107, %108 : vector<16x8xf32>
    %cst_61 = arith.constant 0.000000e+00 : f32
    %110 = vector.broadcast %cst_61 : f32 to vector<16x8xf32>
    %111 = arith.maximumf %109, %110 : vector<16x8xf32>
    %112 = vector.broadcast %93 : vector<16x1xf32> to vector<16x8xf32>
    %113 = arith.mulf %78, %112 : vector<16x8xf32>
    %114 = vector.broadcast %43 : vector<16x1xf32> to vector<16x8xf32>
    %115 = arith.addf %113, %114 : vector<16x8xf32>
    %cst_62 = arith.constant 0.000000e+00 : f32
    %116 = vector.broadcast %cst_62 : f32 to vector<16x8xf32>
    %117 = arith.maximumf %115, %116 : vector<16x8xf32>
    %118 = tpu.concatenate %99, %105, %111, %117 in 1 : vector<16x8xf32>, vector<16x8xf32>, vector<16x8xf32>, vector<16x8xf32> -> vector<16x32xf32>
    %c0_63 = arith.constant 0 : index
    %c0_64 = arith.constant 0 : index
    %c0_65 = arith.constant 0 : index
    %119 = vector.load %arg6[%c0_63, %c0_64, %c0_65] : memref<3x8x1xf32, #tpu.memory_space<vmem>>, vector<1x8x1xf32>
    %120 = vector.shape_cast %119 : vector<1x8x1xf32> to vector<8x1xf32>
    %c1_66 = arith.constant 1 : index
    %c0_67 = arith.constant 0 : index
    %c0_68 = arith.constant 0 : index
    %121 = vector.load %arg6[%c1_66, %c0_67, %c0_68] : memref<3x8x1xf32, #tpu.memory_space<vmem>>, vector<1x8x1xf32>
    %122 = vector.shape_cast %121 : vector<1x8x1xf32> to vector<8x1xf32>
    %c2_69 = arith.constant 2 : index
    %c0_70 = arith.constant 0 : index
    %c0_71 = arith.constant 0 : index
    %123 = vector.load %arg6[%c2_69, %c0_70, %c0_71] : memref<3x8x1xf32, #tpu.memory_space<vmem>>, vector<1x8x1xf32>
    %124 = vector.shape_cast %123 : vector<1x8x1xf32> to vector<8x1xf32>
    %c0_72 = arith.constant 0 : index
    %c0_73 = arith.constant 0 : index
    %c0_74 = arith.constant 0 : index
    %125 = vector.load %arg5[%c0_72, %c0_73, %c0_74] : memref<4x8x16xf32, #tpu.memory_space<vmem>>, vector<1x8x16xf32>
    %126 = vector.shape_cast %125 : vector<1x8x16xf32> to vector<8x16xf32>
    %cst_75 = arith.constant dense<0.000000e+00> : vector<8x32xf32>
    %127 = tpu.matmul %126, %118, %cst_75 {dimension_numbers = #tpu.dot_dimension_numbers<[1], [0], [0], [1], [0, 0, 1, 1], [], []>} : vector<8x16xf32>, vector<16x32xf32>, vector<8x32xf32> -> vector<8x32xf32>
    %128 = vector.broadcast %120 : vector<8x1xf32> to vector<8x32xf32>
    %129 = arith.addf %127, %128 : vector<8x32xf32>
    %c1_76 = arith.constant 1 : index
    %c0_77 = arith.constant 0 : index
    %c0_78 = arith.constant 0 : index
    %130 = vector.load %arg5[%c1_76, %c0_77, %c0_78] : memref<4x8x16xf32, #tpu.memory_space<vmem>>, vector<1x8x16xf32>
    %131 = vector.shape_cast %130 : vector<1x8x16xf32> to vector<8x16xf32>
    %cst_79 = arith.constant dense<0.000000e+00> : vector<8x32xf32>
    %132 = tpu.matmul %131, %118, %cst_79 {dimension_numbers = #tpu.dot_dimension_numbers<[1], [0], [0], [1], [0, 0, 1, 1], [], []>} : vector<8x16xf32>, vector<16x32xf32>, vector<8x32xf32> -> vector<8x32xf32>
    %133 = vector.broadcast %120 : vector<8x1xf32> to vector<8x32xf32>
    %134 = arith.addf %132, %133 : vector<8x32xf32>
    %c2_80 = arith.constant 2 : index
    %c0_81 = arith.constant 0 : index
    %c0_82 = arith.constant 0 : index
    %135 = vector.load %arg5[%c2_80, %c0_81, %c0_82] : memref<4x8x16xf32, #tpu.memory_space<vmem>>, vector<1x8x16xf32>
    %136 = vector.shape_cast %135 : vector<1x8x16xf32> to vector<8x16xf32>
    %cst_83 = arith.constant dense<0.000000e+00> : vector<8x32xf32>
    %137 = tpu.matmul %136, %118, %cst_83 {dimension_numbers = #tpu.dot_dimension_numbers<[1], [0], [0], [1], [0, 0, 1, 1], [], []>} : vector<8x16xf32>, vector<16x32xf32>, vector<8x32xf32> -> vector<8x32xf32>
    %138 = vector.broadcast %120 : vector<8x1xf32> to vector<8x32xf32>
    %139 = arith.addf %137, %138 : vector<8x32xf32>
    %c3_84 = arith.constant 3 : index
    %c0_85 = arith.constant 0 : index
    %c0_86 = arith.constant 0 : index
    %140 = vector.load %arg5[%c3_84, %c0_85, %c0_86] : memref<4x8x16xf32, #tpu.memory_space<vmem>>, vector<1x8x16xf32>
    %141 = vector.shape_cast %140 : vector<1x8x16xf32> to vector<8x16xf32>
    %cst_87 = arith.constant dense<0.000000e+00> : vector<8x32xf32>
    %142 = tpu.matmul %141, %118, %cst_87 {dimension_numbers = #tpu.dot_dimension_numbers<[1], [0], [0], [1], [0, 0, 1, 1], [], []>} : vector<8x16xf32>, vector<16x32xf32>, vector<8x32xf32> -> vector<8x32xf32>
    %143 = vector.broadcast %120 : vector<8x1xf32> to vector<8x32xf32>
    %144 = arith.addf %142, %143 : vector<8x32xf32>
    %145 = arith.addf %129, %134 : vector<8x32xf32>
    %146 = arith.addf %145, %139 : vector<8x32xf32>
    %147 = arith.addf %146, %144 : vector<8x32xf32>
    %cst_88 = arith.constant dense<0.000000e+00> : vector<8xf32>
    %148 = vector.multi_reduction <add>, %147, %cst_88 [1] : vector<8x32xf32> to vector<8xf32>
    %149 = vector.shape_cast %148 : vector<8xf32> to vector<8x1xf32>
    %cst_89 = arith.constant 1.280000e+02 : f32
    %150 = vector.broadcast %cst_89 : f32 to vector<8x1xf32>
    %151 = arith.divf %149, %150 : vector<8x1xf32>
    %152 = vector.broadcast %151 : vector<8x1xf32> to vector<8x32xf32>
    %153 = arith.subf %129, %152 : vector<8x32xf32>
    %154 = vector.broadcast %151 : vector<8x1xf32> to vector<8x32xf32>
    %155 = arith.subf %134, %154 : vector<8x32xf32>
    %156 = vector.broadcast %151 : vector<8x1xf32> to vector<8x32xf32>
    %157 = arith.subf %139, %156 : vector<8x32xf32>
    %158 = vector.broadcast %151 : vector<8x1xf32> to vector<8x32xf32>
    %159 = arith.subf %144, %158 : vector<8x32xf32>
    %160 = arith.mulf %153, %153 : vector<8x32xf32>
    %161 = arith.mulf %155, %155 : vector<8x32xf32>
    %162 = arith.addf %160, %161 : vector<8x32xf32>
    %163 = arith.mulf %157, %157 : vector<8x32xf32>
    %164 = arith.addf %162, %163 : vector<8x32xf32>
    %165 = arith.mulf %159, %159 : vector<8x32xf32>
    %166 = arith.addf %164, %165 : vector<8x32xf32>
    %cst_90 = arith.constant dense<0.000000e+00> : vector<8xf32>
    %167 = vector.multi_reduction <add>, %166, %cst_90 [1] : vector<8x32xf32> to vector<8xf32>
    %168 = vector.shape_cast %167 : vector<8xf32> to vector<8x1xf32>
    %cst_91 = arith.constant 1.280000e+02 : f32
    %169 = vector.broadcast %cst_91 : f32 to vector<8x1xf32>
    %170 = arith.divf %168, %169 : vector<8x1xf32>
    %cst_92 = arith.constant 9.99999974E-6 : f32
    %171 = vector.broadcast %cst_92 : f32 to vector<8x1xf32>
    %172 = arith.addf %170, %171 : vector<8x1xf32>
    %173 = math.rsqrt %172 : vector<8x1xf32>
    %174 = arith.mulf %122, %173 : vector<8x1xf32>
    %175 = vector.broadcast %174 : vector<8x1xf32> to vector<8x32xf32>
    %176 = arith.mulf %153, %175 : vector<8x32xf32>
    %177 = vector.broadcast %124 : vector<8x1xf32> to vector<8x32xf32>
    %178 = arith.addf %176, %177 : vector<8x32xf32>
    %cst_93 = arith.constant 0.000000e+00 : f32
    %179 = vector.broadcast %cst_93 : f32 to vector<8x32xf32>
    %180 = arith.maximumf %178, %179 : vector<8x32xf32>
    %181 = vector.broadcast %174 : vector<8x1xf32> to vector<8x32xf32>
    %182 = arith.mulf %155, %181 : vector<8x32xf32>
    %183 = vector.broadcast %124 : vector<8x1xf32> to vector<8x32xf32>
    %184 = arith.addf %182, %183 : vector<8x32xf32>
    %cst_94 = arith.constant 0.000000e+00 : f32
    %185 = vector.broadcast %cst_94 : f32 to vector<8x32xf32>
    %186 = arith.maximumf %184, %185 : vector<8x32xf32>
    %187 = vector.broadcast %174 : vector<8x1xf32> to vector<8x32xf32>
    %188 = arith.mulf %157, %187 : vector<8x32xf32>
    %189 = vector.broadcast %124 : vector<8x1xf32> to vector<8x32xf32>
    %190 = arith.addf %188, %189 : vector<8x32xf32>
    %cst_95 = arith.constant 0.000000e+00 : f32
    %191 = vector.broadcast %cst_95 : f32 to vector<8x32xf32>
    %192 = arith.maximumf %190, %191 : vector<8x32xf32>
    %193 = vector.broadcast %174 : vector<8x1xf32> to vector<8x32xf32>
    %194 = arith.mulf %159, %193 : vector<8x32xf32>
    %195 = vector.broadcast %124 : vector<8x1xf32> to vector<8x32xf32>
    %196 = arith.addf %194, %195 : vector<8x32xf32>
    %cst_96 = arith.constant 0.000000e+00 : f32
    %197 = vector.broadcast %cst_96 : f32 to vector<8x32xf32>
    %198 = arith.maximumf %196, %197 : vector<8x32xf32>
    %199 = tpu.concatenate %180, %186, %192, %198 in 1 : vector<8x32xf32>, vector<8x32xf32>, vector<8x32xf32>, vector<8x32xf32> -> vector<8x128xf32>
    %c0_97 = arith.constant 0 : index
    %c0_98 = arith.constant 0 : index
    %c0_99 = arith.constant 0 : index
    %200 = vector.load %arg8[%c0_97, %c0_98, %c0_99] : memref<3x4x1xf32, #tpu.memory_space<vmem>>, vector<1x4x1xf32>
    %201 = vector.shape_cast %200 : vector<1x4x1xf32> to vector<4x1xf32>
    %c1_100 = arith.constant 1 : index
    %c0_101 = arith.constant 0 : index
    %c0_102 = arith.constant 0 : index
    %202 = vector.load %arg8[%c1_100, %c0_101, %c0_102] : memref<3x4x1xf32, #tpu.memory_space<vmem>>, vector<1x4x1xf32>
    %203 = vector.shape_cast %202 : vector<1x4x1xf32> to vector<4x1xf32>
    %c2_103 = arith.constant 2 : index
    %c0_104 = arith.constant 0 : index
    %c0_105 = arith.constant 0 : index
    %204 = vector.load %arg8[%c2_103, %c0_104, %c0_105] : memref<3x4x1xf32, #tpu.memory_space<vmem>>, vector<1x4x1xf32>
    %205 = vector.shape_cast %204 : vector<1x4x1xf32> to vector<4x1xf32>
    %c0_106 = arith.constant 0 : index
    %c0_107 = arith.constant 0 : index
    %c0_108 = arith.constant 0 : index
    %206 = vector.load %arg7[%c0_106, %c0_107, %c0_108] : memref<4x4x8xf32, #tpu.memory_space<vmem>>, vector<1x4x8xf32>
    %207 = vector.shape_cast %206 : vector<1x4x8xf32> to vector<4x8xf32>
    %cst_109 = arith.constant dense<0.000000e+00> : vector<4x128xf32>
    %208 = tpu.matmul %207, %199, %cst_109 {dimension_numbers = #tpu.dot_dimension_numbers<[1], [0], [0], [1], [0, 0, 1, 1], [], []>} : vector<4x8xf32>, vector<8x128xf32>, vector<4x128xf32> -> vector<4x128xf32>
    %209 = vector.broadcast %201 : vector<4x1xf32> to vector<4x128xf32>
    %210 = arith.addf %208, %209 : vector<4x128xf32>
    %c1_110 = arith.constant 1 : index
    %c0_111 = arith.constant 0 : index
    %c0_112 = arith.constant 0 : index
    %211 = vector.load %arg7[%c1_110, %c0_111, %c0_112] : memref<4x4x8xf32, #tpu.memory_space<vmem>>, vector<1x4x8xf32>
    %212 = vector.shape_cast %211 : vector<1x4x8xf32> to vector<4x8xf32>
    %cst_113 = arith.constant dense<0.000000e+00> : vector<4x128xf32>
    %213 = tpu.matmul %212, %199, %cst_113 {dimension_numbers = #tpu.dot_dimension_numbers<[1], [0], [0], [1], [0, 0, 1, 1], [], []>} : vector<4x8xf32>, vector<8x128xf32>, vector<4x128xf32> -> vector<4x128xf32>
    %214 = vector.broadcast %201 : vector<4x1xf32> to vector<4x128xf32>
    %215 = arith.addf %213, %214 : vector<4x128xf32>
    %c2_114 = arith.constant 2 : index
    %c0_115 = arith.constant 0 : index
    %c0_116 = arith.constant 0 : index
    %216 = vector.load %arg7[%c2_114, %c0_115, %c0_116] : memref<4x4x8xf32, #tpu.memory_space<vmem>>, vector<1x4x8xf32>
    %217 = vector.shape_cast %216 : vector<1x4x8xf32> to vector<4x8xf32>
    %cst_117 = arith.constant dense<0.000000e+00> : vector<4x128xf32>
    %218 = tpu.matmul %217, %199, %cst_117 {dimension_numbers = #tpu.dot_dimension_numbers<[1], [0], [0], [1], [0, 0, 1, 1], [], []>} : vector<4x8xf32>, vector<8x128xf32>, vector<4x128xf32> -> vector<4x128xf32>
    %219 = vector.broadcast %201 : vector<4x1xf32> to vector<4x128xf32>
    %220 = arith.addf %218, %219 : vector<4x128xf32>
    %c3_118 = arith.constant 3 : index
    %c0_119 = arith.constant 0 : index
    %c0_120 = arith.constant 0 : index
    %221 = vector.load %arg7[%c3_118, %c0_119, %c0_120] : memref<4x4x8xf32, #tpu.memory_space<vmem>>, vector<1x4x8xf32>
    %222 = vector.shape_cast %221 : vector<1x4x8xf32> to vector<4x8xf32>
    %cst_121 = arith.constant dense<0.000000e+00> : vector<4x128xf32>
    %223 = tpu.matmul %222, %199, %cst_121 {dimension_numbers = #tpu.dot_dimension_numbers<[1], [0], [0], [1], [0, 0, 1, 1], [], []>} : vector<4x8xf32>, vector<8x128xf32>, vector<4x128xf32> -> vector<4x128xf32>
    %224 = vector.broadcast %201 : vector<4x1xf32> to vector<4x128xf32>
    %225 = arith.addf %223, %224 : vector<4x128xf32>
    %226 = arith.addf %210, %215 : vector<4x128xf32>
    %227 = arith.addf %226, %220 : vector<4x128xf32>
    %228 = arith.addf %227, %225 : vector<4x128xf32>
    %cst_122 = arith.constant dense<0.000000e+00> : vector<4xf32>
    %229 = vector.multi_reduction <add>, %228, %cst_122 [1] : vector<4x128xf32> to vector<4xf32>
    %230 = vector.shape_cast %229 : vector<4xf32> to vector<4x1xf32>
    %cst_123 = arith.constant 5.120000e+02 : f32
    %231 = vector.broadcast %cst_123 : f32 to vector<4x1xf32>
    %232 = arith.divf %230, %231 : vector<4x1xf32>
    %233 = vector.broadcast %232 : vector<4x1xf32> to vector<4x128xf32>
    %234 = arith.subf %210, %233 : vector<4x128xf32>
    %235 = vector.broadcast %232 : vector<4x1xf32> to vector<4x128xf32>
    %236 = arith.subf %215, %235 : vector<4x128xf32>
    %237 = vector.broadcast %232 : vector<4x1xf32> to vector<4x128xf32>
    %238 = arith.subf %220, %237 : vector<4x128xf32>
    %239 = vector.broadcast %232 : vector<4x1xf32> to vector<4x128xf32>
    %240 = arith.subf %225, %239 : vector<4x128xf32>
    %241 = arith.mulf %234, %234 : vector<4x128xf32>
    %242 = arith.mulf %236, %236 : vector<4x128xf32>
    %243 = arith.addf %241, %242 : vector<4x128xf32>
    %244 = arith.mulf %238, %238 : vector<4x128xf32>
    %245 = arith.addf %243, %244 : vector<4x128xf32>
    %246 = arith.mulf %240, %240 : vector<4x128xf32>
    %247 = arith.addf %245, %246 : vector<4x128xf32>
    %cst_124 = arith.constant dense<0.000000e+00> : vector<4xf32>
    %248 = vector.multi_reduction <add>, %247, %cst_124 [1] : vector<4x128xf32> to vector<4xf32>
    %249 = vector.shape_cast %248 : vector<4xf32> to vector<4x1xf32>
    %cst_125 = arith.constant 5.120000e+02 : f32
    %250 = vector.broadcast %cst_125 : f32 to vector<4x1xf32>
    %251 = arith.divf %249, %250 : vector<4x1xf32>
    %cst_126 = arith.constant 9.99999974E-6 : f32
    %252 = vector.broadcast %cst_126 : f32 to vector<4x1xf32>
    %253 = arith.addf %251, %252 : vector<4x1xf32>
    %254 = math.rsqrt %253 : vector<4x1xf32>
    %255 = arith.mulf %203, %254 : vector<4x1xf32>
    %256 = vector.broadcast %255 : vector<4x1xf32> to vector<4x128xf32>
    %257 = arith.mulf %234, %256 : vector<4x128xf32>
    %258 = vector.broadcast %205 : vector<4x1xf32> to vector<4x128xf32>
    %259 = arith.addf %257, %258 : vector<4x128xf32>
    %cst_127 = arith.constant 0.000000e+00 : f32
    %260 = vector.broadcast %cst_127 : f32 to vector<4x128xf32>
    %261 = arith.maximumf %259, %260 : vector<4x128xf32>
    %262 = vector.broadcast %255 : vector<4x1xf32> to vector<4x128xf32>
    %263 = arith.mulf %236, %262 : vector<4x128xf32>
    %264 = vector.broadcast %205 : vector<4x1xf32> to vector<4x128xf32>
    %265 = arith.addf %263, %264 : vector<4x128xf32>
    %cst_128 = arith.constant 0.000000e+00 : f32
    %266 = vector.broadcast %cst_128 : f32 to vector<4x128xf32>
    %267 = arith.maximumf %265, %266 : vector<4x128xf32>
    %268 = vector.broadcast %255 : vector<4x1xf32> to vector<4x128xf32>
    %269 = arith.mulf %238, %268 : vector<4x128xf32>
    %270 = vector.broadcast %205 : vector<4x1xf32> to vector<4x128xf32>
    %271 = arith.addf %269, %270 : vector<4x128xf32>
    %cst_129 = arith.constant 0.000000e+00 : f32
    %272 = vector.broadcast %cst_129 : f32 to vector<4x128xf32>
    %273 = arith.maximumf %271, %272 : vector<4x128xf32>
    %274 = vector.broadcast %255 : vector<4x1xf32> to vector<4x128xf32>
    %275 = arith.mulf %240, %274 : vector<4x128xf32>
    %276 = vector.broadcast %205 : vector<4x1xf32> to vector<4x128xf32>
    %277 = arith.addf %275, %276 : vector<4x128xf32>
    %cst_130 = arith.constant 0.000000e+00 : f32
    %278 = vector.broadcast %cst_130 : f32 to vector<4x128xf32>
    %279 = arith.maximumf %277, %278 : vector<4x128xf32>
    %280 = tpu.concatenate %261, %267, %273, %279 in 1 : vector<4x128xf32>, vector<4x128xf32>, vector<4x128xf32>, vector<4x128xf32> -> vector<4x512xf32>
    %c0_131 = arith.constant 0 : index
    %c0_132 = arith.constant 0 : index
    %c0_133 = arith.constant 0 : index
    %281 = vector.load %arg10[%c0_131, %c0_132, %c0_133] : memref<3x2x1xf32, #tpu.memory_space<vmem>>, vector<1x2x1xf32>
    %282 = vector.shape_cast %281 : vector<1x2x1xf32> to vector<2x1xf32>
    %c1_134 = arith.constant 1 : index
    %c0_135 = arith.constant 0 : index
    %c0_136 = arith.constant 0 : index
    %283 = vector.load %arg10[%c1_134, %c0_135, %c0_136] : memref<3x2x1xf32, #tpu.memory_space<vmem>>, vector<1x2x1xf32>
    %284 = vector.shape_cast %283 : vector<1x2x1xf32> to vector<2x1xf32>
    %c2_137 = arith.constant 2 : index
    %c0_138 = arith.constant 0 : index
    %c0_139 = arith.constant 0 : index
    %285 = vector.load %arg10[%c2_137, %c0_138, %c0_139] : memref<3x2x1xf32, #tpu.memory_space<vmem>>, vector<1x2x1xf32>
    %286 = vector.shape_cast %285 : vector<1x2x1xf32> to vector<2x1xf32>
    %c0_140 = arith.constant 0 : index
    %c0_141 = arith.constant 0 : index
    %c0_142 = arith.constant 0 : index
    %287 = vector.load %arg9[%c0_140, %c0_141, %c0_142] : memref<4x2x4xf32, #tpu.memory_space<vmem>>, vector<1x2x4xf32>
    %288 = vector.shape_cast %287 : vector<1x2x4xf32> to vector<2x4xf32>
    %cst_143 = arith.constant dense<0.000000e+00> : vector<2x512xf32>
    %289 = tpu.matmul %288, %280, %cst_143 {dimension_numbers = #tpu.dot_dimension_numbers<[1], [0], [0], [1], [0, 0, 1, 1], [], []>} : vector<2x4xf32>, vector<4x512xf32>, vector<2x512xf32> -> vector<2x512xf32>
    %290 = vector.broadcast %282 : vector<2x1xf32> to vector<2x512xf32>
    %291 = arith.addf %289, %290 : vector<2x512xf32>
    %c1_144 = arith.constant 1 : index
    %c0_145 = arith.constant 0 : index
    %c0_146 = arith.constant 0 : index
    %292 = vector.load %arg9[%c1_144, %c0_145, %c0_146] : memref<4x2x4xf32, #tpu.memory_space<vmem>>, vector<1x2x4xf32>
    %293 = vector.shape_cast %292 : vector<1x2x4xf32> to vector<2x4xf32>
    %cst_147 = arith.constant dense<0.000000e+00> : vector<2x512xf32>
    %294 = tpu.matmul %293, %280, %cst_147 {dimension_numbers = #tpu.dot_dimension_numbers<[1], [0], [0], [1], [0, 0, 1, 1], [], []>} : vector<2x4xf32>, vector<4x512xf32>, vector<2x512xf32> -> vector<2x512xf32>
    %295 = vector.broadcast %282 : vector<2x1xf32> to vector<2x512xf32>
    %296 = arith.addf %294, %295 : vector<2x512xf32>
    %c2_148 = arith.constant 2 : index
    %c0_149 = arith.constant 0 : index
    %c0_150 = arith.constant 0 : index
    %297 = vector.load %arg9[%c2_148, %c0_149, %c0_150] : memref<4x2x4xf32, #tpu.memory_space<vmem>>, vector<1x2x4xf32>
    %298 = vector.shape_cast %297 : vector<1x2x4xf32> to vector<2x4xf32>
    %cst_151 = arith.constant dense<0.000000e+00> : vector<2x512xf32>
    %299 = tpu.matmul %298, %280, %cst_151 {dimension_numbers = #tpu.dot_dimension_numbers<[1], [0], [0], [1], [0, 0, 1, 1], [], []>} : vector<2x4xf32>, vector<4x512xf32>, vector<2x512xf32> -> vector<2x512xf32>
    %300 = vector.broadcast %282 : vector<2x1xf32> to vector<2x512xf32>
    %301 = arith.addf %299, %300 : vector<2x512xf32>
    %c3_152 = arith.constant 3 : index
    %c0_153 = arith.constant 0 : index
    %c0_154 = arith.constant 0 : index
    %302 = vector.load %arg9[%c3_152, %c0_153, %c0_154] : memref<4x2x4xf32, #tpu.memory_space<vmem>>, vector<1x2x4xf32>
    %303 = vector.shape_cast %302 : vector<1x2x4xf32> to vector<2x4xf32>
    %cst_155 = arith.constant dense<0.000000e+00> : vector<2x512xf32>
    %304 = tpu.matmul %303, %280, %cst_155 {dimension_numbers = #tpu.dot_dimension_numbers<[1], [0], [0], [1], [0, 0, 1, 1], [], []>} : vector<2x4xf32>, vector<4x512xf32>, vector<2x512xf32> -> vector<2x512xf32>
    %305 = vector.broadcast %282 : vector<2x1xf32> to vector<2x512xf32>
    %306 = arith.addf %304, %305 : vector<2x512xf32>
    %307 = arith.addf %291, %296 : vector<2x512xf32>
    %308 = arith.addf %307, %301 : vector<2x512xf32>
    %309 = arith.addf %308, %306 : vector<2x512xf32>
    %cst_156 = arith.constant dense<0.000000e+00> : vector<2xf32>
    %310 = vector.multi_reduction <add>, %309, %cst_156 [1] : vector<2x512xf32> to vector<2xf32>
    %311 = vector.shape_cast %310 : vector<2xf32> to vector<2x1xf32>
    %cst_157 = arith.constant 2.048000e+03 : f32
    %312 = vector.broadcast %cst_157 : f32 to vector<2x1xf32>
    %313 = arith.divf %311, %312 : vector<2x1xf32>
    %314 = vector.broadcast %313 : vector<2x1xf32> to vector<2x512xf32>
    %315 = arith.subf %291, %314 : vector<2x512xf32>
    %316 = vector.broadcast %313 : vector<2x1xf32> to vector<2x512xf32>
    %317 = arith.subf %296, %316 : vector<2x512xf32>
    %318 = vector.broadcast %313 : vector<2x1xf32> to vector<2x512xf32>
    %319 = arith.subf %301, %318 : vector<2x512xf32>
    %320 = vector.broadcast %313 : vector<2x1xf32> to vector<2x512xf32>
    %321 = arith.subf %306, %320 : vector<2x512xf32>
    %322 = arith.mulf %315, %315 : vector<2x512xf32>
    %323 = arith.mulf %317, %317 : vector<2x512xf32>
    %324 = arith.addf %322, %323 : vector<2x512xf32>
    %325 = arith.mulf %319, %319 : vector<2x512xf32>
    %326 = arith.addf %324, %325 : vector<2x512xf32>
    %327 = arith.mulf %321, %321 : vector<2x512xf32>
    %328 = arith.addf %326, %327 : vector<2x512xf32>
    %cst_158 = arith.constant dense<0.000000e+00> : vector<2xf32>
    %329 = vector.multi_reduction <add>, %328, %cst_158 [1] : vector<2x512xf32> to vector<2xf32>
    %330 = vector.shape_cast %329 : vector<2xf32> to vector<2x1xf32>
    %cst_159 = arith.constant 2.048000e+03 : f32
    %331 = vector.broadcast %cst_159 : f32 to vector<2x1xf32>
    %332 = arith.divf %330, %331 : vector<2x1xf32>
    %cst_160 = arith.constant 9.99999974E-6 : f32
    %333 = vector.broadcast %cst_160 : f32 to vector<2x1xf32>
    %334 = arith.addf %332, %333 : vector<2x1xf32>
    %335 = math.rsqrt %334 : vector<2x1xf32>
    %336 = arith.mulf %284, %335 : vector<2x1xf32>
    %337 = vector.broadcast %336 : vector<2x1xf32> to vector<2x512xf32>
    %338 = arith.mulf %315, %337 : vector<2x512xf32>
    %339 = vector.broadcast %286 : vector<2x1xf32> to vector<2x512xf32>
    %340 = arith.addf %338, %339 : vector<2x512xf32>
    %cst_161 = arith.constant 0.000000e+00 : f32
    %341 = vector.broadcast %cst_161 : f32 to vector<2x512xf32>
    %342 = arith.maximumf %340, %341 : vector<2x512xf32>
    %343 = vector.broadcast %336 : vector<2x1xf32> to vector<2x512xf32>
    %344 = arith.mulf %317, %343 : vector<2x512xf32>
    %345 = vector.broadcast %286 : vector<2x1xf32> to vector<2x512xf32>
    %346 = arith.addf %344, %345 : vector<2x512xf32>
    %cst_162 = arith.constant 0.000000e+00 : f32
    %347 = vector.broadcast %cst_162 : f32 to vector<2x512xf32>
    %348 = arith.maximumf %346, %347 : vector<2x512xf32>
    %349 = vector.broadcast %336 : vector<2x1xf32> to vector<2x512xf32>
    %350 = arith.mulf %319, %349 : vector<2x512xf32>
    %351 = vector.broadcast %286 : vector<2x1xf32> to vector<2x512xf32>
    %352 = arith.addf %350, %351 : vector<2x512xf32>
    %cst_163 = arith.constant 0.000000e+00 : f32
    %353 = vector.broadcast %cst_163 : f32 to vector<2x512xf32>
    %354 = arith.maximumf %352, %353 : vector<2x512xf32>
    %355 = vector.broadcast %336 : vector<2x1xf32> to vector<2x512xf32>
    %356 = arith.mulf %321, %355 : vector<2x512xf32>
    %357 = vector.broadcast %286 : vector<2x1xf32> to vector<2x512xf32>
    %358 = arith.addf %356, %357 : vector<2x512xf32>
    %cst_164 = arith.constant 0.000000e+00 : f32
    %359 = vector.broadcast %cst_164 : f32 to vector<2x512xf32>
    %360 = arith.maximumf %358, %359 : vector<2x512xf32>
    %361 = tpu.concatenate %342, %348, %354, %360 in 1 : vector<2x512xf32>, vector<2x512xf32>, vector<2x512xf32>, vector<2x512xf32> -> vector<2x2048xf32>
    %c0_165 = arith.constant 0 : index
    %c0_166 = arith.constant 0 : index
    %362 = vector.load %arg11[%c0_165, %c0_166] : memref<2x1xf32, #tpu.memory_space<vmem>>, vector<2x1xf32>
    %363 = vector.broadcast %362 : vector<2x1xf32> to vector<2x2048xf32>
    %364 = arith.mulf %361, %363 : vector<2x2048xf32>
    %cst_167 = arith.constant dense<0.000000e+00> : vector<2048xf32>
    %365 = vector.multi_reduction <add>, %364, %cst_167 [0] : vector<2x2048xf32> to vector<2048xf32>
    %366 = vector.shape_cast %365 : vector<2048xf32> to vector<1x2048xf32>
    %c0_168 = arith.constant 0 : index
    %367 = memref.load %arg12[%c0_168] : memref<3xf32, #tpu.memory_space<smem>>
    %368 = vector.broadcast %367 : f32 to vector<1x2048xf32>
    %369 = arith.addf %366, %368 : vector<1x2048xf32>
    %cst_169 = arith.constant dense<0.000000e+00> : vector<1xf32>
    %370 = vector.multi_reduction <add>, %369, %cst_169 [1] : vector<1x2048xf32> to vector<1xf32>
    %371 = vector.shape_cast %370 : vector<1xf32> to vector<1x1xf32>
    %cst_170 = arith.constant 2.048000e+03 : f32
    %372 = vector.broadcast %cst_170 : f32 to vector<1x1xf32>
    %373 = arith.divf %371, %372 : vector<1x1xf32>
    %374 = vector.broadcast %373 : vector<1x1xf32> to vector<1x2048xf32>
    %375 = arith.subf %369, %374 : vector<1x2048xf32>
    %376 = arith.mulf %375, %375 : vector<1x2048xf32>
    %cst_171 = arith.constant dense<0.000000e+00> : vector<1xf32>
    %377 = vector.multi_reduction <add>, %376, %cst_171 [1] : vector<1x2048xf32> to vector<1xf32>
    %378 = vector.shape_cast %377 : vector<1xf32> to vector<1x1xf32>
    %cst_172 = arith.constant 2.048000e+03 : f32
    %379 = vector.broadcast %cst_172 : f32 to vector<1x1xf32>
    %380 = arith.divf %378, %379 : vector<1x1xf32>
    %cst_173 = arith.constant 9.99999974E-6 : f32
    %381 = vector.broadcast %cst_173 : f32 to vector<1x1xf32>
    %382 = arith.addf %380, %381 : vector<1x1xf32>
    %383 = math.rsqrt %382 : vector<1x1xf32>
    %c1_174 = arith.constant 1 : index
    %384 = memref.load %arg12[%c1_174] : memref<3xf32, #tpu.memory_space<smem>>
    %385 = vector.broadcast %384 : f32 to vector<1x1xf32>
    %386 = arith.mulf %385, %383 : vector<1x1xf32>
    %387 = vector.broadcast %386 : vector<1x1xf32> to vector<1x2048xf32>
    %388 = arith.mulf %375, %387 : vector<1x2048xf32>
    %c2_175 = arith.constant 2 : index
    %389 = memref.load %arg12[%c2_175] : memref<3xf32, #tpu.memory_space<smem>>
    %390 = vector.broadcast %389 : f32 to vector<1x2048xf32>
    %391 = arith.addf %388, %390 : vector<1x2048xf32>
    %cst_176 = arith.constant 0.000000e+00 : f32
    %392 = vector.broadcast %cst_176 : f32 to vector<1x2048xf32>
    %393 = arith.maximumf %391, %392 : vector<1x2048xf32>
    %c0_177 = arith.constant 0 : index
    %c0_178 = arith.constant 0 : index
    %394 = vector.load %arg13[%c0_177, %c0_178] : memref<1x2048xf32, #tpu.memory_space<vmem>>, vector<1x2048xf32>
    tpu.vector_store %arg13[%c0_177, %c0_178], %393 {strides = array<i32>} : memref<1x2048xf32, #tpu.memory_space<vmem>>, vector<1x2048xf32>,
    return
  }
}

</mosaic_0001>

<llo_original>
// kernel: policy_decoder_forward.1
$region0: #{policy_decoder_forward.1}
  #allocation0 [shape = 'u32[]', space=smem, size = 0x4, offset = 0x4, fixed_abs, tag = 'smem constant byte address 0x4 - core index']
  #allocation1 [shape = 'u32[144,128]{1,0:T(1,128)}', space=vmem, size = 0x12000, scoped, tag = 'internal scratch']
  %s0 = inlined_call_operand.vmem [shape: f32[16,2], index: 0, kind: input, shape index: {}]
  %s1 = inlined_call_operand.vmem [shape: f32[4,32,16], index: 1, kind: input, shape index: {}]
  %s2 = inlined_call_operand.vmem [shape: f32[4,32,1], index: 2, kind: input, shape index: {}]
  %s3 = inlined_call_operand.vmem [shape: f32[4,16,32], index: 3, kind: input, shape index: {}]
  %s4 = inlined_call_operand.vmem [shape: f32[3,16,1], index: 4, kind: input, shape index: {}]
  %s5 = inlined_call_operand.vmem [shape: f32[4,8,16], index: 5, kind: input, shape index: {}]
  %s6 = inlined_call_operand.vmem [shape: f32[3,8,1], index: 6, kind: input, shape index: {}]
  %s7 = inlined_call_operand.vmem [shape: f32[4,4,8], index: 7, kind: input, shape index: {}]
  %s8 = inlined_call_operand.vmem [shape: f32[3,4,1], index: 8, kind: input, shape index: {}]
  %s9 = inlined_call_operand.vmem [shape: f32[4,2,4], index: 9, kind: input, shape index: {}]
  %s10 = inlined_call_operand.vmem [shape: f32[3,2,1], index: 10, kind: input, shape index: {}]
  %s11 = inlined_call_operand.vmem [shape: f32[2,1], index: 11, kind: input, shape index: {}]
  %s12 = inlined_call_operand.vmem [shape: f32[3], index: 12, kind: input, shape index: {}]
  %s13 = inlined_call_operand.vmem [shape: f32[1,2048], index: 13, kind: output, shape index: {}]
  %s14 = sld [smem:[#allocation0]]
  $region66: #{policy_decoder_forward.1} parent=0
    _
  %s16 = ssub.s32 1, %s14
  %s17 = scalar_select 0, %s16, %s14
  $region1: #{policy_decoder_forward.1} parent=0
    #allocation2 [shape = 'u8[512]{0}', space=smem, size = 0x200, scoped, tag = 'input window, operand 12, single buffered']
    #allocation3 [shape = 's32[1]{0}', space=sflag, size = 0x4, scoped, tag = 'scoped memory for policy_decoder_forward.1']
    %18 = vsyncpa [#allocation3], 0
    // Predicated region
    $region2: #{policy_decoder_forward.1} parent=1 // pred_check
      _
    $region3: #{policy_decoder_forward.1} parent=1 // pred_check_branch
      %20 = sbr.rel (0) target = $region5
    $region4: #{policy_decoder_forward.1} parent=1 // pred_region
      _
    $region5: #{policy_decoder_forward.1} parent=1 // pred_fallthru
      _
    // Predicated region
    $region6: #{policy_decoder_forward.1} parent=1 // pred_check
      _
    $region7: #{policy_decoder_forward.1} parent=1 // pred_check_branch
      %22 = sbr.rel (0) target = $region9
    $region8: #{policy_decoder_forward.1} parent=1 // pred_region
      _
    $region9: #{policy_decoder_forward.1} parent=1 // pred_fallthru
      _
    // Predicated region
    $region10: #{policy_decoder_forward.1} parent=1 // pred_check
      _
    $region11: #{policy_decoder_forward.1} parent=1 // pred_check_branch
      %24 = sbr.rel (0) target = $region13
    $region12: #{policy_decoder_forward.1} parent=1 // pred_region
      _
    $region13: #{policy_decoder_forward.1} parent=1 // pred_fallthru
      _
    // Predicated region
    $region14: #{policy_decoder_forward.1} parent=1 // pred_check
      _
    $region15: #{policy_decoder_forward.1} parent=1 // pred_check_branch
      %26 = sbr.rel (0) target = $region17
    $region16: #{policy_decoder_forward.1} parent=1 // pred_region
      _
    $region17: #{policy_decoder_forward.1} parent=1 // pred_fallthru
      _
    // Predicated region
    $region18: #{policy_decoder_forward.1} parent=1 // pred_check
      _
    $region19: #{policy_decoder_forward.1} parent=1 // pred_check_branch
      %28 = sbr.rel (0) target = $region21
    $region20: #{policy_decoder_forward.1} parent=1 // pred_region
      _
    $region21: #{policy_decoder_forward.1} parent=1 // pred_fallthru
      _
    // Predicated region
    $region22: #{policy_decoder_forward.1} parent=1 // pred_check
      _
    $region23: #{policy_decoder_forward.1} parent=1 // pred_check_branch
      %30 = sbr.rel (0) target = $region25
    $region24: #{policy_decoder_forward.1} parent=1 // pred_region
      _
    $region25: #{policy_decoder_forward.1} parent=1 // pred_fallthru
      _
    // Predicated region
    $region26: #{policy_decoder_forward.1} parent=1 // pred_check
      _
    $region27: #{policy_decoder_forward.1} parent=1 // pred_check_branch
      %32 = sbr.rel (0) target = $region29
    $region28: #{policy_decoder_forward.1} parent=1 // pred_region
      _
    $region29: #{policy_decoder_forward.1} parent=1 // pred_fallthru
      _
    // Predicated region
    $region30: #{policy_decoder_forward.1} parent=1 // pred_check
      _
    $region31: #{policy_decoder_forward.1} parent=1 // pred_check_branch
      %34 = sbr.rel (0) target = $region33
    $region32: #{policy_decoder_forward.1} parent=1 // pred_region
      _
    $region33: #{policy_decoder_forward.1} parent=1 // pred_fallthru
      _
    // Predicated region
    $region34: #{policy_decoder_forward.1} parent=1 // pred_check
      _
    $region35: #{policy_decoder_forward.1} parent=1 // pred_check_branch
      %36 = sbr.rel (0) target = $region37
    $region36: #{policy_decoder_forward.1} parent=1 // pred_region
      _
    $region37: #{policy_decoder_forward.1} parent=1 // pred_fallthru
      _
    // Predicated region
    $region38: #{policy_decoder_forward.1} parent=1 // pred_check
      _
    $region39: #{policy_decoder_forward.1} parent=1 // pred_check_branch
      %38 = sbr.rel (0) target = $region41
    $region40: #{policy_decoder_forward.1} parent=1 // pred_region
      _
    $region41: #{policy_decoder_forward.1} parent=1 // pred_fallthru
      _
    // Predicated region
    $region42: #{policy_decoder_forward.1} parent=1 // pred_check
      _
    $region43: #{policy_decoder_forward.1} parent=1 // pred_check_branch
      %40 = sbr.rel (0) target = $region45
    $region44: #{policy_decoder_forward.1} parent=1 // pred_region
      _
    $region45: #{policy_decoder_forward.1} parent=1 // pred_fallthru
      _
    // Predicated region
    $region46: #{policy_decoder_forward.1} parent=1 // pred_check
      _
    $region47: #{policy_decoder_forward.1} parent=1 // pred_check_branch
      %42 = sbr.rel (0) target = $region49
    $region48: #{policy_decoder_forward.1} parent=1 // pred_region
      _
    $region49: #{policy_decoder_forward.1} parent=1 // pred_fallthru
      _
    // Predicated region
    $region50: #{policy_decoder_forward.1} parent=1 // pred_check
      _
    $region51: #{policy_decoder_forward.1} parent=1 // pred_check_branch
      %44 = sbr.rel (0) target = $region53
    $region52: #{policy_decoder_forward.1} parent=1 // pred_region
      %s46 = ssub.s32 16, 16
      %47 = vsyncadd [#allocation3], %s46
      %s49 = sshll.u32 %s12, 4
      %s50 = int_to_ptr.vmem [resolvable:$true] %s49
      %52 = dma.vmem_to_smem %s50, 16, [#allocation2], [#allocation3]
    $region53: #{policy_decoder_forward.1} parent=1 // pred_fallthru
      _
    // Predicated region
    $region54: #{policy_decoder_forward.1} parent=1 // pred_check
      _
    $region55: #{policy_decoder_forward.1} parent=1 // pred_check_branch
      %54 = sbr.rel (0) target = $region57
    $region56: #{policy_decoder_forward.1} parent=1 // pred_region
      %55 = dma.done [#allocation3], 16
    $region57: #{policy_decoder_forward.1} parent=1 // pred_fallthru
      _
    %56 = sfence
    %v57 = vld [vmem:[%s0] sm:$0xff]
    %v58 = vld [vmem:[%s0 + $0x8] sm:$0xff]
    %v59 = vld [vmem:[%s1] sm:$0xff]
    %v60 = vld [vmem:[%s1 + $0x8] sm:$0xff]
    %v61 = vld [vmem:[%s1 + $0x10] sm:$0xff]
    %v62 = vld [vmem:[%s1 + $0x18] sm:$0xff]
    %v63 = vld [vmem:[%s2] sm:$0xff]
    %v64 = vld [vmem:[%s2 + $0x8] sm:$0xff]
    %v65 = vld [vmem:[%s2 + $0x10] sm:$0xff]
    %v66 = vld [vmem:[%s2 + $0x18] sm:$0xff]
    %68 = vset.pattern.permute.xlu0 0
    %69 = vperm.xlu0 %68, %v63
    %v70 = vpop.permute.xlu0 %69
    %73 = vset.pattern.permute.xlu0 0
    %74 = vperm.xlu0 %73, %v64
    %v75 = vpop.permute.xlu0 %74
    %78 = vset.pattern.permute.xlu0 0
    %79 = vperm.xlu0 %78, %v65
    %v80 = vpop.permute.xlu0 %79
    %83 = vset.pattern.permute.xlu0 0
    %84 = vperm.xlu0 %83, %v66
    %v85 = vpop.permute.xlu0 %84
    %vm87 = vcmask 130048
    %v89 = vsel %vm87, %v59, 0
    %v92 = vsel %vm87, %v60, 0
    %v95 = vsel %vm87, %v61, 0
    %v98 = vsel %vm87, %v62, 0
    %100 = vmatprep.subr.mxu0 0.0
    %101 = vmatpush1.msra.mxu0 %v57
    %102 = vmatprep.subr.mxu0 0.0
    %103 = vmatpush1.msra.mxu0 %v58
    %104 = vmatprep.subr.mxu0 0.0
    %105 = vmatpush1.msra.mxu0 0.0
    %106 = vmatprep.subr.mxu0 0.0
    %107 = vmatpush1.msra.mxu0 0.0
    %108 = vmatprep.subr.mxu0 0.0
    %109 = vmatpush1.msra.mxu0 0.0
    %110 = vmatprep.subr.mxu0 0.0
    %111 = vmatpush1.msra.mxu0 0.0
    %112 = vmatprep.subr.mxu0 0.0
    %113 = vmatpush1.msra.mxu0 0.0
    %114 = vmatprep.subr.mxu0 0.0
    %115 = vmatpush1.msra.mxu0 0.0
    %116 = vmatprep.subr.mxu0 0.0
    %117 = vmatpush1.msra.mxu0 0.0
    %118 = vmatprep.subr.mxu0 0.0
    %119 = vmatpush1.msra.mxu0 0.0
    %120 = vmatprep.subr.mxu0 0.0
    %121 = vmatpush1.msra.mxu0 0.0
    %122 = vmatprep.subr.mxu0 0.0
    %123 = vmatpush1.msra.mxu0 0.0
    %124 = vmatprep.subr.mxu0 0.0
    %125 = vmatpush1.msra.mxu0 0.0
    %126 = vmatprep.subr.mxu0 0.0
    %127 = vmatpush1.msra.mxu0 0.0
    %128 = vmatprep.subr.mxu0 0.0
    %129 = vmatpush1.msra.mxu0 0.0
    %130 = vmatprep.subr.mxu0 0.0
    %131 = vmatpush1.msra.mxu0 0.0
    %132 = vmatprep.subr.mxu0 0.0
    %133 = vmatpush1.msra.mxu0 0.0
    %134 = vmatprep.subr.mxu0 0.0
    %135 = vmatpush1.msra.mxu0 0.0
    %136 = vmatprep.subr.mxu0 0.0
    %137 = vmatpush1.msra.mxu0 0.0
    %138 = vmatprep.subr.mxu0 0.0
    %139 = vmatpush1.msra.mxu0 0.0
    %140 = vmatprep.subr.mxu0 0.0
    %141 = vmatpush1.msra.mxu0 0.0
    %142 = vmatprep.subr.mxu0 0.0
    %143 = vmatpush1.msra.mxu0 0.0
    %144 = vmatprep.subr.mxu0 0.0
    %145 = vmatpush1.msra.mxu0 0.0
    %146 = vmatprep.subr.mxu0 0.0
    %147 = vmatpush1.msra.mxu0 0.0
    %148 = vmatprep.subr.mxu0 0.0
    %149 = vmatpush1.msra.mxu0 0.0
    %150 = vmatprep.subr.mxu0 0.0
    %151 = vmatpush1.msra.mxu0 0.0
    %152 = vmatprep.subr.mxu0 0.0
    %153 = vmatpush1.msra.mxu0 0.0
    %154 = vmatprep.subr.mxu0 0.0
    %155 = vmatpush1.msra.mxu0 0.0
    %156 = vmatprep.subr.mxu0 0.0
    %157 = vmatpush1.msra.mxu0 0.0
    %158 = vmatprep.subr.mxu0 0.0
    %159 = vmatpush1.msra.mxu0 0.0
    %160 = vmatprep.subr.mxu0 0.0
    %161 = vmatpush1.msra.mxu0 0.0
    %162 = vmatprep.subr.mxu0 0.0
    %163 = vmatpush1.msra.mxu0 0.0
    %164 = vmatprep.mubr.f32.mxu0 0.0
    %165 = vmatmul.mubr.f32.gmra.mrb[0].mxu0 %v89
    %v166 = vpop.f32.mrb[0].mxu0
    %v167 = vadd.f32 %v70, %v166
    %v168 = vpop.f32.mrb[0].mxu0
    %169 = vmatprep.mubr.f32.mxu0 0.0
    %170 = vmatmul.mubr.f32.gmra.mrb[0].mxu0 %v92
    %v171 = vpop.f32.mrb[0].mxu0
    %v172 = vadd.f32 %v75, %v171
    %v173 = vpop.f32.mrb[0].mxu0
    %174 = vmatprep.mubr.f32.mxu0 0.0
    %175 = vmatmul.mubr.f32.gmra.mrb[0].mxu0 %v95
    %v176 = vpop.f32.mrb[0].mxu0
    %v177 = vadd.f32 %v80, %v176
    %v178 = vpop.f32.mrb[0].mxu0
    %179 = vmatprep.mubr.f32.mxu0 0.0
    %180 = vmatmul.mubr.f32.gmra.mrb[0].mxu0 %v98
    %v181 = vpop.f32.mrb[0].mxu0
    %v182 = vadd.f32 %v85, %v181
    %v183 = vpop.f32.mrb[0].mxu0
    %184 = vdwg.mxu0
    %v185 = vmax.f32 %v167, 0.0
    %v186 = vmax.f32 %v172, 0.0
    %v187 = vmax.f32 %v177, 0.0
    %v188 = vmax.f32 %v182, 0.0
    %s189 = scalar_lea.vmem %s1, 32
    %v190 = vld [vmem:[%s189] sm:$0xff]
    %v191 = vld [vmem:[%s189 + $0x8] sm:$0xff]
    %v192 = vld [vmem:[%s189 + $0x10] sm:$0xff]
    %v193 = vld [vmem:[%s189 + $0x18] sm:$0xff]
    %s194 = scalar_lea.vmem %s2, 32
    %v195 = vld [vmem:[%s194] sm:$0xff]
    %v196 = vld [vmem:[%s194 + $0x8] sm:$0xff]
    %v197 = vld [vmem:[%s194 + $0x10] sm:$0xff]
    %v198 = vld [vmem:[%s194 + $0x18] sm:$0xff]
    %200 = vset.pattern.permute.xlu0 0
    %201 = vperm.xlu0 %200, %v195
    %v202 = vpop.permute.xlu0 %201
    %205 = vset.pattern.permute.xlu0 0
    %206 = vperm.xlu0 %205, %v196
    %v207 = vpop.permute.xlu0 %206
    %210 = vset.pattern.permute.xlu0 0
    %211 = vperm.xlu0 %210, %v197
    %v212 = vpop.permute.xlu0 %211
    %215 = vset.pattern.permute.xlu0 0
    %216 = vperm.xlu0 %215, %v198
    %v217 = vpop.permute.xlu0 %216
    %v220 = vsel %vm87, %v190, 0
    %v223 = vsel %vm87, %v191, 0
    %v226 = vsel %vm87, %v192, 0
    %v229 = vsel %vm87, %v193, 0
    %231 = vmatprep.subr.mxu0 0.0
    %232 = vmatpush1.msra.mxu0 %v57
    %233 = vmatprep.subr.mxu0 0.0
    %234 = vmatpush1.msra.mxu0 %v58
    %235 = vmatprep.subr.mxu0 0.0
    %236 = vmatpush1.msra.mxu0 0.0
    %237 = vmatprep.subr.mxu0 0.0
    %238 = vmatpush1.msra.mxu0 0.0
    %239 = vmatprep.subr.mxu0 0.0
    %240 = vmatpush1.msra.mxu0 0.0
    %241 = vmatprep.subr.mxu0 0.0
    %242 = vmatpush1.msra.mxu0 0.0
    %243 = vmatprep.subr.mxu0 0.0
    %244 = vmatpush1.msra.mxu0 0.0
    %245 = vmatprep.subr.mxu0 0.0
    %246 = vmatpush1.msra.mxu0 0.0
    %247 = vmatprep.subr.mxu0 0.0
    %248 = vmatpush1.msra.mxu0 0.0
    %249 = vmatprep.subr.mxu0 0.0
    %250 = vmatpush1.msra.mxu0 0.0
    %251 = vmatprep.subr.mxu0 0.0
    %252 = vmatpush1.msra.mxu0 0.0
    %253 = vmatprep.subr.mxu0 0.0
    %254 = vmatpush1.msra.mxu0 0.0
    %255 = vmatprep.subr.mxu0 0.0
    %256 = vmatpush1.msra.mxu0 0.0
    %257 = vmatprep.subr.mxu0 0.0
    %258 = vmatpush1.msra.mxu0 0.0
    %259 = vmatprep.subr.mxu0 0.0
    %260 = vmatpush1.msra.mxu0 0.0
    %261 = vmatprep.subr.mxu0 0.0
    %262 = vmatpush1.msra.mxu0 0.0
    %263 = vmatprep.subr.mxu0 0.0
    %264 = vmatpush1.msra.mxu0 0.0
    %265 = vmatprep.subr.mxu0 0.0
    %266 = vmatpush1.msra.mxu0 0.0
    %267 = vmatprep.subr.mxu0 0.0
    %268 = vmatpush1.msra.mxu0 0.0
    %269 = vmatprep.subr.mxu0 0.0
    %270 = vmatpush1.msra.mxu0 0.0
    %271 = vmatprep.subr.mxu0 0.0
    %272 = vmatpush1.msra.mxu0 0.0
    %273 = vmatprep.subr.mxu0 0.0
    %274 = vmatpush1.msra.mxu0 0.0
    %275 = vmatprep.subr.mxu0 0.0
    %276 = vmatpush1.msra.mxu0 0.0
    %277 = vmatprep.subr.mxu0 0.0
    %278 = vmatpush1.msra.mxu0 0.0
    %279 = vmatprep.subr.mxu0 0.0
    %280 = vmatpush1.msra.mxu0 0.0
    %281 = vmatprep.subr.mxu0 0.0
    %282 = vmatpush1.msra.mxu0 0.0
    %283 = vmatprep.subr.mxu0 0.0
    %284 = vmatpush1.msra.mxu0 0.0
    %285 = vmatprep.subr.mxu0 0.0
    %286 = vmatpush1.msra.mxu0 0.0
    %287 = vmatprep.subr.mxu0 0.0
    %288 = vmatpush1.msra.mxu0 0.0
    %289 = vmatprep.subr.mxu0 0.0
    %290 = vmatpush1.msra.mxu0 0.0
    %291 = vmatprep.subr.mxu0 0.0
    %292 = vmatpush1.msra.mxu0 0.0
    %293 = vmatprep.subr.mxu0 0.0
    %294 = vmatpush1.msra.mxu0 0.0
    %295 = vmatprep.mubr.f32.mxu0 0.0
    %296 = vmatmul.mubr.f32.gmra.mrb[0].mxu0 %v220
    %v297 = vpop.f32.mrb[0].mxu0
    %v298 = vadd.f32 %v202, %v297
    %v299 = vpop.f32.mrb[0].mxu0
    %300 = vmatprep.mubr.f32.mxu0 0.0
    %301 = vmatmul.mubr.f32.gmra.mrb[0].mxu0 %v223
    %v302 = vpop.f32.mrb[0].mxu0
    %v303 = vadd.f32 %v207, %v302
    %v304 = vpop.f32.mrb[0].mxu0
    %305 = vmatprep.mubr.f32.mxu0 0.0
    %306 = vmatmul.mubr.f32.gmra.mrb[0].mxu0 %v226
    %v307 = vpop.f32.mrb[0].mxu0
    %v308 = vadd.f32 %v212, %v307
    %v309 = vpop.f32.mrb[0].mxu0
    %310 = vmatprep.mubr.f32.mxu0 0.0
    %311 = vmatmul.mubr.f32.gmra.mrb[0].mxu0 %v229
    %v312 = vpop.f32.mrb[0].mxu0
    %v313 = vadd.f32 %v217, %v312
    %v314 = vpop.f32.mrb[0].mxu0
    %315 = vdwg.mxu0
    %v316 = vmax.f32 %v298, 0.0
    %v317 = vmax.f32 %v303, 0.0
    %v318 = vmax.f32 %v308, 0.0
    %v319 = vmax.f32 %v313, 0.0
    %s320 = scalar_lea.vmem %s1, 64
    %v321 = vld [vmem:[%s320] sm:$0xff]
    %v322 = vld [vmem:[%s320 + $0x8] sm:$0xff]
    %v323 = vld [vmem:[%s320 + $0x10] sm:$0xff]
    %v324 = vld [vmem:[%s320 + $0x18] sm:$0xff]
    %s325 = scalar_lea.vmem %s2, 64
    %v326 = vld [vmem:[%s325] sm:$0xff]
    %v327 = vld [vmem:[%s325 + $0x8] sm:$0xff]
    %v328 = vld [vmem:[%s325 + $0x10] sm:$0xff]
    %v329 = vld [vmem:[%s325 + $0x18] sm:$0xff]
    %331 = vset.pattern.permute.xlu0 0
    %332 = vperm.xlu0 %331, %v326
    %v333 = vpop.permute.xlu0 %332
    %336 = vset.pattern.permute.xlu0 0
    %337 = vperm.xlu0 %336, %v327
    %v338 = vpop.permute.xlu0 %337
    %341 = vset.pattern.permute.xlu0 0
    %342 = vperm.xlu0 %341, %v328
    %v343 = vpop.permute.xlu0 %342
    %346 = vset.pattern.permute.xlu0 0
    %347 = vperm.xlu0 %346, %v329
    %v348 = vpop.permute.xlu0 %347
    %v351 = vsel %vm87, %v321, 0
    %v354 = vsel %vm87, %v322, 0
    %v357 = vsel %vm87, %v323, 0
    %v360 = vsel %vm87, %v324, 0
    %362 = vmatprep.subr.mxu0 0.0
    %363 = vmatpush1.msra.mxu0 %v57
    %364 = vmatprep.subr.mxu0 0.0
    %365 = vmatpush1.msra.mxu0 %v58
    %366 = vmatprep.subr.mxu0 0.0
    %367 = vmatpush1.msra.mxu0 0.0
    %368 = vmatprep.subr.mxu0 0.0
    %369 = vmatpush1.msra.mxu0 0.0
    %370 = vmatprep.subr.mxu0 0.0
    %371 = vmatpush1.msra.mxu0 0.0
    %372 = vmatprep.subr.mxu0 0.0
    %373 = vmatpush1.msra.mxu0 0.0
    %374 = vmatprep.subr.mxu0 0.0
    %375 = vmatpush1.msra.mxu0 0.0
    %376 = vmatprep.subr.mxu0 0.0
    %377 = vmatpush1.msra.mxu0 0.0
    %378 = vmatprep.subr.mxu0 0.0
    %379 = vmatpush1.msra.mxu0 0.0
    %380 = vmatprep.subr.mxu0 0.0
    %381 = vmatpush1.msra.mxu0 0.0
    %382 = vmatprep.subr.mxu0 0.0
    %383 = vmatpush1.msra.mxu0 0.0
    %384 = vmatprep.subr.mxu0 0.0
    %385 = vmatpush1.msra.mxu0 0.0
    %386 = vmatprep.subr.mxu0 0.0
    %387 = vmatpush1.msra.mxu0 0.0
    %388 = vmatprep.subr.mxu0 0.0
    %389 = vmatpush1.msra.mxu0 0.0
    %390 = vmatprep.subr.mxu0 0.0
    %391 = vmatpush1.msra.mxu0 0.0
    %392 = vmatprep.subr.mxu0 0.0
    %393 = vmatpush1.msra.mxu0 0.0
    %394 = vmatprep.subr.mxu0 0.0
    %395 = vmatpush1.msra.mxu0 0.0
    %396 = vmatprep.subr.mxu0 0.0
    %397 = vmatpush1.msra.mxu0 0.0
    %398 = vmatprep.subr.mxu0 0.0
    %399 = vmatpush1.msra.mxu0 0.0
    %400 = vmatprep.subr.mxu0 0.0
    %401 = vmatpush1.msra.mxu0 0.0
    %402 = vmatprep.subr.mxu0 0.0
    %403 = vmatpush1.msra.mxu0 0.0
    %404 = vmatprep.subr.mxu0 0.0
    %405 = vmatpush1.msra.mxu0 0.0
    %406 = vmatprep.subr.mxu0 0.0
    %407 = vmatpush1.msra.mxu0 0.0
    %408 = vmatprep.subr.mxu0 0.0
    %409 = vmatpush1.msra.mxu0 0.0
    %410 = vmatprep.subr.mxu0 0.0
    %411 = vmatpush1.msra.mxu0 0.0
    %412 = vmatprep.subr.mxu0 0.0
    %413 = vmatpush1.msra.mxu0 0.0
    %414 = vmatprep.subr.mxu0 0.0
    %415 = vmatpush1.msra.mxu0 0.0
    %416 = vmatprep.subr.mxu0 0.0
    %417 = vmatpush1.msra.mxu0 0.0
    %418 = vmatprep.subr.mxu0 0.0
    %419 = vmatpush1.msra.mxu0 0.0
    %420 = vmatprep.subr.mxu0 0.0
    %421 = vmatpush1.msra.mxu0 0.0
    %422 = vmatprep.subr.mxu0 0.0
    %423 = vmatpush1.msra.mxu0 0.0
    %424 = vmatprep.subr.mxu0 0.0
    %425 = vmatpush1.msra.mxu0 0.0
    %426 = vmatprep.mubr.f32.mxu0 0.0
    %427 = vmatmul.mubr.f32.gmra.mrb[0].mxu0 %v351
    %v428 = vpop.f32.mrb[0].mxu0
    %v429 = vadd.f32 %v333, %v428
    %v430 = vpop.f32.mrb[0].mxu0
    %431 = vmatprep.mubr.f32.mxu0 0.0
    %432 = vmatmul.mubr.f32.gmra.mrb[0].mxu0 %v354
    %v433 = vpop.f32.mrb[0].mxu0
    %v434 = vadd.f32 %v338, %v433
    %v435 = vpop.f32.mrb[0].mxu0
    %436 = vmatprep.mubr.f32.mxu0 0.0
    %437 = vmatmul.mubr.f32.gmra.mrb[0].mxu0 %v357
    %v438 = vpop.f32.mrb[0].mxu0
    %v439 = vadd.f32 %v343, %v438
    %v440 = vpop.f32.mrb[0].mxu0
    %441 = vmatprep.mubr.f32.mxu0 0.0
    %442 = vmatmul.mubr.f32.gmra.mrb[0].mxu0 %v360
    %v443 = vpop.f32.mrb[0].mxu0
    %v444 = vadd.f32 %v348, %v443
    %v445 = vpop.f32.mrb[0].mxu0
    %446 = vdwg.mxu0
    %v447 = vmax.f32 %v429, 0.0
    %v448 = vmax.f32 %v434, 0.0
    %v449 = vmax.f32 %v439, 0.0
    %v450 = vmax.f32 %v444, 0.0
    %s451 = scalar_lea.vmem %s1, 96
    %v452 = vld [vmem:[%s451] sm:$0xff]
    %v453 = vld [vmem:[%s451 + $0x8] sm:$0xff]
    %v454 = vld [vmem:[%s451 + $0x10] sm:$0xff]
    %v455 = vld [vmem:[%s451 + $0x18] sm:$0xff]
    %s456 = scalar_lea.vmem %s2, 96
    %v457 = vld [vmem:[%s456] sm:$0xff]
    %v458 = vld [vmem:[%s456 + $0x8] sm:$0xff]
    %v459 = vld [vmem:[%s456 + $0x10] sm:$0xff]
    %v460 = vld [vmem:[%s456 + $0x18] sm:$0xff]
    %462 = vset.pattern.permute.xlu0 0
    %463 = vperm.xlu0 %462, %v457
    %v464 = vpop.permute.xlu0 %463
    %467 = vset.pattern.permute.xlu0 0
    %468 = vperm.xlu0 %467, %v458
    %v469 = vpop.permute.xlu0 %468
    %472 = vset.pattern.permute.xlu0 0
    %473 = vperm.xlu0 %472, %v459
    %v474 = vpop.permute.xlu0 %473
    %477 = vset.pattern.permute.xlu0 0
    %478 = vperm.xlu0 %477, %v460
    %v479 = vpop.permute.xlu0 %478
    %v482 = vsel %vm87, %v452, 0
    %v485 = vsel %vm87, %v453, 0
    %v488 = vsel %vm87, %v454, 0
    %v491 = vsel %vm87, %v455, 0
    %493 = vmatprep.subr.mxu0 0.0
    %494 = vmatpush1.msra.mxu0 %v57
    %495 = vmatprep.subr.mxu0 0.0
    %496 = vmatpush1.msra.mxu0 %v58
    %497 = vmatprep.subr.mxu0 0.0
    %498 = vmatpush1.msra.mxu0 0.0
    %499 = vmatprep.subr.mxu0 0.0
    %500 = vmatpush1.msra.mxu0 0.0
    %501 = vmatprep.subr.mxu0 0.0
    %502 = vmatpush1.msra.mxu0 0.0
    %503 = vmatprep.subr.mxu0 0.0
    %504 = vmatpush1.msra.mxu0 0.0
    %505 = vmatprep.subr.mxu0 0.0
    %506 = vmatpush1.msra.mxu0 0.0
    %507 = vmatprep.subr.mxu0 0.0
    %508 = vmatpush1.msra.mxu0 0.0
    %509 = vmatprep.subr.mxu0 0.0
    %510 = vmatpush1.msra.mxu0 0.0
    %511 = vmatprep.subr.mxu0 0.0
    %512 = vmatpush1.msra.mxu0 0.0
    %513 = vmatprep.subr.mxu0 0.0
    %514 = vmatpush1.msra.mxu0 0.0
    %515 = vmatprep.subr.mxu0 0.0
    %516 = vmatpush1.msra.mxu0 0.0
    %517 = vmatprep.subr.mxu0 0.0
    %518 = vmatpush1.msra.mxu0 0.0
    %519 = vmatprep.subr.mxu0 0.0
    %520 = vmatpush1.msra.mxu0 0.0
    %521 = vmatprep.subr.mxu0 0.0
    %522 = vmatpush1.msra.mxu0 0.0
    %523 = vmatprep.subr.mxu0 0.0
    %524 = vmatpush1.msra.mxu0 0.0
    %525 = vmatprep.subr.mxu0 0.0
    %526 = vmatpush1.msra.mxu0 0.0
    %527 = vmatprep.subr.mxu0 0.0
    %528 = vmatpush1.msra.mxu0 0.0
    %529 = vmatprep.subr.mxu0 0.0
    %530 = vmatpush1.msra.mxu0 0.0
    %531 = vmatprep.subr.mxu0 0.0
    %532 = vmatpush1.msra.mxu0 0.0
    %533 = vmatprep.subr.mxu0 0.0
    %534 = vmatpush1.msra.mxu0 0.0
    %535 = vmatprep.subr.mxu0 0.0
    %536 = vmatpush1.msra.mxu0 0.0
    %537 = vmatprep.subr.mxu0 0.0
    %538 = vmatpush1.msra.mxu0 0.0
    %539 = vmatprep.subr.mxu0 0.0
    %540 = vmatpush1.msra.mxu0 0.0
    %541 = vmatprep.subr.mxu0 0.0
    %542 = vmatpush1.msra.mxu0 0.0
    %543 = vmatprep.subr.mxu0 0.0
    %544 = vmatpush1.msra.mxu0 0.0
    %545 = vmatprep.subr.mxu0 0.0
    %546 = vmatpush1.msra.mxu0 0.0
    %547 = vmatprep.subr.mxu0 0.0
    %548 = vmatpush1.msra.mxu0 0.0
    %549 = vmatprep.subr.mxu0 0.0
    %550 = vmatpush1.msra.mxu0 0.0
    %551 = vmatprep.subr.mxu0 0.0
    %552 = vmatpush1.msra.mxu0 0.0
    %553 = vmatprep.subr.mxu0 0.0
    %554 = vmatpush1.msra.mxu0 0.0
    %555 = vmatprep.subr.mxu0 0.0
    %556 = vmatpush1.msra.mxu0 0.0
    %557 = vmatprep.mubr.f32.mxu0 0.0
    %558 = vmatmul.mubr.f32.gmra.mrb[0].mxu0 %v482
    %v559 = vpop.f32.mrb[0].mxu0
    %v560 = vadd.f32 %v464, %v559
    %v561 = vpop.f32.mrb[0].mxu0
    %562 = vmatprep.mubr.f32.mxu0 0.0
    %563 = vmatmul.mubr.f32.gmra.mrb[0].mxu0 %v485
    %v564 = vpop.f32.mrb[0].mxu0
    %v565 = vadd.f32 %v469, %v564
    %v566 = vpop.f32.mrb[0].mxu0
    %567 = vmatprep.mubr.f32.mxu0 0.0
    %568 = vmatmul.mubr.f32.gmra.mrb[0].mxu0 %v488
    %v569 = vpop.f32.mrb[0].mxu0
    %v570 = vadd.f32 %v474, %v569
    %v571 = vpop.f32.mrb[0].mxu0
    %572 = vmatprep.mubr.f32.mxu0 0.0
    %573 = vmatmul.mubr.f32.gmra.mrb[0].mxu0 %v491
    %v574 = vpop.f32.mrb[0].mxu0
    %v575 = vadd.f32 %v479, %v574
    %v576 = vpop.f32.mrb[0].mxu0
    %577 = vdwg.mxu0
    %v578 = vmax.f32 %v560, 0.0
    %v579 = vmax.f32 %v565, 0.0
    %v580 = vmax.f32 %v570, 0.0
    %v581 = vmax.f32 %v575, 0.0
    %586 = vrot.lane.b32.xlu0 %v316, 2
    %v587 = vpop.permute.xlu0 %586
    %588 = vrot.lane.b32.xlu0 %v317, 2
    %v589 = vpop.permute.xlu0 %588
    %590 = vrot.lane.b32.xlu0 %v318, 2
    %v591 = vpop.permute.xlu0 %590
    %592 = vrot.lane.b32.xlu0 %v319, 2
    %v593 = vpop.permute.xlu0 %592
    %602 = vrot.lane.b32.xlu0 %v447, 4
    %v603 = vpop.permute.xlu0 %602
    %604 = vrot.lane.b32.xlu0 %v448, 4
    %v605 = vpop.permute.xlu0 %604
    %606 = vrot.lane.b32.xlu0 %v449, 4
    %v607 = vpop.permute.xlu0 %606
    %608 = vrot.lane.b32.xlu0 %v450, 4
    %v609 = vpop.permute.xlu0 %608
    %618 = vrot.lane.b32.xlu0 %v578, 6
    %v619 = vpop.permute.xlu0 %618
    %620 = vrot.lane.b32.xlu0 %v579, 6
    %v621 = vpop.permute.xlu0 %620
    %622 = vrot.lane.b32.xlu0 %v580, 6
    %v623 = vpop.permute.xlu0 %622
    %624 = vrot.lane.b32.xlu0 %v581, 6
    %v625 = vpop.permute.xlu0 %624
    %vm630 = vcmask 15360
    %v631 = vsel %vm630, %v185, %v587
    %v632 = vsel %vm630, %v186, %v589
    %v633 = vsel %vm630, %v187, %v591
    %v634 = vsel %vm630, %v188, %v593
    %vm635 = vcmask 31744
    %v636 = vsel %vm635, %v631, %v603
    %v637 = vsel %vm635, %v632, %v605
    %v638 = vsel %vm635, %v633, %v607
    %v639 = vsel %vm635, %v634, %v609
    %vm640 = vcmask 48128
    %v641 = vsel %vm640, %v636, %v619
    %v642 = vsel %vm640, %v637, %v621
    %v643 = vsel %vm640, %v638, %v623
    %v644 = vsel %vm640, %v639, %v625
    %v645 = vld [vmem:[%s4] sm:$0xff]
    %v646 = vld [vmem:[%s4 + $0x8] sm:$0xff]
    %s647 = scalar_lea.vmem %s4, 16
    %v648 = vld [vmem:[%s647] sm:$0xff]
    %v649 = vld [vmem:[%s647 + $0x8] sm:$0xff]
    %s650 = scalar_lea.vmem %s4, 32
    %v651 = vld [vmem:[%s650] sm:$0xff]
    %v652 = vld [vmem:[%s650 + $0x8] sm:$0xff]
    %v653 = vld [vmem:[%s3] sm:$0xff]
    %v654 = vld [vmem:[%s3 + $0x8] sm:$0xff]
    %656 = vset.pattern.permute.xlu0 0
    %657 = vperm.xlu0 %656, %v645
    %v658 = vpop.permute.xlu0 %657
    %661 = vset.pattern.permute.xlu0 0
    %662 = vperm.xlu0 %661, %v646
    %v663 = vpop.permute.xlu0 %662
    %vm665 = vcmask 261120
    %v667 = vsel %vm665, %v653, 0
    %v670 = vsel %vm665, %v654, 0
    %672 = vmatprep.subr.mxu0 0.0
    %673 = vmatpush1.msra.mxu0 %v641
    %674 = vmatprep.subr.mxu0 0.0
    %675 = vmatpush1.msra.mxu0 %v642
    %676 = vmatprep.subr.mxu0 0.0
    %677 = vmatpush1.msra.mxu0 %v643
    %678 = vmatprep.subr.mxu0 0.0
    %679 = vmatpush1.msra.mxu0 %v644
    %680 = vmatprep.subr.mxu0 0.0
    %681 = vmatpush1.msra.mxu0 0.0
    %682 = vmatprep.subr.mxu0 0.0
    %683 = vmatpush1.msra.mxu0 0.0
    %684 = vmatprep.subr.mxu0 0.0
    %685 = vmatpush1.msra.mxu0 0.0
    %686 = vmatprep.subr.mxu0 0.0
    %687 = vmatpush1.msra.mxu0 0.0
    %688 = vmatprep.subr.mxu0 0.0
    %689 = vmatpush1.msra.mxu0 0.0
    %690 = vmatprep.subr.mxu0 0.0
    %691 = vmatpush1.msra.mxu0 0.0
    %692 = vmatprep.subr.mxu0 0.0
    %693 = vmatpush1.msra.mxu0 0.0
    %694 = vmatprep.subr.mxu0 0.0
    %695 = vmatpush1.msra.mxu0 0.0
    %696 = vmatprep.subr.mxu0 0.0
    %697 = vmatpush1.msra.mxu0 0.0
    %698 = vmatprep.subr.mxu0 0.0
    %699 = vmatpush1.msra.mxu0 0.0
    %700 = vmatprep.subr.mxu0 0.0
    %701 = vmatpush1.msra.mxu0 0.0
    %702 = vmatprep.subr.mxu0 0.0
    %703 = vmatpush1.msra.mxu0 0.0
    %704 = vmatprep.subr.mxu0 0.0
    %705 = vmatpush1.msra.mxu0 0.0
    %706 = vmatprep.subr.mxu0 0.0
    %707 = vmatpush1.msra.mxu0 0.0
    %708 = vmatprep.subr.mxu0 0.0
    %709 = vmatpush1.msra.mxu0 0.0
    %710 = vmatprep.subr.mxu0 0.0
    %711 = vmatpush1.msra.mxu0 0.0
    %712 = vmatprep.subr.mxu0 0.0
    %713 = vmatpush1.msra.mxu0 0.0
    %714 = vmatprep.subr.mxu0 0.0
    %715 = vmatpush1.msra.mxu0 0.0
    %716 = vmatprep.subr.mxu0 0.0
    %717 = vmatpush1.msra.mxu0 0.0
    %718 = vmatprep.subr.mxu0 0.0
    %719 = vmatpush1.msra.mxu0 0.0
    %720 = vmatprep.subr.mxu0 0.0
    %721 = vmatpush1.msra.mxu0 0.0
    %722 = vmatprep.subr.mxu0 0.0
    %723 = vmatpush1.msra.mxu0 0.0
    %724 = vmatprep.subr.mxu0 0.0
    %725 = vmatpush1.msra.mxu0 0.0
    %726 = vmatprep.subr.mxu0 0.0
    %727 = vmatpush1.msra.mxu0 0.0
    %728 = vmatprep.subr.mxu0 0.0
    %729 = vmatpush1.msra.mxu0 0.0
    %730 = vmatprep.subr.mxu0 0.0
    %731 = vmatpush1.msra.mxu0 0.0
    %732 = vmatprep.subr.mxu0 0.0
    %733 = vmatpush1.msra.mxu0 0.0
    %734 = vmatprep.subr.mxu0 0.0
    %735 = vmatpush1.msra.mxu0 0.0
    %736 = vmatprep.mubr.f32.mxu0 0.0
    %737 = vmatmul.mubr.f32.gmra.mrb[0].mxu0 %v667
    %v738 = vpop.f32.mrb[0].mxu0
    %v739 = vadd.f32 %v658, %v738
    %v740 = vpop.f32.mrb[0].mxu0
    %741 = vmatprep.mubr.f32.mxu0 0.0
    %742 = vmatmul.mubr.f32.gmra.mrb[0].mxu0 %v670
    %v743 = vpop.f32.mrb[0].mxu0
    %v744 = vadd.f32 %v663, %v743
    %v745 = vpop.f32.mrb[0].mxu0
    %746 = vdwg.mxu0
    %s747 = scalar_lea.vmem %s3, 16
    %v748 = vld [vmem:[%s747] sm:$0xff]
    %v749 = vld [vmem:[%s747 + $0x8] sm:$0xff]
    %v751 = vsel %vm665, %v748, 0
    %v754 = vsel %vm665, %v749, 0
    %756 = vmatprep.subr.mxu0 0.0
    %757 = vmatpush1.msra.mxu0 %v641
    %758 = vmatprep.subr.mxu0 0.0
    %759 = vmatpush1.msra.mxu0 %v642
    %760 = vmatprep.subr.mxu0 0.0
    %761 = vmatpush1.msra.mxu0 %v643
    %762 = vmatprep.subr.mxu0 0.0
    %763 = vmatpush1.msra.mxu0 %v644
    %764 = vmatprep.subr.mxu0 0.0
    %765 = vmatpush1.msra.mxu0 0.0
    %766 = vmatprep.subr.mxu0 0.0
    %767 = vmatpush1.msra.mxu0 0.0
    %768 = vmatprep.subr.mxu0 0.0
    %769 = vmatpush1.msra.mxu0 0.0
    %770 = vmatprep.subr.mxu0 0.0
    %771 = vmatpush1.msra.mxu0 0.0
    %772 = vmatprep.subr.mxu0 0.0
    %773 = vmatpush1.msra.mxu0 0.0
    %774 = vmatprep.subr.mxu0 0.0
    %775 = vmatpush1.msra.mxu0 0.0
    %776 = vmatprep.subr.mxu0 0.0
    %777 = vmatpush1.msra.mxu0 0.0
    %778 = vmatprep.subr.mxu0 0.0
    %779 = vmatpush1.msra.mxu0 0.0
    %780 = vmatprep.subr.mxu0 0.0
    %781 = vmatpush1.msra.mxu0 0.0
    %782 = vmatprep.subr.mxu0 0.0
    %783 = vmatpush1.msra.mxu0 0.0
    %784 = vmatprep.subr.mxu0 0.0
    %785 = vmatpush1.msra.mxu0 0.0
    %786 = vmatprep.subr.mxu0 0.0
    %787 = vmatpush1.msra.mxu0 0.0
    %788 = vmatprep.subr.mxu0 0.0
    %789 = vmatpush1.msra.mxu0 0.0
    %790 = vmatprep.subr.mxu0 0.0
    %791 = vmatpush1.msra.mxu0 0.0
    %792 = vmatprep.subr.mxu0 0.0
    %793 = vmatpush1.msra.mxu0 0.0
    %794 = vmatprep.subr.mxu0 0.0
    %795 = vmatpush1.msra.mxu0 0.0
    %796 = vmatprep.subr.mxu0 0.0
    %797 = vmatpush1.msra.mxu0 0.0
    %798 = vmatprep.subr.mxu0 0.0
    %799 = vmatpush1.msra.mxu0 0.0
    %800 = vmatprep.subr.mxu0 0.0
    %801 = vmatpush1.msra.mxu0 0.0
    %802 = vmatprep.subr.mxu0 0.0
    %803 = vmatpush1.msra.mxu0 0.0
    %804 = vmatprep.subr.mxu0 0.0
    %805 = vmatpush1.msra.mxu0 0.0
    %806 = vmatprep.subr.mxu0 0.0
    %807 = vmatpush1.msra.mxu0 0.0
    %808 = vmatprep.subr.mxu0 0.0
    %809 = vmatpush1.msra.mxu0 0.0
    %810 = vmatprep.subr.mxu0 0.0
    %811 = vmatpush1.msra.mxu0 0.0
    %812 = vmatprep.subr.mxu0 0.0
    %813 = vmatpush1.msra.mxu0 0.0
    %814 = vmatprep.subr.mxu0 0.0
    %815 = vmatpush1.msra.mxu0 0.0
    %816 = vmatprep.subr.mxu0 0.0
    %817 = vmatpush1.msra.mxu0 0.0
    %818 = vmatprep.subr.mxu0 0.0
    %819 = vmatpush1.msra.mxu0 0.0
    %820 = vmatprep.mubr.f32.mxu0 0.0
    %821 = vmatmul.mubr.f32.gmra.mrb[0].mxu0 %v751
    %v822 = vpop.f32.mrb[0].mxu0
    %v823 = vadd.f32 %v658, %v822
    %v824 = vpop.f32.mrb[0].mxu0
    %825 = vmatprep.mubr.f32.mxu0 0.0
    %826 = vmatmul.mubr.f32.gmra.mrb[0].mxu0 %v754
    %v827 = vpop.f32.mrb[0].mxu0
    %v828 = vadd.f32 %v663, %v827
    %v829 = vpop.f32.mrb[0].mxu0
    %830 = vdwg.mxu0
    %s831 = scalar_lea.vmem %s3, 32
    %v832 = vld [vmem:[%s831] sm:$0xff]
    %v833 = vld [vmem:[%s831 + $0x8] sm:$0xff]
    %v835 = vsel %vm665, %v832, 0
    %v838 = vsel %vm665, %v833, 0
    %840 = vmatprep.subr.mxu0 0.0
    %841 = vmatpush1.msra.mxu0 %v641
    %842 = vmatprep.subr.mxu0 0.0
    %843 = vmatpush1.msra.mxu0 %v642
    %844 = vmatprep.subr.mxu0 0.0
    %845 = vmatpush1.msra.mxu0 %v643
    %846 = vmatprep.subr.mxu0 0.0
    %847 = vmatpush1.msra.mxu0 %v644
    %848 = vmatprep.subr.mxu0 0.0
    %849 = vmatpush1.msra.mxu0 0.0
    %850 = vmatprep.subr.mxu0 0.0
    %851 = vmatpush1.msra.mxu0 0.0
    %852 = vmatprep.subr.mxu0 0.0
    %853 = vmatpush1.msra.mxu0 0.0
    %854 = vmatprep.subr.mxu0 0.0
    %855 = vmatpush1.msra.mxu0 0.0
    %856 = vmatprep.subr.mxu0 0.0
    %857 = vmatpush1.msra.mxu0 0.0
    %858 = vmatprep.subr.mxu0 0.0
    %859 = vmatpush1.msra.mxu0 0.0
    %860 = vmatprep.subr.mxu0 0.0
    %861 = vmatpush1.msra.mxu0 0.0
    %862 = vmatprep.subr.mxu0 0.0
    %863 = vmatpush1.msra.mxu0 0.0
    %864 = vmatprep.subr.mxu0 0.0
    %865 = vmatpush1.msra.mxu0 0.0
    %866 = vmatprep.subr.mxu0 0.0
    %867 = vmatpush1.msra.mxu0 0.0
    %868 = vmatprep.subr.mxu0 0.0
    %869 = vmatpush1.msra.mxu0 0.0
    %870 = vmatprep.subr.mxu0 0.0
    %871 = vmatpush1.msra.mxu0 0.0
    %872 = vmatprep.subr.mxu0 0.0
    %873 = vmatpush1.msra.mxu0 0.0
    %874 = vmatprep.subr.mxu0 0.0
    %875 = vmatpush1.msra.mxu0 0.0
    %876 = vmatprep.subr.mxu0 0.0
    %877 = vmatpush1.msra.mxu0 0.0
    %878 = vmatprep.subr.mxu0 0.0
    %879 = vmatpush1.msra.mxu0 0.0
    %880 = vmatprep.subr.mxu0 0.0
    %881 = vmatpush1.msra.mxu0 0.0
    %882 = vmatprep.subr.mxu0 0.0
    %883 = vmatpush1.msra.mxu0 0.0
    %884 = vmatprep.subr.mxu0 0.0
    %885 = vmatpush1.msra.mxu0 0.0
    %886 = vmatprep.subr.mxu0 0.0
    %887 = vmatpush1.msra.mxu0 0.0
    %888 = vmatprep.subr.mxu0 0.0
    %889 = vmatpush1.msra.mxu0 0.0
    %890 = vmatprep.subr.mxu0 0.0
    %891 = vmatpush1.msra.mxu0 0.0
    %892 = vmatprep.subr.mxu0 0.0
    %893 = vmatpush1.msra.mxu0 0.0
    %894 = vmatprep.subr.mxu0 0.0
    %895 = vmatpush1.msra.mxu0 0.0
    %896 = vmatprep.subr.mxu0 0.0
    %897 = vmatpush1.msra.mxu0 0.0
    %898 = vmatprep.subr.mxu0 0.0
    %899 = vmatpush1.msra.mxu0 0.0
    %900 = vmatprep.subr.mxu0 0.0
    %901 = vmatpush1.msra.mxu0 0.0
    %902 = vmatprep.subr.mxu0 0.0
    %903 = vmatpush1.msra.mxu0 0.0
    %904 = vmatprep.mubr.f32.mxu0 0.0
    %905 = vmatmul.mubr.f32.gmra.mrb[0].mxu0 %v835
    %v906 = vpop.f32.mrb[0].mxu0
    %v907 = vadd.f32 %v658, %v906
    %v908 = vpop.f32.mrb[0].mxu0
    %909 = vmatprep.mubr.f32.mxu0 0.0
    %910 = vmatmul.mubr.f32.gmra.mrb[0].mxu0 %v838
    %v911 = vpop.f32.mrb[0].mxu0
    %v912 = vadd.f32 %v663, %v911
    %v913 = vpop.f32.mrb[0].mxu0
    %914 = vdwg.mxu0
    %s915 = scalar_lea.vmem %s3, 48
    %v916 = vld [vmem:[%s915] sm:$0xff]
    %v917 = vld [vmem:[%s915 + $0x8] sm:$0xff]
    %v919 = vsel %vm665, %v916, 0
    %v922 = vsel %vm665, %v917, 0
    %924 = vmatprep.subr.mxu0 0.0
    %925 = vmatpush1.msra.mxu0 %v641
    %926 = vmatprep.subr.mxu0 0.0
    %927 = vmatpush1.msra.mxu0 %v642
    %928 = vmatprep.subr.mxu0 0.0
    %929 = vmatpush1.msra.mxu0 %v643
    %930 = vmatprep.subr.mxu0 0.0
    %931 = vmatpush1.msra.mxu0 %v644
    %932 = vmatprep.subr.mxu0 0.0
    %933 = vmatpush1.msra.mxu0 0.0
    %934 = vmatprep.subr.mxu0 0.0
    %935 = vmatpush1.msra.mxu0 0.0
    %936 = vmatprep.subr.mxu0 0.0
    %937 = vmatpush1.msra.mxu0 0.0
    %938 = vmatprep.subr.mxu0 0.0
    %939 = vmatpush1.msra.mxu0 0.0
    %940 = vmatprep.subr.mxu0 0.0
    %941 = vmatpush1.msra.mxu0 0.0
    %942 = vmatprep.subr.mxu0 0.0
    %943 = vmatpush1.msra.mxu0 0.0
    %944 = vmatprep.subr.mxu0 0.0
    %945 = vmatpush1.msra.mxu0 0.0
    %946 = vmatprep.subr.mxu0 0.0
    %947 = vmatpush1.msra.mxu0 0.0
    %948 = vmatprep.subr.mxu0 0.0
    %949 = vmatpush1.msra.mxu0 0.0
    %950 = vmatprep.subr.mxu0 0.0
    %951 = vmatpush1.msra.mxu0 0.0
    %952 = vmatprep.subr.mxu0 0.0
    %953 = vmatpush1.msra.mxu0 0.0
    %954 = vmatprep.subr.mxu0 0.0
    %955 = vmatpush1.msra.mxu0 0.0
    %956 = vmatprep.subr.mxu0 0.0
    %957 = vmatpush1.msra.mxu0 0.0
    %958 = vmatprep.subr.mxu0 0.0
    %959 = vmatpush1.msra.mxu0 0.0
    %960 = vmatprep.subr.mxu0 0.0
    %961 = vmatpush1.msra.mxu0 0.0
    %962 = vmatprep.subr.mxu0 0.0
    %963 = vmatpush1.msra.mxu0 0.0
    %964 = vmatprep.subr.mxu0 0.0
    %965 = vmatpush1.msra.mxu0 0.0
    %966 = vmatprep.subr.mxu0 0.0
    %967 = vmatpush1.msra.mxu0 0.0
    %968 = vmatprep.subr.mxu0 0.0
    %969 = vmatpush1.msra.mxu0 0.0
    %970 = vmatprep.subr.mxu0 0.0
    %971 = vmatpush1.msra.mxu0 0.0
    %972 = vmatprep.subr.mxu0 0.0
    %973 = vmatpush1.msra.mxu0 0.0
    %974 = vmatprep.subr.mxu0 0.0
    %975 = vmatpush1.msra.mxu0 0.0
    %976 = vmatprep.subr.mxu0 0.0
    %977 = vmatpush1.msra.mxu0 0.0
    %978 = vmatprep.subr.mxu0 0.0
    %979 = vmatpush1.msra.mxu0 0.0
    %980 = vmatprep.subr.mxu0 0.0
    %981 = vmatpush1.msra.mxu0 0.0
    %982 = vmatprep.subr.mxu0 0.0
    %983 = vmatpush1.msra.mxu0 0.0
    %984 = vmatprep.subr.mxu0 0.0
    %985 = vmatpush1.msra.mxu0 0.0
    %986 = vmatprep.subr.mxu0 0.0
    %987 = vmatpush1.msra.mxu0 0.0
    %988 = vmatprep.mubr.f32.mxu0 0.0
    %989 = vmatmul.mubr.f32.gmra.mrb[0].mxu0 %v919
    %v990 = vpop.f32.mrb[0].mxu0
    %v991 = vadd.f32 %v658, %v990
    %v992 = vpop.f32.mrb[0].mxu0
    %993 = vmatprep.mubr.f32.mxu0 0.0
    %994 = vmatmul.mubr.f32.gmra.mrb[0].mxu0 %v922
    %v995 = vpop.f32.mrb[0].mxu0
    %v996 = vadd.f32 %v663, %v995
    %v997 = vpop.f32.mrb[0].mxu0
    %998 = vdwg.mxu0
    %v999 = vadd.f32 %v739, %v823
    %v1000 = vadd.f32 %v744, %v828
    %v1001 = vadd.f32 %v999, %v907
    %v1002 = vadd.f32 %v1000, %v912
    %v1003 = vadd.f32 %v1001, %v991
    %v1004 = vadd.f32 %v1002, %v996
    %vm1005 = vcmask 64512
    %v1006 = vsel %vm1005, %v1003, 0.0
    %1007 = vadd.xlane.f32.xlu0 %v1006
    %v1008 = vpop.xlane.xlu0 %1007
    %v1009 = vsel %vm1005, %v1004, 0.0
    %1010 = vadd.xlane.f32.xlu0 %v1009
    %v1011 = vpop.xlane.xlu0 %1010
    %v1012 = vrcp.pop 32.0
    %v1013 = vmul.f32 %v1008, %v1012
    %v1014 = vmul.f32 %v1011, %v1012
    %v1015 = vsub.f32 %v739, %v1013
    %v1016 = vsub.f32 %v744, %v1014
    %v1017 = vsub.f32 %v823, %v1013
    %v1018 = vsub.f32 %v828, %v1014
    %v1019 = vsub.f32 %v907, %v1013
    %v1020 = vsub.f32 %v912, %v1014
    %v1021 = vsub.f32 %v991, %v1013
    %v1022 = vsub.f32 %v996, %v1014
    %v1023 = vmul.f32 %v1015, %v1015
    %v1024 = vmul.f32 %v1016, %v1016
    %v1025 = vmul.f32 %v1017, %v1017
    %v1026 = vmul.f32 %v1018, %v1018
    %v1027 = vadd.f32 %v1023, %v1025
    %v1028 = vadd.f32 %v1024, %v1026
    %v1029 = vmul.f32 %v1019, %v1019
    %v1030 = vmul.f32 %v1020, %v1020
    %v1031 = vadd.f32 %v1027, %v1029
    %v1032 = vadd.f32 %v1028, %v1030
    %v1033 = vmul.f32 %v1021, %v1021
    %v1034 = vmul.f32 %v1022, %v1022
    %v1035 = vadd.f32 %v1031, %v1033
    %v1036 = vadd.f32 %v1032, %v1034
    %v1037 = vsel %vm1005, %v1035, 0.0
    %1038 = vadd.xlane.f32.xlu0 %v1037
    %v1039 = vpop.xlane.xlu0 %1038
    %v1040 = vsel %vm1005, %v1036, 0.0
    %1041 = vadd.xlane.f32.xlu0 %v1040
    %v1042 = vpop.xlane.xlu0 %1041
    %v1043 = vmul.f32 %v1039, %v1012
    %v1044 = vmul.f32 %v1042, %v1012
    %v1045 = vadd.f32 %v1043, 1e-05
    %v1046 = vadd.f32 %v1044, 1e-05
    %v1047 = vrsqrt.pop %v1045
    %v1048 = vrsqrt.pop %v1046
    %v1049 = vmul.f32 %v648, %v1047
    %v1050 = vmul.f32 %v649, %v1048
    %1052 = vset.pattern.permute.xlu0 0
    %1053 = vperm.xlu0 %1052, %v1049
    %v1054 = vpop.permute.xlu0 %1053
    %1057 = vset.pattern.permute.xlu0 0
    %1058 = vperm.xlu0 %1057, %v1050
    %v1059 = vpop.permute.xlu0 %1058
    %v1061 = vmul.f32 %v1015, %v1054
    %v1062 = vmul.f32 %v1016, %v1059
    %1064 = vset.pattern.permute.xlu0 0
    %1065 = vperm.xlu0 %1064, %v651
    %v1066 = vpop.permute.xlu0 %1065
    %1069 = vset.pattern.permute.xlu0 0
    %1070 = vperm.xlu0 %1069, %v652
    %v1071 = vpop.permute.xlu0 %1070
    %v1073 = vadd.f32 %v1061, %v1066
    %v1074 = vadd.f32 %v1062, %v1071
    %v1075 = vmax.f32 %v1073, 0.0
    %v1076 = vmax.f32 %v1074, 0.0
    %v1077 = vmul.f32 %v1017, %v1054
    %v1078 = vmul.f32 %v1018, %v1059
    %v1079 = vadd.f32 %v1077, %v1066
    %v1080 = vadd.f32 %v1078, %v1071
    %v1081 = vmax.f32 %v1079, 0.0
    %v1082 = vmax.f32 %v1080, 0.0
    %v1083 = vmul.f32 %v1019, %v1054
    %v1084 = vmul.f32 %v1020, %v1059
    %v1085 = vadd.f32 %v1083, %v1066
    %v1086 = vadd.f32 %v1084, %v1071
    %v1087 = vmax.f32 %v1085, 0.0
    %v1088 = vmax.f32 %v1086, 0.0
    %v1089 = vmul.f32 %v1021, %v1054
    %v1090 = vmul.f32 %v1022, %v1059
    %v1091 = vadd.f32 %v1089, %v1066
    %v1092 = vadd.f32 %v1090, %v1071
    %v1093 = vmax.f32 %v1091, 0.0
    %v1094 = vmax.f32 %v1092, 0.0
    %1097 = vrot.lane.b32.xlu0 %v1081, 8
    %v1098 = vpop.permute.xlu0 %1097
    %1099 = vrot.lane.b32.xlu0 %v1082, 8
    %v1100 = vpop.permute.xlu0 %1099
    %1105 = vrot.lane.b32.xlu0 %v1087, 16
    %v1106 = vpop.permute.xlu0 %1105
    %1107 = vrot.lane.b32.xlu0 %v1088, 16
    %v1108 = vpop.permute.xlu0 %1107
    %1113 = vrot.lane.b32.xlu0 %v1093, 24
    %v1114 = vpop.permute.xlu0 %1113
    %1115 = vrot.lane.b32.xlu0 %v1094, 24
    %v1116 = vpop.permute.xlu0 %1115
    %v1119 = vsel %vm1005, %v1075, %v1098
    %v1120 = vsel %vm1005, %v1076, %v1100
    %v1121 = vsel %vm87, %v1119, %v1106
    %v1122 = vsel %vm87, %v1120, %v1108
    %vm1123 = vcmask 195584
    %v1124 = vsel %vm1123, %v1121, %v1114
    %v1125 = vsel %vm1123, %v1122, %v1116
    %v1126 = vld [vmem:[%s6] sm:$0xff]
    %s1127 = scalar_lea.vmem %s6, 8
    %v1128 = vld [vmem:[%s1127] sm:$0xff]
    %s1129 = scalar_lea.vmem %s6, 16
    %v1130 = vld [vmem:[%s1129] sm:$0xff]
    %v1131 = vld [vmem:[%s5] sm:$0xff]
    %1133 = vset.pattern.permute.xlu0 0
    %1134 = vperm.xlu0 %1133, %v1126
    %v1135 = vpop.permute.xlu0 %1134
    %v1138 = vsel %vm87, %v1131, 0
    %1140 = vmatprep.subr.mxu0 0.0
    %1141 = vmatpush1.msra.mxu0 %v1124
    %1142 = vmatprep.subr.mxu0 0.0
    %1143 = vmatpush1.msra.mxu0 %v1125
    %1144 = vmatprep.subr.mxu0 0.0
    %1145 = vmatpush1.msra.mxu0 0.0
    %1146 = vmatprep.subr.mxu0 0.0
    %1147 = vmatpush1.msra.mxu0 0.0
    %1148 = vmatprep.subr.mxu0 0.0
    %1149 = vmatpush1.msra.mxu0 0.0
    %1150 = vmatprep.subr.mxu0 0.0
    %1151 = vmatpush1.msra.mxu0 0.0
    %1152 = vmatprep.subr.mxu0 0.0
    %1153 = vmatpush1.msra.mxu0 0.0
    %1154 = vmatprep.subr.mxu0 0.0
    %1155 = vmatpush1.msra.mxu0 0.0
    %1156 = vmatprep.subr.mxu0 0.0
    %1157 = vmatpush1.msra.mxu0 0.0
    %1158 = vmatprep.subr.mxu0 0.0
    %1159 = vmatpush1.msra.mxu0 0.0
    %1160 = vmatprep.subr.mxu0 0.0
    %1161 = vmatpush1.msra.mxu0 0.0
    %1162 = vmatprep.subr.mxu0 0.0
    %1163 = vmatpush1.msra.mxu0 0.0
    %1164 = vmatprep.subr.mxu0 0.0
    %1165 = vmatpush1.msra.mxu0 0.0
    %1166 = vmatprep.subr.mxu0 0.0
    %1167 = vmatpush1.msra.mxu0 0.0
    %1168 = vmatprep.subr.mxu0 0.0
    %1169 = vmatpush1.msra.mxu0 0.0
    %1170 = vmatprep.subr.mxu0 0.0
    %1171 = vmatpush1.msra.mxu0 0.0
    %1172 = vmatprep.subr.mxu0 0.0
    %1173 = vmatpush1.msra.mxu0 0.0
    %1174 = vmatprep.subr.mxu0 0.0
    %1175 = vmatpush1.msra.mxu0 0.0
    %1176 = vmatprep.subr.mxu0 0.0
    %1177 = vmatpush1.msra.mxu0 0.0
    %1178 = vmatprep.subr.mxu0 0.0
    %1179 = vmatpush1.msra.mxu0 0.0
    %1180 = vmatprep.subr.mxu0 0.0
    %1181 = vmatpush1.msra.mxu0 0.0
    %1182 = vmatprep.subr.mxu0 0.0
    %1183 = vmatpush1.msra.mxu0 0.0
    %1184 = vmatprep.subr.mxu0 0.0
    %1185 = vmatpush1.msra.mxu0 0.0
    %1186 = vmatprep.subr.mxu0 0.0
    %1187 = vmatpush1.msra.mxu0 0.0
    %1188 = vmatprep.subr.mxu0 0.0
    %1189 = vmatpush1.msra.mxu0 0.0
    %1190 = vmatprep.subr.mxu0 0.0
    %1191 = vmatpush1.msra.mxu0 0.0
    %1192 = vmatprep.subr.mxu0 0.0
    %1193 = vmatpush1.msra.mxu0 0.0
    %1194 = vmatprep.subr.mxu0 0.0
    %1195 = vmatpush1.msra.mxu0 0.0
    %1196 = vmatprep.subr.mxu0 0.0
    %1197 = vmatpush1.msra.mxu0 0.0
    %1198 = vmatprep.subr.mxu0 0.0
    %1199 = vmatpush1.msra.mxu0 0.0
    %1200 = vmatprep.subr.mxu0 0.0
    %1201 = vmatpush1.msra.mxu0 0.0
    %1202 = vmatprep.subr.mxu0 0.0
    %1203 = vmatpush1.msra.mxu0 0.0
    %1204 = vmatprep.mubr.f32.mxu0 0.0
    %1205 = vmatmul.mubr.f32.gmra.mrb[0].mxu0 %v1138
    %v1206 = vpop.f32.mrb[0].mxu0
    %v1207 = vadd.f32 %v1135, %v1206
    %v1208 = vpop.f32.mrb[0].mxu0
    %1209 = vdwg.mxu0
    %s1210 = scalar_lea.vmem %s5, 8
    %v1211 = vld [vmem:[%s1210] sm:$0xff]
    %v1213 = vsel %vm87, %v1211, 0
    %1215 = vmatprep.subr.mxu0 0.0
    %1216 = vmatpush1.msra.mxu0 %v1124
    %1217 = vmatprep.subr.mxu0 0.0
    %1218 = vmatpush1.msra.mxu0 %v1125
    %1219 = vmatprep.subr.mxu0 0.0
    %1220 = vmatpush1.msra.mxu0 0.0
    %1221 = vmatprep.subr.mxu0 0.0
    %1222 = vmatpush1.msra.mxu0 0.0
    %1223 = vmatprep.subr.mxu0 0.0
    %1224 = vmatpush1.msra.mxu0 0.0
    %1225 = vmatprep.subr.mxu0 0.0
    %1226 = vmatpush1.msra.mxu0 0.0
    %1227 = vmatprep.subr.mxu0 0.0
    %1228 = vmatpush1.msra.mxu0 0.0
    %1229 = vmatprep.subr.mxu0 0.0
    %1230 = vmatpush1.msra.mxu0 0.0
    %1231 = vmatprep.subr.mxu0 0.0
    %1232 = vmatpush1.msra.mxu0 0.0
    %1233 = vmatprep.subr.mxu0 0.0
    %1234 = vmatpush1.msra.mxu0 0.0
    %1235 = vmatprep.subr.mxu0 0.0
    %1236 = vmatpush1.msra.mxu0 0.0
    %1237 = vmatprep.subr.mxu0 0.0
    %1238 = vmatpush1.msra.mxu0 0.0
    %1239 = vmatprep.subr.mxu0 0.0
    %1240 = vmatpush1.msra.mxu0 0.0
    %1241 = vmatprep.subr.mxu0 0.0
    %1242 = vmatpush1.msra.mxu0 0.0
    %1243 = vmatprep.subr.mxu0 0.0
    %1244 = vmatpush1.msra.mxu0 0.0
    %1245 = vmatprep.subr.mxu0 0.0
    %1246 = vmatpush1.msra.mxu0 0.0
    %1247 = vmatprep.subr.mxu0 0.0
    %1248 = vmatpush1.msra.mxu0 0.0
    %1249 = vmatprep.subr.mxu0 0.0
    %1250 = vmatpush1.msra.mxu0 0.0
    %1251 = vmatprep.subr.mxu0 0.0
    %1252 = vmatpush1.msra.mxu0 0.0
    %1253 = vmatprep.subr.mxu0 0.0
    %1254 = vmatpush1.msra.mxu0 0.0
    %1255 = vmatprep.subr.mxu0 0.0
    %1256 = vmatpush1.msra.mxu0 0.0
    %1257 = vmatprep.subr.mxu0 0.0
    %1258 = vmatpush1.msra.mxu0 0.0
    %1259 = vmatprep.subr.mxu0 0.0
    %1260 = vmatpush1.msra.mxu0 0.0
    %1261 = vmatprep.subr.mxu0 0.0
    %1262 = vmatpush1.msra.mxu0 0.0
    %1263 = vmatprep.subr.mxu0 0.0
    %1264 = vmatpush1.msra.mxu0 0.0
    %1265 = vmatprep.subr.mxu0 0.0
    %1266 = vmatpush1.msra.mxu0 0.0
    %1267 = vmatprep.subr.mxu0 0.0
    %1268 = vmatpush1.msra.mxu0 0.0
    %1269 = vmatprep.subr.mxu0 0.0
    %1270 = vmatpush1.msra.mxu0 0.0
    %1271 = vmatprep.subr.mxu0 0.0
    %1272 = vmatpush1.msra.mxu0 0.0
    %1273 = vmatprep.subr.mxu0 0.0
    %1274 = vmatpush1.msra.mxu0 0.0
    %1275 = vmatprep.subr.mxu0 0.0
    %1276 = vmatpush1.msra.mxu0 0.0
    %1277 = vmatprep.subr.mxu0 0.0
    %1278 = vmatpush1.msra.mxu0 0.0
    %1279 = vmatprep.mubr.f32.mxu0 0.0
    %1280 = vmatmul.mubr.f32.gmra.mrb[0].mxu0 %v1213
    %v1281 = vpop.f32.mrb[0].mxu0
    %v1282 = vadd.f32 %v1135, %v1281
    %v1283 = vpop.f32.mrb[0].mxu0
    %1284 = vdwg.mxu0
    %s1285 = scalar_lea.vmem %s5, 16
    %v1286 = vld [vmem:[%s1285] sm:$0xff]
    %v1288 = vsel %vm87, %v1286, 0
    %1290 = vmatprep.subr.mxu0 0.0
    %1291 = vmatpush1.msra.mxu0 %v1124
    %1292 = vmatprep.subr.mxu0 0.0
    %1293 = vmatpush1.msra.mxu0 %v1125
    %1294 = vmatprep.subr.mxu0 0.0
    %1295 = vmatpush1.msra.mxu0 0.0
    %1296 = vmatprep.subr.mxu0 0.0
    %1297 = vmatpush1.msra.mxu0 0.0
    %1298 = vmatprep.subr.mxu0 0.0
    %1299 = vmatpush1.msra.mxu0 0.0
    %1300 = vmatprep.subr.mxu0 0.0
    %1301 = vmatpush1.msra.mxu0 0.0
    %1302 = vmatprep.subr.mxu0 0.0
    %1303 = vmatpush1.msra.mxu0 0.0
    %1304 = vmatprep.subr.mxu0 0.0
    %1305 = vmatpush1.msra.mxu0 0.0
    %1306 = vmatprep.subr.mxu0 0.0
    %1307 = vmatpush1.msra.mxu0 0.0
    %1308 = vmatprep.subr.mxu0 0.0
    %1309 = vmatpush1.msra.mxu0 0.0
    %1310 = vmatprep.subr.mxu0 0.0
    %1311 = vmatpush1.msra.mxu0 0.0
    %1312 = vmatprep.subr.mxu0 0.0
    %1313 = vmatpush1.msra.mxu0 0.0
    %1314 = vmatprep.subr.mxu0 0.0
    %1315 = vmatpush1.msra.mxu0 0.0
    %1316 = vmatprep.subr.mxu0 0.0
    %1317 = vmatpush1.msra.mxu0 0.0
    %1318 = vmatprep.subr.mxu0 0.0
    %1319 = vmatpush1.msra.mxu0 0.0
    %1320 = vmatprep.subr.mxu0 0.0
    %1321 = vmatpush1.msra.mxu0 0.0
    %1322 = vmatprep.subr.mxu0 0.0
    %1323 = vmatpush1.msra.mxu0 0.0
    %1324 = vmatprep.subr.mxu0 0.0
    %1325 = vmatpush1.msra.mxu0 0.0
    %1326 = vmatprep.subr.mxu0 0.0
    %1327 = vmatpush1.msra.mxu0 0.0
    %1328 = vmatprep.subr.mxu0 0.0
    %1329 = vmatpush1.msra.mxu0 0.0
    %1330 = vmatprep.subr.mxu0 0.0
    %1331 = vmatpush1.msra.mxu0 0.0
    %1332 = vmatprep.subr.mxu0 0.0
    %1333 = vmatpush1.msra.mxu0 0.0
    %1334 = vmatprep.subr.mxu0 0.0
    %1335 = vmatpush1.msra.mxu0 0.0
    %1336 = vmatprep.subr.mxu0 0.0
    %1337 = vmatpush1.msra.mxu0 0.0
    %1338 = vmatprep.subr.mxu0 0.0
    %1339 = vmatpush1.msra.mxu0 0.0
    %1340 = vmatprep.subr.mxu0 0.0
    %1341 = vmatpush1.msra.mxu0 0.0
    %1342 = vmatprep.subr.mxu0 0.0
    %1343 = vmatpush1.msra.mxu0 0.0
    %1344 = vmatprep.subr.mxu0 0.0
    %1345 = vmatpush1.msra.mxu0 0.0
    %1346 = vmatprep.subr.mxu0 0.0
    %1347 = vmatpush1.msra.mxu0 0.0
    %1348 = vmatprep.subr.mxu0 0.0
    %1349 = vmatpush1.msra.mxu0 0.0
    %1350 = vmatprep.subr.mxu0 0.0
    %1351 = vmatpush1.msra.mxu0 0.0
    %1352 = vmatprep.subr.mxu0 0.0
    %1353 = vmatpush1.msra.mxu0 0.0
    %1354 = vmatprep.mubr.f32.mxu0 0.0
    %1355 = vmatmul.mubr.f32.gmra.mrb[0].mxu0 %v1288
    %v1356 = vpop.f32.mrb[0].mxu0
    %v1357 = vadd.f32 %v1135, %v1356
    %v1358 = vpop.f32.mrb[0].mxu0
    %1359 = vdwg.mxu0
    %s1360 = scalar_lea.vmem %s5, 24
    %v1361 = vld [vmem:[%s1360] sm:$0xff]
    %v1363 = vsel %vm87, %v1361, 0
    %1365 = vmatprep.subr.mxu0 0.0
    %1366 = vmatpush1.msra.mxu0 %v1124
    %1367 = vmatprep.subr.mxu0 0.0
    %1368 = vmatpush1.msra.mxu0 %v1125
    %1369 = vmatprep.subr.mxu0 0.0
    %1370 = vmatpush1.msra.mxu0 0.0
    %1371 = vmatprep.subr.mxu0 0.0
    %1372 = vmatpush1.msra.mxu0 0.0
    %1373 = vmatprep.subr.mxu0 0.0
    %1374 = vmatpush1.msra.mxu0 0.0
    %1375 = vmatprep.subr.mxu0 0.0
    %1376 = vmatpush1.msra.mxu0 0.0
    %1377 = vmatprep.subr.mxu0 0.0
    %1378 = vmatpush1.msra.mxu0 0.0
    %1379 = vmatprep.subr.mxu0 0.0
    %1380 = vmatpush1.msra.mxu0 0.0
    %1381 = vmatprep.subr.mxu0 0.0
    %1382 = vmatpush1.msra.mxu0 0.0
    %1383 = vmatprep.subr.mxu0 0.0
    %1384 = vmatpush1.msra.mxu0 0.0
    %1385 = vmatprep.subr.mxu0 0.0
    %1386 = vmatpush1.msra.mxu0 0.0
    %1387 = vmatprep.subr.mxu0 0.0
    %1388 = vmatpush1.msra.mxu0 0.0
    %1389 = vmatprep.subr.mxu0 0.0
    %1390 = vmatpush1.msra.mxu0 0.0
    %1391 = vmatprep.subr.mxu0 0.0
    %1392 = vmatpush1.msra.mxu0 0.0
    %1393 = vmatprep.subr.mxu0 0.0
    %1394 = vmatpush1.msra.mxu0 0.0
    %1395 = vmatprep.subr.mxu0 0.0
    %1396 = vmatpush1.msra.mxu0 0.0
    %1397 = vmatprep.subr.mxu0 0.0
    %1398 = vmatpush1.msra.mxu0 0.0
    %1399 = vmatprep.subr.mxu0 0.0
    %1400 = vmatpush1.msra.mxu0 0.0
    %1401 = vmatprep.subr.mxu0 0.0
    %1402 = vmatpush1.msra.mxu0 0.0
    %1403 = vmatprep.subr.mxu0 0.0
    %1404 = vmatpush1.msra.mxu0 0.0
    %1405 = vmatprep.subr.mxu0 0.0
    %1406 = vmatpush1.msra.mxu0 0.0
    %1407 = vmatprep.subr.mxu0 0.0
    %1408 = vmatpush1.msra.mxu0 0.0
    %1409 = vmatprep.subr.mxu0 0.0
    %1410 = vmatpush1.msra.mxu0 0.0
    %1411 = vmatprep.subr.mxu0 0.0
    %1412 = vmatpush1.msra.mxu0 0.0
    %1413 = vmatprep.subr.mxu0 0.0
    %1414 = vmatpush1.msra.mxu0 0.0
    %1415 = vmatprep.subr.mxu0 0.0
    %1416 = vmatpush1.msra.mxu0 0.0
    %1417 = vmatprep.subr.mxu0 0.0
    %1418 = vmatpush1.msra.mxu0 0.0
    %1419 = vmatprep.subr.mxu0 0.0
    %1420 = vmatpush1.msra.mxu0 0.0
    %1421 = vmatprep.subr.mxu0 0.0
    %1422 = vmatpush1.msra.mxu0 0.0
    %1423 = vmatprep.subr.mxu0 0.0
    %1424 = vmatpush1.msra.mxu0 0.0
    %1425 = vmatprep.subr.mxu0 0.0
    %1426 = vmatpush1.msra.mxu0 0.0
    %1427 = vmatprep.subr.mxu0 0.0
    %1428 = vmatpush1.msra.mxu0 0.0
    %1429 = vmatprep.mubr.f32.mxu0 0.0
    %1430 = vmatmul.mubr.f32.gmra.mrb[0].mxu0 %v1363
    %v1431 = vpop.f32.mrb[0].mxu0
    %v1432 = vadd.f32 %v1135, %v1431
    %v1433 = vpop.f32.mrb[0].mxu0
    %1434 = vdwg.mxu0
    %v1435 = vadd.f32 %v1207, %v1282
    %v1436 = vadd.f32 %v1435, %v1357
    %v1437 = vadd.f32 %v1436, %v1432
    %v1438 = vsel %vm665, %v1437, 0.0
    %1439 = vadd.xlane.f32.xlu0 %v1438
    %v1440 = vpop.xlane.xlu0 %1439
    %v1441 = vrcp.pop 128.0
    %v1442 = vmul.f32 %v1440, %v1441
    %v1443 = vsub.f32 %v1207, %v1442
    %v1444 = vsub.f32 %v1282, %v1442
    %v1445 = vsub.f32 %v1357, %v1442
    %v1446 = vsub.f32 %v1432, %v1442
    %v1447 = vmul.f32 %v1443, %v1443
    %v1448 = vmul.f32 %v1444, %v1444
    %v1449 = vadd.f32 %v1447, %v1448
    %v1450 = vmul.f32 %v1445, %v1445
    %v1451 = vadd.f32 %v1449, %v1450
    %v1452 = vmul.f32 %v1446, %v1446
    %v1453 = vadd.f32 %v1451, %v1452
    %v1454 = vsel %vm665, %v1453, 0.0
    %1455 = vadd.xlane.f32.xlu0 %v1454
    %v1456 = vpop.xlane.xlu0 %1455
    %v1457 = vmul.f32 %v1456, %v1441
    %v1458 = vadd.f32 %v1457, 1e-05
    %v1459 = vrsqrt.pop %v1458
    %v1460 = vmul.f32 %v1128, %v1459
    %1462 = vset.pattern.permute.xlu0 0
    %1463 = vperm.xlu0 %1462, %v1460
    %v1464 = vpop.permute.xlu0 %1463
    %v1466 = vmul.f32 %v1443, %v1464
    %1468 = vset.pattern.permute.xlu0 0
    %1469 = vperm.xlu0 %1468, %v1130
    %v1470 = vpop.permute.xlu0 %1469
    %v1472 = vadd.f32 %v1466, %v1470
    %v1473 = vmax.f32 %v1472, 0.0
    %v1474 = vmul.f32 %v1444, %v1464
    %v1475 = vadd.f32 %v1474, %v1470
    %v1476 = vmax.f32 %v1475, 0.0
    %v1477 = vmul.f32 %v1445, %v1464
    %v1478 = vadd.f32 %v1477, %v1470
    %v1479 = vmax.f32 %v1478, 0.0
    %v1480 = vmul.f32 %v1446, %v1464
    %v1481 = vadd.f32 %v1480, %v1470
    %v1482 = vmax.f32 %v1481, 0.0
    %1484 = vrot.lane.b32.xlu0 %v1476, 32
    %v1485 = vpop.permute.xlu0 %1484
    %1488 = vrot.lane.b32.xlu0 %v1479, 64
    %v1489 = vpop.permute.xlu0 %1488
    %1492 = vrot.lane.b32.xlu0 %v1482, 96
    %v1493 = vpop.permute.xlu0 %1492
    %v1495 = vsel %vm665, %v1473, %v1485
    %vm1496 = vcmask 523264
    %v1497 = vsel %vm1496, %v1495, %v1489
    %vm1498 = vcmask 785408
    %v1499 = vsel %vm1498, %v1497, %v1493
    %v1500 = vld [vmem:[%s8] sm:$0xf]
    %s1501 = scalar_lea.vmem %s8, 4
    %v1502 = vld [vmem:[%s1501] sm:$0xf]
    %s1503 = scalar_lea.vmem %s8, 8
    %v1504 = vld [vmem:[%s1503] sm:$0xf]
    %v1505 = vld [vmem:[%s7] sm:$0xf]
    %1507 = vset.pattern.permute.xlu0 0
    %1508 = vperm.xlu0 %1507, %v1500
    %v1509 = vpop.permute.xlu0 %1508
    %v1512 = vsel %vm1005, %v1505, 0
    %1514 = vmatprep.subr.mxu0 0.0
    %1515 = vmatpush1.msra.mxu0 %v1499
    %1516 = vmatprep.subr.mxu0 0.0
    %1517 = vmatpush1.msra.mxu0 0.0
    %1518 = vmatprep.subr.mxu0 0.0
    %1519 = vmatpush1.msra.mxu0 0.0
    %1520 = vmatprep.subr.mxu0 0.0
    %1521 = vmatpush1.msra.mxu0 0.0
    %1522 = vmatprep.subr.mxu0 0.0
    %1523 = vmatpush1.msra.mxu0 0.0
    %1524 = vmatprep.subr.mxu0 0.0
    %1525 = vmatpush1.msra.mxu0 0.0
    %1526 = vmatprep.subr.mxu0 0.0
    %1527 = vmatpush1.msra.mxu0 0.0
    %1528 = vmatprep.subr.mxu0 0.0
    %1529 = vmatpush1.msra.mxu0 0.0
    %1530 = vmatprep.subr.mxu0 0.0
    %1531 = vmatpush1.msra.mxu0 0.0
    %1532 = vmatprep.subr.mxu0 0.0
    %1533 = vmatpush1.msra.mxu0 0.0
    %1534 = vmatprep.subr.mxu0 0.0
    %1535 = vmatpush1.msra.mxu0 0.0
    %1536 = vmatprep.subr.mxu0 0.0
    %1537 = vmatpush1.msra.mxu0 0.0
    %1538 = vmatprep.subr.mxu0 0.0
    %1539 = vmatpush1.msra.mxu0 0.0
    %1540 = vmatprep.subr.mxu0 0.0
    %1541 = vmatpush1.msra.mxu0 0.0
    %1542 = vmatprep.subr.mxu0 0.0
    %1543 = vmatpush1.msra.mxu0 0.0
    %1544 = vmatprep.subr.mxu0 0.0
    %1545 = vmatpush1.msra.mxu0 0.0
    %1546 = vmatprep.subr.mxu0 0.0
    %1547 = vmatpush1.msra.mxu0 0.0
    %1548 = vmatprep.subr.mxu0 0.0
    %1549 = vmatpush1.msra.mxu0 0.0
    %1550 = vmatprep.subr.mxu0 0.0
    %1551 = vmatpush1.msra.mxu0 0.0
    %1552 = vmatprep.subr.mxu0 0.0
    %1553 = vmatpush1.msra.mxu0 0.0
    %1554 = vmatprep.subr.mxu0 0.0
    %1555 = vmatpush1.msra.mxu0 0.0
    %1556 = vmatprep.subr.mxu0 0.0
    %1557 = vmatpush1.msra.mxu0 0.0
    %1558 = vmatprep.subr.mxu0 0.0
    %1559 = vmatpush1.msra.mxu0 0.0
    %1560 = vmatprep.subr.mxu0 0.0
    %1561 = vmatpush1.msra.mxu0 0.0
    %1562 = vmatprep.subr.mxu0 0.0
    %1563 = vmatpush1.msra.mxu0 0.0
    %1564 = vmatprep.subr.mxu0 0.0
    %1565 = vmatpush1.msra.mxu0 0.0
    %1566 = vmatprep.subr.mxu0 0.0
    %1567 = vmatpush1.msra.mxu0 0.0
    %1568 = vmatprep.subr.mxu0 0.0
    %1569 = vmatpush1.msra.mxu0 0.0
    %1570 = vmatprep.subr.mxu0 0.0
    %1571 = vmatpush1.msra.mxu0 0.0
    %1572 = vmatprep.subr.mxu0 0.0
    %1573 = vmatpush1.msra.mxu0 0.0
    %1574 = vmatprep.subr.mxu0 0.0
    %1575 = vmatpush1.msra.mxu0 0.0
    %1576 = vmatprep.subr.mxu0 0.0
    %1577 = vmatpush1.msra.mxu0 0.0
    %1578 = vmatprep.mubr.f32.mxu0 0.0
    %1579 = vmatmul.mubr.f32.gmra.mrb[0].mxu0 %v1512
    %v1580 = vpop.f32.mrb[0].mxu0
    %v1581 = vadd.f32 %v1509, %v1580
    %v1582 = vpop.f32.mrb[0].mxu0
    %1583 = vdwg.mxu0
    %s1584 = scalar_lea.vmem %s7, 4
    %v1585 = vld [vmem:[%s1584] sm:$0xf]
    %v1587 = vsel %vm1005, %v1585, 0
    %1589 = vmatprep.subr.mxu0 0.0
    %1590 = vmatpush1.msra.mxu0 %v1499
    %1591 = vmatprep.subr.mxu0 0.0
    %1592 = vmatpush1.msra.mxu0 0.0
    %1593 = vmatprep.subr.mxu0 0.0
    %1594 = vmatpush1.msra.mxu0 0.0
    %1595 = vmatprep.subr.mxu0 0.0
    %1596 = vmatpush1.msra.mxu0 0.0
    %1597 = vmatprep.subr.mxu0 0.0
    %1598 = vmatpush1.msra.mxu0 0.0
    %1599 = vmatprep.subr.mxu0 0.0
    %1600 = vmatpush1.msra.mxu0 0.0
    %1601 = vmatprep.subr.mxu0 0.0
    %1602 = vmatpush1.msra.mxu0 0.0
    %1603 = vmatprep.subr.mxu0 0.0
    %1604 = vmatpush1.msra.mxu0 0.0
    %1605 = vmatprep.subr.mxu0 0.0
    %1606 = vmatpush1.msra.mxu0 0.0
    %1607 = vmatprep.subr.mxu0 0.0
    %1608 = vmatpush1.msra.mxu0 0.0
    %1609 = vmatprep.subr.mxu0 0.0
    %1610 = vmatpush1.msra.mxu0 0.0
    %1611 = vmatprep.subr.mxu0 0.0
    %1612 = vmatpush1.msra.mxu0 0.0
    %1613 = vmatprep.subr.mxu0 0.0
    %1614 = vmatpush1.msra.mxu0 0.0
    %1615 = vmatprep.subr.mxu0 0.0
    %1616 = vmatpush1.msra.mxu0 0.0
    %1617 = vmatprep.subr.mxu0 0.0
    %1618 = vmatpush1.msra.mxu0 0.0
    %1619 = vmatprep.subr.mxu0 0.0
    %1620 = vmatpush1.msra.mxu0 0.0
    %1621 = vmatprep.subr.mxu0 0.0
    %1622 = vmatpush1.msra.mxu0 0.0
    %1623 = vmatprep.subr.mxu0 0.0
    %1624 = vmatpush1.msra.mxu0 0.0
    %1625 = vmatprep.subr.mxu0 0.0
    %1626 = vmatpush1.msra.mxu0 0.0
    %1627 = vmatprep.subr.mxu0 0.0
    %1628 = vmatpush1.msra.mxu0 0.0
    %1629 = vmatprep.subr.mxu0 0.0
    %1630 = vmatpush1.msra.mxu0 0.0
    %1631 = vmatprep.subr.mxu0 0.0
    %1632 = vmatpush1.msra.mxu0 0.0
    %1633 = vmatprep.subr.mxu0 0.0
    %1634 = vmatpush1.msra.mxu0 0.0
    %1635 = vmatprep.subr.mxu0 0.0
    %1636 = vmatpush1.msra.mxu0 0.0
    %1637 = vmatprep.subr.mxu0 0.0
    %1638 = vmatpush1.msra.mxu0 0.0
    %1639 = vmatprep.subr.mxu0 0.0
    %1640 = vmatpush1.msra.mxu0 0.0
    %1641 = vmatprep.subr.mxu0 0.0
    %1642 = vmatpush1.msra.mxu0 0.0
    %1643 = vmatprep.subr.mxu0 0.0
    %1644 = vmatpush1.msra.mxu0 0.0
    %1645 = vmatprep.subr.mxu0 0.0
    %1646 = vmatpush1.msra.mxu0 0.0
    %1647 = vmatprep.subr.mxu0 0.0
    %1648 = vmatpush1.msra.mxu0 0.0
    %1649 = vmatprep.subr.mxu0 0.0
    %1650 = vmatpush1.msra.mxu0 0.0
    %1651 = vmatprep.subr.mxu0 0.0
    %1652 = vmatpush1.msra.mxu0 0.0
    %1653 = vmatprep.mubr.f32.mxu0 0.0
    %1654 = vmatmul.mubr.f32.gmra.mrb[0].mxu0 %v1587
    %v1655 = vpop.f32.mrb[0].mxu0
    %v1656 = vadd.f32 %v1509, %v1655
    %v1657 = vpop.f32.mrb[0].mxu0
    %1658 = vdwg.mxu0
    %s1659 = scalar_lea.vmem %s7, 8
    %v1660 = vld [vmem:[%s1659] sm:$0xf]
    %v1662 = vsel %vm1005, %v1660, 0
    %1664 = vmatprep.subr.mxu0 0.0
    %1665 = vmatpush1.msra.mxu0 %v1499
    %1666 = vmatprep.subr.mxu0 0.0
    %1667 = vmatpush1.msra.mxu0 0.0
    %1668 = vmatprep.subr.mxu0 0.0
    %1669 = vmatpush1.msra.mxu0 0.0
    %1670 = vmatprep.subr.mxu0 0.0
    %1671 = vmatpush1.msra.mxu0 0.0
    %1672 = vmatprep.subr.mxu0 0.0
    %1673 = vmatpush1.msra.mxu0 0.0
    %1674 = vmatprep.subr.mxu0 0.0
    %1675 = vmatpush1.msra.mxu0 0.0
    %1676 = vmatprep.subr.mxu0 0.0
    %1677 = vmatpush1.msra.mxu0 0.0
    %1678 = vmatprep.subr.mxu0 0.0
    %1679 = vmatpush1.msra.mxu0 0.0
    %1680 = vmatprep.subr.mxu0 0.0
    %1681 = vmatpush1.msra.mxu0 0.0
    %1682 = vmatprep.subr.mxu0 0.0
    %1683 = vmatpush1.msra.mxu0 0.0
    %1684 = vmatprep.subr.mxu0 0.0
    %1685 = vmatpush1.msra.mxu0 0.0
    %1686 = vmatprep.subr.mxu0 0.0
    %1687 = vmatpush1.msra.mxu0 0.0
    %1688 = vmatprep.subr.mxu0 0.0
    %1689 = vmatpush1.msra.mxu0 0.0
    %1690 = vmatprep.subr.mxu0 0.0
    %1691 = vmatpush1.msra.mxu0 0.0
    %1692 = vmatprep.subr.mxu0 0.0
    %1693 = vmatpush1.msra.mxu0 0.0
    %1694 = vmatprep.subr.mxu0 0.0
    %1695 = vmatpush1.msra.mxu0 0.0
    %1696 = vmatprep.subr.mxu0 0.0
    %1697 = vmatpush1.msra.mxu0 0.0
    %1698 = vmatprep.subr.mxu0 0.0
    %1699 = vmatpush1.msra.mxu0 0.0
    %1700 = vmatprep.subr.mxu0 0.0
    %1701 = vmatpush1.msra.mxu0 0.0
    %1702 = vmatprep.subr.mxu0 0.0
    %1703 = vmatpush1.msra.mxu0 0.0
    %1704 = vmatprep.subr.mxu0 0.0
    %1705 = vmatpush1.msra.mxu0 0.0
    %1706 = vmatprep.subr.mxu0 0.0
    %1707 = vmatpush1.msra.mxu0 0.0
    %1708 = vmatprep.subr.mxu0 0.0
    %1709 = vmatpush1.msra.mxu0 0.0
    %1710 = vmatprep.subr.mxu0 0.0
    %1711 = vmatpush1.msra.mxu0 0.0
    %1712 = vmatprep.subr.mxu0 0.0
    %1713 = vmatpush1.msra.mxu0 0.0
    %1714 = vmatprep.subr.mxu0 0.0
    %1715 = vmatpush1.msra.mxu0 0.0
    %1716 = vmatprep.subr.mxu0 0.0
    %1717 = vmatpush1.msra.mxu0 0.0
    %1718 = vmatprep.subr.mxu0 0.0
    %1719 = vmatpush1.msra.mxu0 0.0
    %1720 = vmatprep.subr.mxu0 0.0
    %1721 = vmatpush1.msra.mxu0 0.0
    %1722 = vmatprep.subr.mxu0 0.0
    %1723 = vmatpush1.msra.mxu0 0.0
    %1724 = vmatprep.subr.mxu0 0.0
    %1725 = vmatpush1.msra.mxu0 0.0
    %1726 = vmatprep.subr.mxu0 0.0
    %1727 = vmatpush1.msra.mxu0 0.0
    %1728 = vmatprep.mubr.f32.mxu0 0.0
    %1729 = vmatmul.mubr.f32.gmra.mrb[0].mxu0 %v1662
    %v1730 = vpop.f32.mrb[0].mxu0
    %v1731 = vadd.f32 %v1509, %v1730
    %v1732 = vpop.f32.mrb[0].mxu0
    %1733 = vdwg.mxu0
    %s1734 = scalar_lea.vmem %s7, 12
    %v1735 = vld [vmem:[%s1734] sm:$0xf]
    %v1737 = vsel %vm1005, %v1735, 0
    %1739 = vmatprep.subr.mxu0 0.0
    %1740 = vmatpush1.msra.mxu0 %v1499
    %1741 = vmatprep.subr.mxu0 0.0
    %1742 = vmatpush1.msra.mxu0 0.0
    %1743 = vmatprep.subr.mxu0 0.0
    %1744 = vmatpush1.msra.mxu0 0.0
    %1745 = vmatprep.subr.mxu0 0.0
    %1746 = vmatpush1.msra.mxu0 0.0
    %1747 = vmatprep.subr.mxu0 0.0
    %1748 = vmatpush1.msra.mxu0 0.0
    %1749 = vmatprep.subr.mxu0 0.0
    %1750 = vmatpush1.msra.mxu0 0.0
    %1751 = vmatprep.subr.mxu0 0.0
    %1752 = vmatpush1.msra.mxu0 0.0
    %1753 = vmatprep.subr.mxu0 0.0
    %1754 = vmatpush1.msra.mxu0 0.0
    %1755 = vmatprep.subr.mxu0 0.0
    %1756 = vmatpush1.msra.mxu0 0.0
    %1757 = vmatprep.subr.mxu0 0.0
    %1758 = vmatpush1.msra.mxu0 0.0
    %1759 = vmatprep.subr.mxu0 0.0
    %1760 = vmatpush1.msra.mxu0 0.0
    %1761 = vmatprep.subr.mxu0 0.0
    %1762 = vmatpush1.msra.mxu0 0.0
    %1763 = vmatprep.subr.mxu0 0.0
    %1764 = vmatpush1.msra.mxu0 0.0
    %1765 = vmatprep.subr.mxu0 0.0
    %1766 = vmatpush1.msra.mxu0 0.0
    %1767 = vmatprep.subr.mxu0 0.0
    %1768 = vmatpush1.msra.mxu0 0.0
    %1769 = vmatprep.subr.mxu0 0.0
    %1770 = vmatpush1.msra.mxu0 0.0
    %1771 = vmatprep.subr.mxu0 0.0
    %1772 = vmatpush1.msra.mxu0 0.0
    %1773 = vmatprep.subr.mxu0 0.0
    %1774 = vmatpush1.msra.mxu0 0.0
    %1775 = vmatprep.subr.mxu0 0.0
    %1776 = vmatpush1.msra.mxu0 0.0
    %1777 = vmatprep.subr.mxu0 0.0
    %1778 = vmatpush1.msra.mxu0 0.0
    %1779 = vmatprep.subr.mxu0 0.0
    %1780 = vmatpush1.msra.mxu0 0.0
    %1781 = vmatprep.subr.mxu0 0.0
    %1782 = vmatpush1.msra.mxu0 0.0
    %1783 = vmatprep.subr.mxu0 0.0
    %1784 = vmatpush1.msra.mxu0 0.0
    %1785 = vmatprep.subr.mxu0 0.0
    %1786 = vmatpush1.msra.mxu0 0.0
    %1787 = vmatprep.subr.mxu0 0.0
    %1788 = vmatpush1.msra.mxu0 0.0
    %1789 = vmatprep.subr.mxu0 0.0
    %1790 = vmatpush1.msra.mxu0 0.0
    %1791 = vmatprep.subr.mxu0 0.0
    %1792 = vmatpush1.msra.mxu0 0.0
    %1793 = vmatprep.subr.mxu0 0.0
    %1794 = vmatpush1.msra.mxu0 0.0
    %1795 = vmatprep.subr.mxu0 0.0
    %1796 = vmatpush1.msra.mxu0 0.0
    %1797 = vmatprep.subr.mxu0 0.0
    %1798 = vmatpush1.msra.mxu0 0.0
    %1799 = vmatprep.subr.mxu0 0.0
    %1800 = vmatpush1.msra.mxu0 0.0
    %1801 = vmatprep.subr.mxu0 0.0
    %1802 = vmatpush1.msra.mxu0 0.0
    %1803 = vmatprep.mubr.f32.mxu0 0.0
    %1804 = vmatmul.mubr.f32.gmra.mrb[0].mxu0 %v1737
    %v1805 = vpop.f32.mrb[0].mxu0
    %v1806 = vadd.f32 %v1509, %v1805
    %v1807 = vpop.f32.mrb[0].mxu0
    %1808 = vdwg.mxu0
    %v1809 = vadd.f32 %v1581, %v1656
    %v1810 = vadd.f32 %v1809, %v1731
    %v1811 = vadd.f32 %v1810, %v1806
    %vm1812 = vcmask 1043456
    %v1813 = vsel %vm1812, %v1811, 0.0
    %1814 = vadd.xlane.f32.xlu0 %v1813
    %v1815 = vpop.xlane.xlu0 %1814
    %v1816 = vrcp.pop 512.0
    %v1817 = vmul.f32 %v1815, %v1816
    %v1818 = vsub.f32 %v1581, %v1817
    %v1819 = vsub.f32 %v1656, %v1817
    %v1820 = vsub.f32 %v1731, %v1817
    %v1821 = vsub.f32 %v1806, %v1817
    %v1822 = vmul.f32 %v1818, %v1818
    %v1823 = vmul.f32 %v1819, %v1819
    %v1824 = vadd.f32 %v1822, %v1823
    %v1825 = vmul.f32 %v1820, %v1820
    %v1826 = vadd.f32 %v1824, %v1825
    %v1827 = vmul.f32 %v1821, %v1821
    %v1828 = vadd.f32 %v1826, %v1827
    %v1829 = vsel %vm1812, %v1828, 0.0
    %1830 = vadd.xlane.f32.xlu0 %v1829
    %v1831 = vpop.xlane.xlu0 %1830
    %v1832 = vmul.f32 %v1831, %v1816
    %v1833 = vadd.f32 %v1832, 1e-05
    %v1834 = vrsqrt.pop %v1833
    %v1835 = vmul.f32 %v1502, %v1834
    %1837 = vset.pattern.permute.xlu0 0
    %1838 = vperm.xlu0 %1837, %v1835
    %v1839 = vpop.permute.xlu0 %1838
    %v1841 = vmul.f32 %v1818, %v1839
    %1843 = vset.pattern.permute.xlu0 0
    %1844 = vperm.xlu0 %1843, %v1504
    %v1845 = vpop.permute.xlu0 %1844
    %v1847 = vadd.f32 %v1841, %v1845
    %v1848 = vmax.f32 %v1847, 0.0
    %v1849 = vmul.f32 %v1819, %v1839
    %v1850 = vadd.f32 %v1849, %v1845
    %v1851 = vmax.f32 %v1850, 0.0
    %v1852 = vmul.f32 %v1820, %v1839
    %v1853 = vadd.f32 %v1852, %v1845
    %v1854 = vmax.f32 %v1853, 0.0
    %v1855 = vmul.f32 %v1821, %v1839
    %v1856 = vadd.f32 %v1855, %v1845
    %v1857 = vmax.f32 %v1856, 0.0
    %v1858 = vld [vmem:[%s10] sm:$0x3]
    %s1859 = scalar_lea.vmem %s10, 2
    %v1860 = vld [vmem:[%s1859] sm:$0x3]
    %s1861 = scalar_lea.vmem %s10, 4
    %v1862 = vld [vmem:[%s1861] sm:$0x3]
    %v1863 = vld [vmem:[%s9] sm:$0x3]
    %1865 = vset.pattern.permute.xlu0 0
    %1866 = vperm.xlu0 %1865, %v1858
    %v1867 = vpop.permute.xlu0 %1866
    %v1870 = vsel %vm635, %v1863, 0
    %v1873 = vsel %vm1812, %v1848, 0
    %v1876 = vsel %vm1812, %v1851, 0
    %v1879 = vsel %vm1812, %v1854, 0
    %v1882 = vsel %vm1812, %v1857, 0
    %1884 = vmatprep.subr.mxu0 %v1876
    %1885 = vmatpush1.msra.mxu0 %v1873
    %1886 = vmatprep.subr.mxu0 0.0
    %1887 = vmatpush1.msra.mxu0 0.0
    %1888 = vmatprep.subr.mxu0 0.0
    %1889 = vmatpush1.msra.mxu0 0.0
    %1890 = vmatprep.subr.mxu0 0.0
    %1891 = vmatpush1.msra.mxu0 0.0
    %1892 = vmatprep.subr.mxu0 0.0
    %1893 = vmatpush1.msra.mxu0 0.0
    %1894 = vmatprep.subr.mxu0 0.0
    %1895 = vmatpush1.msra.mxu0 0.0
    %1896 = vmatprep.subr.mxu0 0.0
    %1897 = vmatpush1.msra.mxu0 0.0
    %1898 = vmatprep.subr.mxu0 0.0
    %1899 = vmatpush1.msra.mxu0 0.0
    %1900 = vmatprep.subr.mxu0 0.0
    %1901 = vmatpush1.msra.mxu0 0.0
    %1902 = vmatprep.subr.mxu0 0.0
    %1903 = vmatpush1.msra.mxu0 0.0
    %1904 = vmatprep.subr.mxu0 0.0
    %1905 = vmatpush1.msra.mxu0 0.0
    %1906 = vmatprep.subr.mxu0 0.0
    %1907 = vmatpush1.msra.mxu0 0.0
    %1908 = vmatprep.subr.mxu0 0.0
    %1909 = vmatpush1.msra.mxu0 0.0
    %1910 = vmatprep.subr.mxu0 0.0
    %1911 = vmatpush1.msra.mxu0 0.0
    %1912 = vmatprep.subr.mxu0 0.0
    %1913 = vmatpush1.msra.mxu0 0.0
    %1914 = vmatprep.subr.mxu0 0.0
    %1915 = vmatpush1.msra.mxu0 0.0
    %1916 = vmatprep.subr.mxu0 0.0
    %1917 = vmatpush1.msra.mxu0 0.0
    %1918 = vmatprep.subr.mxu0 0.0
    %1919 = vmatpush1.msra.mxu0 0.0
    %1920 = vmatprep.subr.mxu0 0.0
    %1921 = vmatpush1.msra.mxu0 0.0
    %1922 = vmatprep.subr.mxu0 0.0
    %1923 = vmatpush1.msra.mxu0 0.0
    %1924 = vmatprep.subr.mxu0 0.0
    %1925 = vmatpush1.msra.mxu0 0.0
    %1926 = vmatprep.subr.mxu0 0.0
    %1927 = vmatpush1.msra.mxu0 0.0
    %1928 = vmatprep.subr.mxu0 0.0
    %1929 = vmatpush1.msra.mxu0 0.0
    %1930 = vmatprep.subr.mxu0 0.0
    %1931 = vmatpush1.msra.mxu0 0.0
    %1932 = vmatprep.subr.mxu0 0.0
    %1933 = vmatpush1.msra.mxu0 0.0
    %1934 = vmatprep.subr.mxu0 0.0
    %1935 = vmatpush1.msra.mxu0 0.0
    %1936 = vmatprep.subr.mxu0 0.0
    %1937 = vmatpush1.msra.mxu0 0.0
    %1938 = vmatprep.subr.mxu0 0.0
    %1939 = vmatpush1.msra.mxu0 0.0
    %1940 = vmatprep.subr.mxu0 0.0
    %1941 = vmatpush1.msra.mxu0 0.0
    %1942 = vmatprep.subr.mxu0 0.0
    %1943 = vmatpush1.msra.mxu0 0.0
    %1944 = vmatprep.subr.mxu0 0.0
    %1945 = vmatpush1.msra.mxu0 0.0
    %1946 = vmatprep.subr.mxu0 0.0
    %1947 = vmatpush1.msra.mxu0 0.0
    %1948 = vmatprep.mubr.f32.mxu0 0.0
    %1949 = vmatmul.mubr.f32.gmra.mrb[0].mxu0 %v1870
    %v1950 = vpop.f32.mrb[0].mxu0
    %v1951 = vadd.f32 %v1867, %v1950
    %v1952 = vpop.f32.mrb[0].mxu0
    %v1953 = vadd.f32 %v1867, %v1952
    %1954 = vdwg.mxu0
    %1955 = vmatprep.subr.mxu0 %v1882
    %1956 = vmatpush1.msra.mxu0 %v1879
    %1957 = vmatprep.subr.mxu0 0.0
    %1958 = vmatpush1.msra.mxu0 0.0
    %1959 = vmatprep.subr.mxu0 0.0
    %1960 = vmatpush1.msra.mxu0 0.0
    %1961 = vmatprep.subr.mxu0 0.0
    %1962 = vmatpush1.msra.mxu0 0.0
    %1963 = vmatprep.subr.mxu0 0.0
    %1964 = vmatpush1.msra.mxu0 0.0
    %1965 = vmatprep.subr.mxu0 0.0
    %1966 = vmatpush1.msra.mxu0 0.0
    %1967 = vmatprep.subr.mxu0 0.0
    %1968 = vmatpush1.msra.mxu0 0.0
    %1969 = vmatprep.subr.mxu0 0.0
    %1970 = vmatpush1.msra.mxu0 0.0
    %1971 = vmatprep.subr.mxu0 0.0
    %1972 = vmatpush1.msra.mxu0 0.0
    %1973 = vmatprep.subr.mxu0 0.0
    %1974 = vmatpush1.msra.mxu0 0.0
    %1975 = vmatprep.subr.mxu0 0.0
    %1976 = vmatpush1.msra.mxu0 0.0
    %1977 = vmatprep.subr.mxu0 0.0
    %1978 = vmatpush1.msra.mxu0 0.0
    %1979 = vmatprep.subr.mxu0 0.0
    %1980 = vmatpush1.msra.mxu0 0.0
    %1981 = vmatprep.subr.mxu0 0.0
    %1982 = vmatpush1.msra.mxu0 0.0
    %1983 = vmatprep.subr.mxu0 0.0
    %1984 = vmatpush1.msra.mxu0 0.0
    %1985 = vmatprep.subr.mxu0 0.0
    %1986 = vmatpush1.msra.mxu0 0.0
    %1987 = vmatprep.subr.mxu0 0.0
    %1988 = vmatpush1.msra.mxu0 0.0
    %1989 = vmatprep.subr.mxu0 0.0
    %1990 = vmatpush1.msra.mxu0 0.0
    %1991 = vmatprep.subr.mxu0 0.0
    %1992 = vmatpush1.msra.mxu0 0.0
    %1993 = vmatprep.subr.mxu0 0.0
    %1994 = vmatpush1.msra.mxu0 0.0
    %1995 = vmatprep.subr.mxu0 0.0
    %1996 = vmatpush1.msra.mxu0 0.0
    %1997 = vmatprep.subr.mxu0 0.0
    %1998 = vmatpush1.msra.mxu0 0.0
    %1999 = vmatprep.subr.mxu0 0.0
    %2000 = vmatpush1.msra.mxu0 0.0
    %2001 = vmatprep.subr.mxu0 0.0
    %2002 = vmatpush1.msra.mxu0 0.0
    %2003 = vmatprep.subr.mxu0 0.0
    %2004 = vmatpush1.msra.mxu0 0.0
    %2005 = vmatprep.subr.mxu0 0.0
    %2006 = vmatpush1.msra.mxu0 0.0
    %2007 = vmatprep.subr.mxu0 0.0
    %2008 = vmatpush1.msra.mxu0 0.0
    %2009 = vmatprep.subr.mxu0 0.0
    %2010 = vmatpush1.msra.mxu0 0.0
    %2011 = vmatprep.subr.mxu0 0.0
    %2012 = vmatpush1.msra.mxu0 0.0
    %2013 = vmatprep.subr.mxu0 0.0
    %2014 = vmatpush1.msra.mxu0 0.0
    %2015 = vmatprep.subr.mxu0 0.0
    %2016 = vmatpush1.msra.mxu0 0.0
    %2017 = vmatprep.subr.mxu0 0.0
    %2018 = vmatpush1.msra.mxu0 0.0
    %2019 = vmatprep.mubr.f32.mxu0 0.0
    %2020 = vmatmul.mubr.f32.gmra.mrb[0].mxu0 %v1870
    %v2021 = vpop.f32.mrb[0].mxu0
    %v2022 = vadd.f32 %v1867, %v2021
    %v2023 = vpop.f32.mrb[0].mxu0
    %v2024 = vadd.f32 %v1867, %v2023
    %2025 = vdwg.mxu0
    %s2026 = scalar_lea.vmem %s9, 2
    %v2027 = vld [vmem:[%s2026] sm:$0x3]
    %v2029 = vsel %vm635, %v2027, 0
    %2031 = vmatprep.subr.mxu0 %v1876
    %2032 = vmatpush1.msra.mxu0 %v1873
    %2033 = vmatprep.subr.mxu0 0.0
    %2034 = vmatpush1.msra.mxu0 0.0
    %2035 = vmatprep.subr.mxu0 0.0
    %2036 = vmatpush1.msra.mxu0 0.0
    %2037 = vmatprep.subr.mxu0 0.0
    %2038 = vmatpush1.msra.mxu0 0.0
    %2039 = vmatprep.subr.mxu0 0.0
    %2040 = vmatpush1.msra.mxu0 0.0
    %2041 = vmatprep.subr.mxu0 0.0
    %2042 = vmatpush1.msra.mxu0 0.0
    %2043 = vmatprep.subr.mxu0 0.0
    %2044 = vmatpush1.msra.mxu0 0.0
    %2045 = vmatprep.subr.mxu0 0.0
    %2046 = vmatpush1.msra.mxu0 0.0
    %2047 = vmatprep.subr.mxu0 0.0
    %2048 = vmatpush1.msra.mxu0 0.0
    %2049 = vmatprep.subr.mxu0 0.0
    %2050 = vmatpush1.msra.mxu0 0.0
    %2051 = vmatprep.subr.mxu0 0.0
    %2052 = vmatpush1.msra.mxu0 0.0
    %2053 = vmatprep.subr.mxu0 0.0
    %2054 = vmatpush1.msra.mxu0 0.0
    %2055 = vmatprep.subr.mxu0 0.0
    %2056 = vmatpush1.msra.mxu0 0.0
    %2057 = vmatprep.subr.mxu0 0.0
    %2058 = vmatpush1.msra.mxu0 0.0
    %2059 = vmatprep.subr.mxu0 0.0
    %2060 = vmatpush1.msra.mxu0 0.0
    %2061 = vmatprep.subr.mxu0 0.0
    %2062 = vmatpush1.msra.mxu0 0.0
    %2063 = vmatprep.subr.mxu0 0.0
    %2064 = vmatpush1.msra.mxu0 0.0
    %2065 = vmatprep.subr.mxu0 0.0
    %2066 = vmatpush1.msra.mxu0 0.0
    %2067 = vmatprep.subr.mxu0 0.0
    %2068 = vmatpush1.msra.mxu0 0.0
    %2069 = vmatprep.subr.mxu0 0.0
    %2070 = vmatpush1.msra.mxu0 0.0
    %2071 = vmatprep.subr.mxu0 0.0
    %2072 = vmatpush1.msra.mxu0 0.0
    %2073 = vmatprep.subr.mxu0 0.0
    %2074 = vmatpush1.msra.mxu0 0.0
    %2075 = vmatprep.subr.mxu0 0.0
    %2076 = vmatpush1.msra.mxu0 0.0
    %2077 = vmatprep.subr.mxu0 0.0
    %2078 = vmatpush1.msra.mxu0 0.0
    %2079 = vmatprep.subr.mxu0 0.0
    %2080 = vmatpush1.msra.mxu0 0.0
    %2081 = vmatprep.subr.mxu0 0.0
    %2082 = vmatpush1.msra.mxu0 0.0
    %2083 = vmatprep.subr.mxu0 0.0
    %2084 = vmatpush1.msra.mxu0 0.0
    %2085 = vmatprep.subr.mxu0 0.0
    %2086 = vmatpush1.msra.mxu0 0.0
    %2087 = vmatprep.subr.mxu0 0.0
    %2088 = vmatpush1.msra.mxu0 0.0
    %2089 = vmatprep.subr.mxu0 0.0
    %2090 = vmatpush1.msra.mxu0 0.0
    %2091 = vmatprep.subr.mxu0 0.0
    %2092 = vmatpush1.msra.mxu0 0.0
    %2093 = vmatprep.subr.mxu0 0.0
    %2094 = vmatpush1.msra.mxu0 0.0
    %2095 = vmatprep.mubr.f32.mxu0 0.0
    %2096 = vmatmul.mubr.f32.gmra.mrb[0].mxu0 %v2029
    %v2097 = vpop.f32.mrb[0].mxu0
    %v2098 = vadd.f32 %v1867, %v2097
    %v2099 = vpop.f32.mrb[0].mxu0
    %v2100 = vadd.f32 %v1867, %v2099
    %2101 = vdwg.mxu0
    %2102 = vmatprep.subr.mxu0 %v1882
    %2103 = vmatpush1.msra.mxu0 %v1879
    %2104 = vmatprep.subr.mxu0 0.0
    %2105 = vmatpush1.msra.mxu0 0.0
    %2106 = vmatprep.subr.mxu0 0.0
    %2107 = vmatpush1.msra.mxu0 0.0
    %2108 = vmatprep.subr.mxu0 0.0
    %2109 = vmatpush1.msra.mxu0 0.0
    %2110 = vmatprep.subr.mxu0 0.0
    %2111 = vmatpush1.msra.mxu0 0.0
    %2112 = vmatprep.subr.mxu0 0.0
    %2113 = vmatpush1.msra.mxu0 0.0
    %2114 = vmatprep.subr.mxu0 0.0
    %2115 = vmatpush1.msra.mxu0 0.0
    %2116 = vmatprep.subr.mxu0 0.0
    %2117 = vmatpush1.msra.mxu0 0.0
    %2118 = vmatprep.subr.mxu0 0.0
    %2119 = vmatpush1.msra.mxu0 0.0
    %2120 = vmatprep.subr.mxu0 0.0
    %2121 = vmatpush1.msra.mxu0 0.0
    %2122 = vmatprep.subr.mxu0 0.0
    %2123 = vmatpush1.msra.mxu0 0.0
    %2124 = vmatprep.subr.mxu0 0.0
    %2125 = vmatpush1.msra.mxu0 0.0
    %2126 = vmatprep.subr.mxu0 0.0
    %2127 = vmatpush1.msra.mxu0 0.0
    %2128 = vmatprep.subr.mxu0 0.0
    %2129 = vmatpush1.msra.mxu0 0.0
    %2130 = vmatprep.subr.mxu0 0.0
    %2131 = vmatpush1.msra.mxu0 0.0
    %2132 = vmatprep.subr.mxu0 0.0
    %2133 = vmatpush1.msra.mxu0 0.0
    %2134 = vmatprep.subr.mxu0 0.0
    %2135 = vmatpush1.msra.mxu0 0.0
    %2136 = vmatprep.subr.mxu0 0.0
    %2137 = vmatpush1.msra.mxu0 0.0
    %2138 = vmatprep.subr.mxu0 0.0
    %2139 = vmatpush1.msra.mxu0 0.0
    %2140 = vmatprep.subr.mxu0 0.0
    %2141 = vmatpush1.msra.mxu0 0.0
    %2142 = vmatprep.subr.mxu0 0.0
    %2143 = vmatpush1.msra.mxu0 0.0
    %2144 = vmatprep.subr.mxu0 0.0
    %2145 = vmatpush1.msra.mxu0 0.0
    %2146 = vmatprep.subr.mxu0 0.0
    %2147 = vmatpush1.msra.mxu0 0.0
    %2148 = vmatprep.subr.mxu0 0.0
    %2149 = vmatpush1.msra.mxu0 0.0
    %2150 = vmatprep.subr.mxu0 0.0
    %2151 = vmatpush1.msra.mxu0 0.0
    %2152 = vmatprep.subr.mxu0 0.0
    %2153 = vmatpush1.msra.mxu0 0.0
    %2154 = vmatprep.subr.mxu0 0.0
    %2155 = vmatpush1.msra.mxu0 0.0
    %2156 = vmatprep.subr.mxu0 0.0
    %2157 = vmatpush1.msra.mxu0 0.0
    %2158 = vmatprep.subr.mxu0 0.0
    %2159 = vmatpush1.msra.mxu0 0.0
    %2160 = vmatprep.subr.mxu0 0.0
    %2161 = vmatpush1.msra.mxu0 0.0
    %2162 = vmatprep.subr.mxu0 0.0
    %2163 = vmatpush1.msra.mxu0 0.0
    %2164 = vmatprep.subr.mxu0 0.0
    %2165 = vmatpush1.msra.mxu0 0.0
    %2166 = vmatprep.mubr.f32.mxu0 0.0
    %2167 = vmatmul.mubr.f32.gmra.mrb[0].mxu0 %v2029
    %v2168 = vpop.f32.mrb[0].mxu0
    %v2169 = vadd.f32 %v1867, %v2168
    %v2170 = vpop.f32.mrb[0].mxu0
    %v2171 = vadd.f32 %v1867, %v2170
    %2172 = vdwg.mxu0
    %s2173 = scalar_lea.vmem %s9, 4
    %v2174 = vld [vmem:[%s2173] sm:$0x3]
    %v2176 = vsel %vm635, %v2174, 0
    %2178 = vmatprep.subr.mxu0 %v1876
    %2179 = vmatpush1.msra.mxu0 %v1873
    %2180 = vmatprep.subr.mxu0 0.0
    %2181 = vmatpush1.msra.mxu0 0.0
    %2182 = vmatprep.subr.mxu0 0.0
    %2183 = vmatpush1.msra.mxu0 0.0
    %2184 = vmatprep.subr.mxu0 0.0
    %2185 = vmatpush1.msra.mxu0 0.0
    %2186 = vmatprep.subr.mxu0 0.0
    %2187 = vmatpush1.msra.mxu0 0.0
    %2188 = vmatprep.subr.mxu0 0.0
    %2189 = vmatpush1.msra.mxu0 0.0
    %2190 = vmatprep.subr.mxu0 0.0
    %2191 = vmatpush1.msra.mxu0 0.0
    %2192 = vmatprep.subr.mxu0 0.0
    %2193 = vmatpush1.msra.mxu0 0.0
    %2194 = vmatprep.subr.mxu0 0.0
    %2195 = vmatpush1.msra.mxu0 0.0
    %2196 = vmatprep.subr.mxu0 0.0
    %2197 = vmatpush1.msra.mxu0 0.0
    %2198 = vmatprep.subr.mxu0 0.0
    %2199 = vmatpush1.msra.mxu0 0.0
    %2200 = vmatprep.subr.mxu0 0.0
    %2201 = vmatpush1.msra.mxu0 0.0
    %2202 = vmatprep.subr.mxu0 0.0
    %2203 = vmatpush1.msra.mxu0 0.0
    %2204 = vmatprep.subr.mxu0 0.0
    %2205 = vmatpush1.msra.mxu0 0.0
    %2206 = vmatprep.subr.mxu0 0.0
    %2207 = vmatpush1.msra.mxu0 0.0
    %2208 = vmatprep.subr.mxu0 0.0
    %2209 = vmatpush1.msra.mxu0 0.0
    %2210 = vmatprep.subr.mxu0 0.0
    %2211 = vmatpush1.msra.mxu0 0.0
    %2212 = vmatprep.subr.mxu0 0.0
    %2213 = vmatpush1.msra.mxu0 0.0
    %2214 = vmatprep.subr.mxu0 0.0
    %2215 = vmatpush1.msra.mxu0 0.0
    %2216 = vmatprep.subr.mxu0 0.0
    %2217 = vmatpush1.msra.mxu0 0.0
    %2218 = vmatprep.subr.mxu0 0.0
    %2219 = vmatpush1.msra.mxu0 0.0
    %2220 = vmatprep.subr.mxu0 0.0
    %2221 = vmatpush1.msra.mxu0 0.0
    %2222 = vmatprep.subr.mxu0 0.0
    %2223 = vmatpush1.msra.mxu0 0.0
    %2224 = vmatprep.subr.mxu0 0.0
    %2225 = vmatpush1.msra.mxu0 0.0
    %2226 = vmatprep.subr.mxu0 0.0
    %2227 = vmatpush1.msra.mxu0 0.0
    %2228 = vmatprep.subr.mxu0 0.0
    %2229 = vmatpush1.msra.mxu0 0.0
    %2230 = vmatprep.subr.mxu0 0.0
    %2231 = vmatpush1.msra.mxu0 0.0
    %2232 = vmatprep.subr.mxu0 0.0
    %2233 = vmatpush1.msra.mxu0 0.0
    %2234 = vmatprep.subr.mxu0 0.0
    %2235 = vmatpush1.msra.mxu0 0.0
    %2236 = vmatprep.subr.mxu0 0.0
    %2237 = vmatpush1.msra.mxu0 0.0
    %2238 = vmatprep.subr.mxu0 0.0
    %2239 = vmatpush1.msra.mxu0 0.0
    %2240 = vmatprep.subr.mxu0 0.0
    %2241 = vmatpush1.msra.mxu0 0.0
    %2242 = vmatprep.mubr.f32.mxu0 0.0
    %2243 = vmatmul.mubr.f32.gmra.mrb[0].mxu0 %v2176
    %v2244 = vpop.f32.mrb[0].mxu0
    %v2245 = vadd.f32 %v1867, %v2244
    %v2246 = vpop.f32.mrb[0].mxu0
    %v2247 = vadd.f32 %v1867, %v2246
    %2248 = vdwg.mxu0
    %2249 = vmatprep.subr.mxu0 %v1882
    %2250 = vmatpush1.msra.mxu0 %v1879
    %2251 = vmatprep.subr.mxu0 0.0
    %2252 = vmatpush1.msra.mxu0 0.0
    %2253 = vmatprep.subr.mxu0 0.0
    %2254 = vmatpush1.msra.mxu0 0.0
    %2255 = vmatprep.subr.mxu0 0.0
    %2256 = vmatpush1.msra.mxu0 0.0
    %2257 = vmatprep.subr.mxu0 0.0
    %2258 = vmatpush1.msra.mxu0 0.0
    %2259 = vmatprep.subr.mxu0 0.0
    %2260 = vmatpush1.msra.mxu0 0.0
    %2261 = vmatprep.subr.mxu0 0.0
    %2262 = vmatpush1.msra.mxu0 0.0
    %2263 = vmatprep.subr.mxu0 0.0
    %2264 = vmatpush1.msra.mxu0 0.0
    %2265 = vmatprep.subr.mxu0 0.0
    %2266 = vmatpush1.msra.mxu0 0.0
    %2267 = vmatprep.subr.mxu0 0.0
    %2268 = vmatpush1.msra.mxu0 0.0
    %2269 = vmatprep.subr.mxu0 0.0
    %2270 = vmatpush1.msra.mxu0 0.0
    %2271 = vmatprep.subr.mxu0 0.0
    %2272 = vmatpush1.msra.mxu0 0.0
    %2273 = vmatprep.subr.mxu0 0.0
    %2274 = vmatpush1.msra.mxu0 0.0
    %2275 = vmatprep.subr.mxu0 0.0
    %2276 = vmatpush1.msra.mxu0 0.0
    %2277 = vmatprep.subr.mxu0 0.0
    %2278 = vmatpush1.msra.mxu0 0.0
    %2279 = vmatprep.subr.mxu0 0.0
    %2280 = vmatpush1.msra.mxu0 0.0
    %2281 = vmatprep.subr.mxu0 0.0
    %2282 = vmatpush1.msra.mxu0 0.0
    %2283 = vmatprep.subr.mxu0 0.0
    %2284 = vmatpush1.msra.mxu0 0.0
    %2285 = vmatprep.subr.mxu0 0.0
    %2286 = vmatpush1.msra.mxu0 0.0
    %2287 = vmatprep.subr.mxu0 0.0
    %2288 = vmatpush1.msra.mxu0 0.0
    %2289 = vmatprep.subr.mxu0 0.0
    %2290 = vmatpush1.msra.mxu0 0.0
    %2291 = vmatprep.subr.mxu0 0.0
    %2292 = vmatpush1.msra.mxu0 0.0
    %2293 = vmatprep.subr.mxu0 0.0
    %2294 = vmatpush1.msra.mxu0 0.0
    %2295 = vmatprep.subr.mxu0 0.0
    %2296 = vmatpush1.msra.mxu0 0.0
    %2297 = vmatprep.subr.mxu0 0.0
    %2298 = vmatpush1.msra.mxu0 0.0
    %2299 = vmatprep.subr.mxu0 0.0
    %2300 = vmatpush1.msra.mxu0 0.0
    %2301 = vmatprep.subr.mxu0 0.0
    %2302 = vmatpush1.msra.mxu0 0.0
    %2303 = vmatprep.subr.mxu0 0.0
    %2304 = vmatpush1.msra.mxu0 0.0
    %2305 = vmatprep.subr.mxu0 0.0
    %2306 = vmatpush1.msra.mxu0 0.0
    %2307 = vmatprep.subr.mxu0 0.0
    %2308 = vmatpush1.msra.mxu0 0.0
    %2309 = vmatprep.subr.mxu0 0.0
    %2310 = vmatpush1.msra.mxu0 0.0
    %2311 = vmatprep.subr.mxu0 0.0
    %2312 = vmatpush1.msra.mxu0 0.0
    %2313 = vmatprep.mubr.f32.mxu0 0.0
    %2314 = vmatmul.mubr.f32.gmra.mrb[0].mxu0 %v2176
    %v2315 = vpop.f32.mrb[0].mxu0
    %v2316 = vadd.f32 %v1867, %v2315
    %v2317 = vpop.f32.mrb[0].mxu0
    %v2318 = vadd.f32 %v1867, %v2317
    %2319 = vdwg.mxu0
    %s2320 = scalar_lea.vmem %s9, 6
    %v2321 = vld [vmem:[%s2320] sm:$0x3]
    %v2323 = vsel %vm635, %v2321, 0
    %2325 = vmatprep.subr.mxu0 %v1876
    %2326 = vmatpush1.msra.mxu0 %v1873
    %2327 = vmatprep.subr.mxu0 0.0
    %2328 = vmatpush1.msra.mxu0 0.0
    %2329 = vmatprep.subr.mxu0 0.0
    %2330 = vmatpush1.msra.mxu0 0.0
    %2331 = vmatprep.subr.mxu0 0.0
    %2332 = vmatpush1.msra.mxu0 0.0
    %2333 = vmatprep.subr.mxu0 0.0
    %2334 = vmatpush1.msra.mxu0 0.0
    %2335 = vmatprep.subr.mxu0 0.0
    %2336 = vmatpush1.msra.mxu0 0.0
    %2337 = vmatprep.subr.mxu0 0.0
    %2338 = vmatpush1.msra.mxu0 0.0
    %2339 = vmatprep.subr.mxu0 0.0
    %2340 = vmatpush1.msra.mxu0 0.0
    %2341 = vmatprep.subr.mxu0 0.0
    %2342 = vmatpush1.msra.mxu0 0.0
    %2343 = vmatprep.subr.mxu0 0.0
    %2344 = vmatpush1.msra.mxu0 0.0
    %2345 = vmatprep.subr.mxu0 0.0
    %2346 = vmatpush1.msra.mxu0 0.0
    %2347 = vmatprep.subr.mxu0 0.0
    %2348 = vmatpush1.msra.mxu0 0.0
    %2349 = vmatprep.subr.mxu0 0.0
    %2350 = vmatpush1.msra.mxu0 0.0
    %2351 = vmatprep.subr.mxu0 0.0
    %2352 = vmatpush1.msra.mxu0 0.0
    %2353 = vmatprep.subr.mxu0 0.0
    %2354 = vmatpush1.msra.mxu0 0.0
    %2355 = vmatprep.subr.mxu0 0.0
    %2356 = vmatpush1.msra.mxu0 0.0
    %2357 = vmatprep.subr.mxu0 0.0
    %2358 = vmatpush1.msra.mxu0 0.0
    %2359 = vmatprep.subr.mxu0 0.0
    %2360 = vmatpush1.msra.mxu0 0.0
    %2361 = vmatprep.subr.mxu0 0.0
    %2362 = vmatpush1.msra.mxu0 0.0
    %2363 = vmatprep.subr.mxu0 0.0
    %2364 = vmatpush1.msra.mxu0 0.0
    %2365 = vmatprep.subr.mxu0 0.0
    %2366 = vmatpush1.msra.mxu0 0.0
    %2367 = vmatprep.subr.mxu0 0.0
    %2368 = vmatpush1.msra.mxu0 0.0
    %2369 = vmatprep.subr.mxu0 0.0
    %2370 = vmatpush1.msra.mxu0 0.0
    %2371 = vmatprep.subr.mxu0 0.0
    %2372 = vmatpush1.msra.mxu0 0.0
    %2373 = vmatprep.subr.mxu0 0.0
    %2374 = vmatpush1.msra.mxu0 0.0
    %2375 = vmatprep.subr.mxu0 0.0
    %2376 = vmatpush1.msra.mxu0 0.0
    %2377 = vmatprep.subr.mxu0 0.0
    %2378 = vmatpush1.msra.mxu0 0.0
    %2379 = vmatprep.subr.mxu0 0.0
    %2380 = vmatpush1.msra.mxu0 0.0
    %2381 = vmatprep.subr.mxu0 0.0
    %2382 = vmatpush1.msra.mxu0 0.0
    %2383 = vmatprep.subr.mxu0 0.0
    %2384 = vmatpush1.msra.mxu0 0.0
    %2385 = vmatprep.subr.mxu0 0.0
    %2386 = vmatpush1.msra.mxu0 0.0
    %2387 = vmatprep.subr.mxu0 0.0
    %2388 = vmatpush1.msra.mxu0 0.0
    %2389 = vmatprep.mubr.f32.mxu0 0.0
    %2390 = vmatmul.mubr.f32.gmra.mrb[0].mxu0 %v2323
    %v2391 = vpop.f32.mrb[0].mxu0
    %v2392 = vadd.f32 %v1867, %v2391
    %v2393 = vpop.f32.mrb[0].mxu0
    %v2394 = vadd.f32 %v1867, %v2393
    %2395 = vdwg.mxu0
    %2396 = vmatprep.subr.mxu0 %v1882
    %2397 = vmatpush1.msra.mxu0 %v1879
    %2398 = vmatprep.subr.mxu0 0.0
    %2399 = vmatpush1.msra.mxu0 0.0
    %2400 = vmatprep.subr.mxu0 0.0
    %2401 = vmatpush1.msra.mxu0 0.0
    %2402 = vmatprep.subr.mxu0 0.0
    %2403 = vmatpush1.msra.mxu0 0.0
    %2404 = vmatprep.subr.mxu0 0.0
    %2405 = vmatpush1.msra.mxu0 0.0
    %2406 = vmatprep.subr.mxu0 0.0
    %2407 = vmatpush1.msra.mxu0 0.0
    %2408 = vmatprep.subr.mxu0 0.0
    %2409 = vmatpush1.msra.mxu0 0.0
    %2410 = vmatprep.subr.mxu0 0.0
    %2411 = vmatpush1.msra.mxu0 0.0
    %2412 = vmatprep.subr.mxu0 0.0
    %2413 = vmatpush1.msra.mxu0 0.0
    %2414 = vmatprep.subr.mxu0 0.0
    %2415 = vmatpush1.msra.mxu0 0.0
    %2416 = vmatprep.subr.mxu0 0.0
    %2417 = vmatpush1.msra.mxu0 0.0
    %2418 = vmatprep.subr.mxu0 0.0
    %2419 = vmatpush1.msra.mxu0 0.0
    %2420 = vmatprep.subr.mxu0 0.0
    %2421 = vmatpush1.msra.mxu0 0.0
    %2422 = vmatprep.subr.mxu0 0.0
    %2423 = vmatpush1.msra.mxu0 0.0
    %2424 = vmatprep.subr.mxu0 0.0
    %2425 = vmatpush1.msra.mxu0 0.0
    %2426 = vmatprep.subr.mxu0 0.0
    %2427 = vmatpush1.msra.mxu0 0.0
    %2428 = vmatprep.subr.mxu0 0.0
    %2429 = vmatpush1.msra.mxu0 0.0
    %2430 = vmatprep.subr.mxu0 0.0
    %2431 = vmatpush1.msra.mxu0 0.0
    %2432 = vmatprep.subr.mxu0 0.0
    %2433 = vmatpush1.msra.mxu0 0.0
    %2434 = vmatprep.subr.mxu0 0.0
    %2435 = vmatpush1.msra.mxu0 0.0
    %2436 = vmatprep.subr.mxu0 0.0
    %2437 = vmatpush1.msra.mxu0 0.0
    %2438 = vmatprep.subr.mxu0 0.0
    %2439 = vmatpush1.msra.mxu0 0.0
    %2440 = vmatprep.subr.mxu0 0.0
    %2441 = vmatpush1.msra.mxu0 0.0
    %2442 = vmatprep.subr.mxu0 0.0
    %2443 = vmatpush1.msra.mxu0 0.0
    %2444 = vmatprep.subr.mxu0 0.0
    %2445 = vmatpush1.msra.mxu0 0.0
    %2446 = vmatprep.subr.mxu0 0.0
    %2447 = vmatpush1.msra.mxu0 0.0
    %2448 = vmatprep.subr.mxu0 0.0
    %2449 = vmatpush1.msra.mxu0 0.0
    %2450 = vmatprep.subr.mxu0 0.0
    %2451 = vmatpush1.msra.mxu0 0.0
    %2452 = vmatprep.subr.mxu0 0.0
    %2453 = vmatpush1.msra.mxu0 0.0
    %2454 = vmatprep.subr.mxu0 0.0
    %2455 = vmatpush1.msra.mxu0 0.0
    %2456 = vmatprep.subr.mxu0 0.0
    %2457 = vmatpush1.msra.mxu0 0.0
    %2458 = vmatprep.subr.mxu0 0.0
    %2459 = vmatpush1.msra.mxu0 0.0
    %2460 = vmatprep.mubr.f32.mxu0 0.0
    %2461 = vmatmul.mubr.f32.gmra.mrb[0].mxu0 %v2323
    %v2462 = vpop.f32.mrb[0].mxu0
    %v2463 = vadd.f32 %v1867, %v2462
    %v2464 = vpop.f32.mrb[0].mxu0
    %v2465 = vadd.f32 %v1867, %v2464
    %2466 = vdwg.mxu0
    %v2467 = vadd.f32 %v1951, %v2098
    %v2468 = vadd.f32 %v1953, %v2100
    %v2469 = vadd.f32 %v2022, %v2169
    %v2470 = vadd.f32 %v2024, %v2171
    %v2471 = vadd.f32 %v2467, %v2245
    %v2472 = vadd.f32 %v2468, %v2247
    %v2473 = vadd.f32 %v2469, %v2316
    %v2474 = vadd.f32 %v2470, %v2318
    %v2475 = vadd.f32 %v2471, %v2392
    %v2476 = vadd.f32 %v2472, %v2394
    %v2477 = vadd.f32 %v2473, %v2463
    %v2478 = vadd.f32 %v2474, %v2465
    %vm2479 = vcmask 1041408
    %v2480 = vsel %vm2479, %v2475, 0.0
    %v2481 = vsel %vm2479, %v2476, 0.0
    %v2482 = vadd.f32 %v2480, %v2481
    %v2483 = vsel %vm2479, %v2477, 0.0
    %v2484 = vadd.f32 %v2482, %v2483
    %v2485 = vsel %vm2479, %v2478, 0.0
    %v2486 = vadd.f32 %v2484, %v2485
    %2487 = vadd.xlane.f32.xlu0 %v2486
    %v2488 = vpop.xlane.xlu0 %2487
    %v2489 = vrcp.pop 2048.0
    %v2490 = vmul.f32 %v2488, %v2489
    %v2491 = vsub.f32 %v1951, %v2490
    %v2492 = vsub.f32 %v1953, %v2490
    %v2493 = vsub.f32 %v2022, %v2490
    %v2494 = vsub.f32 %v2024, %v2490
    %v2495 = vsub.f32 %v2098, %v2490
    %v2496 = vsub.f32 %v2100, %v2490
    %v2497 = vsub.f32 %v2169, %v2490
    %v2498 = vsub.f32 %v2171, %v2490
    %v2499 = vsub.f32 %v2245, %v2490
    %v2500 = vsub.f32 %v2247, %v2490
    %v2501 = vsub.f32 %v2316, %v2490
    %v2502 = vsub.f32 %v2318, %v2490
    %v2503 = vsub.f32 %v2392, %v2490
    %v2504 = vsub.f32 %v2394, %v2490
    %v2505 = vsub.f32 %v2463, %v2490
    %v2506 = vsub.f32 %v2465, %v2490
    %v2507 = vmul.f32 %v2491, %v2491
    %v2508 = vmul.f32 %v2492, %v2492
    %v2509 = vmul.f32 %v2493, %v2493
    %v2510 = vmul.f32 %v2494, %v2494
    %v2511 = vmul.f32 %v2495, %v2495
    %v2512 = vmul.f32 %v2496, %v2496
    %v2513 = vmul.f32 %v2497, %v2497
    %v2514 = vmul.f32 %v2498, %v2498
    %v2515 = vadd.f32 %v2507, %v2511
    %v2516 = vadd.f32 %v2508, %v2512
    %v2517 = vadd.f32 %v2509, %v2513
    %v2518 = vadd.f32 %v2510, %v2514
    %v2519 = vmul.f32 %v2499, %v2499
    %v2520 = vmul.f32 %v2500, %v2500
    %v2521 = vmul.f32 %v2501, %v2501
    %v2522 = vmul.f32 %v2502, %v2502
    %v2523 = vadd.f32 %v2515, %v2519
    %v2524 = vadd.f32 %v2516, %v2520
    %v2525 = vadd.f32 %v2517, %v2521
    %v2526 = vadd.f32 %v2518, %v2522
    %v2527 = vmul.f32 %v2503, %v2503
    %v2528 = vmul.f32 %v2504, %v2504
    %v2529 = vmul.f32 %v2505, %v2505
    %v2530 = vmul.f32 %v2506, %v2506
    %v2531 = vadd.f32 %v2523, %v2527
    %v2532 = vadd.f32 %v2524, %v2528
    %v2533 = vadd.f32 %v2525, %v2529
    %v2534 = vadd.f32 %v2526, %v2530
    %v2535 = vsel %vm2479, %v2531, 0.0
    %v2536 = vsel %vm2479, %v2532, 0.0
    %v2537 = vadd.f32 %v2535, %v2536
    %v2538 = vsel %vm2479, %v2533, 0.0
    %v2539 = vadd.f32 %v2537, %v2538
    %v2540 = vsel %vm2479, %v2534, 0.0
    %v2541 = vadd.f32 %v2539, %v2540
    %2542 = vadd.xlane.f32.xlu0 %v2541
    %v2543 = vpop.xlane.xlu0 %2542
    %v2544 = vmul.f32 %v2543, %v2489
    %v2545 = vadd.f32 %v2544, 1e-05
    %v2546 = vrsqrt.pop %v2545
    %v2547 = vmul.f32 %v1860, %v2546
    %2549 = vset.pattern.permute.xlu0 0
    %2550 = vperm.xlu0 %2549, %v2547
    %v2551 = vpop.permute.xlu0 %2550
    %v2553 = vmul.f32 %v2491, %v2551
    %v2554 = vmul.f32 %v2492, %v2551
    %v2555 = vmul.f32 %v2493, %v2551
    %v2556 = vmul.f32 %v2494, %v2551
    %2558 = vset.pattern.permute.xlu0 0
    %2559 = vperm.xlu0 %2558, %v1862
    %v2560 = vpop.permute.xlu0 %2559
    %v2562 = vadd.f32 %v2553, %v2560
    %v2563 = vadd.f32 %v2554, %v2560
    %v2564 = vadd.f32 %v2555, %v2560
    %v2565 = vadd.f32 %v2556, %v2560
    %v2566 = vmax.f32 %v2562, 0.0
    %v2567 = vmax.f32 %v2563, 0.0
    %v2568 = vmax.f32 %v2564, 0.0
    %v2569 = vmax.f32 %v2565, 0.0
    %v2570 = vmul.f32 %v2495, %v2551
    %v2571 = vmul.f32 %v2496, %v2551
    %v2572 = vmul.f32 %v2497, %v2551
    %v2573 = vmul.f32 %v2498, %v2551
    %v2574 = vadd.f32 %v2570, %v2560
    %v2575 = vadd.f32 %v2571, %v2560
    %v2576 = vadd.f32 %v2572, %v2560
    %v2577 = vadd.f32 %v2573, %v2560
    %v2578 = vmax.f32 %v2574, 0.0
    %v2579 = vmax.f32 %v2575, 0.0
    %v2580 = vmax.f32 %v2576, 0.0
    %v2581 = vmax.f32 %v2577, 0.0
    %v2582 = vmul.f32 %v2499, %v2551
    %v2583 = vmul.f32 %v2500, %v2551
    %v2584 = vmul.f32 %v2501, %v2551
    %v2585 = vmul.f32 %v2502, %v2551
    %v2586 = vadd.f32 %v2582, %v2560
    %v2587 = vadd.f32 %v2583, %v2560
    %v2588 = vadd.f32 %v2584, %v2560
    %v2589 = vadd.f32 %v2585, %v2560
    %v2590 = vmax.f32 %v2586, 0.0
    %v2591 = vmax.f32 %v2587, 0.0
    %v2592 = vmax.f32 %v2588, 0.0
    %v2593 = vmax.f32 %v2589, 0.0
    %v2594 = vmul.f32 %v2503, %v2551
    %v2595 = vmul.f32 %v2504, %v2551
    %v2596 = vmul.f32 %v2505, %v2551
    %v2597 = vmul.f32 %v2506, %v2551
    %v2598 = vadd.f32 %v2594, %v2560
    %v2599 = vadd.f32 %v2595, %v2560
    %v2600 = vadd.f32 %v2596, %v2560
    %v2601 = vadd.f32 %v2597, %v2560
    %v2602 = vmax.f32 %v2598, 0.0
    %v2603 = vmax.f32 %v2599, 0.0
    %v2604 = vmax.f32 %v2600, 0.0
    %v2605 = vmax.f32 %v2601, 0.0
    %v2606 = vld [vmem:[%s11] sm:$0x3]
    %2608 = vset.pattern.permute.xlu0 0
    %2609 = vperm.xlu0 %2608, %v2606
    %v2610 = vpop.permute.xlu0 %2609
    %v2612 = vmul.f32 %v2566, %v2610
    %v2613 = vmul.f32 %v2567, %v2610
    %v2614 = vmul.f32 %v2568, %v2610
    %v2615 = vmul.f32 %v2569, %v2610
    %v2616 = vmul.f32 %v2578, %v2610
    %v2617 = vmul.f32 %v2579, %v2610
    %v2618 = vmul.f32 %v2580, %v2610
    %v2619 = vmul.f32 %v2581, %v2610
    %v2620 = vmul.f32 %v2590, %v2610
    %v2621 = vmul.f32 %v2591, %v2610
    %v2622 = vmul.f32 %v2592, %v2610
    %v2623 = vmul.f32 %v2593, %v2610
    %v2624 = vmul.f32 %v2602, %v2610
    %v2625 = vmul.f32 %v2603, %v2610
    %v2626 = vmul.f32 %v2604, %v2610
    %v2627 = vmul.f32 %v2605, %v2610
    %v2628 = vsel %vm2479, %v2612, 0.0
    %v2629 = vrot.slane %v2628, 4
    %v2630 = vadd.f32 %v2628, %v2629
    %v2631 = vrot.slane %v2630, 2
    %v2632 = vadd.f32 %v2630, %v2631
    %v2633 = vrot.slane %v2632, 1
    %v2634 = vadd.f32 %v2632, %v2633
    %v2635 = vsel %vm2479, %v2613, 0.0
    %v2636 = vrot.slane %v2635, 4
    %v2637 = vadd.f32 %v2635, %v2636
    %v2638 = vrot.slane %v2637, 2
    %v2639 = vadd.f32 %v2637, %v2638
    %v2640 = vrot.slane %v2639, 1
    %v2641 = vadd.f32 %v2639, %v2640
    %v2642 = vsel %vm2479, %v2614, 0.0
    %v2643 = vrot.slane %v2642, 4
    %v2644 = vadd.f32 %v2642, %v2643
    %v2645 = vrot.slane %v2644, 2
    %v2646 = vadd.f32 %v2644, %v2645
    %v2647 = vrot.slane %v2646, 1
    %v2648 = vadd.f32 %v2646, %v2647
    %v2649 = vsel %vm2479, %v2615, 0.0
    %v2650 = vrot.slane %v2649, 4
    %v2651 = vadd.f32 %v2649, %v2650
    %v2652 = vrot.slane %v2651, 2
    %v2653 = vadd.f32 %v2651, %v2652
    %v2654 = vrot.slane %v2653, 1
    %v2655 = vadd.f32 %v2653, %v2654
    %v2656 = vsel %vm2479, %v2616, 0.0
    %v2657 = vrot.slane %v2656, 4
    %v2658 = vadd.f32 %v2656, %v2657
    %v2659 = vrot.slane %v2658, 2
    %v2660 = vadd.f32 %v2658, %v2659
    %v2661 = vrot.slane %v2660, 1
    %v2662 = vadd.f32 %v2660, %v2661
    %v2663 = vsel %vm2479, %v2617, 0.0
    %v2664 = vrot.slane %v2663, 4
    %v2665 = vadd.f32 %v2663, %v2664
    %v2666 = vrot.slane %v2665, 2
    %v2667 = vadd.f32 %v2665, %v2666
    %v2668 = vrot.slane %v2667, 1
    %v2669 = vadd.f32 %v2667, %v2668
    %v2670 = vsel %vm2479, %v2618, 0.0
    %v2671 = vrot.slane %v2670, 4
    %v2672 = vadd.f32 %v2670, %v2671
    %v2673 = vrot.slane %v2672, 2
    %v2674 = vadd.f32 %v2672, %v2673
    %v2675 = vrot.slane %v2674, 1
    %v2676 = vadd.f32 %v2674, %v2675
    %v2677 = vsel %vm2479, %v2619, 0.0
    %v2678 = vrot.slane %v2677, 4
    %v2679 = vadd.f32 %v2677, %v2678
    %v2680 = vrot.slane %v2679, 2
    %v2681 = vadd.f32 %v2679, %v2680
    %v2682 = vrot.slane %v2681, 1
    %v2683 = vadd.f32 %v2681, %v2682
    %v2684 = vsel %vm2479, %v2620, 0.0
    %v2685 = vrot.slane %v2684, 4
    %v2686 = vadd.f32 %v2684, %v2685
    %v2687 = vrot.slane %v2686, 2
    %v2688 = vadd.f32 %v2686, %v2687
    %v2689 = vrot.slane %v2688, 1
    %v2690 = vadd.f32 %v2688, %v2689
    %v2691 = vsel %vm2479, %v2621, 0.0
    %v2692 = vrot.slane %v2691, 4
    %v2693 = vadd.f32 %v2691, %v2692
    %v2694 = vrot.slane %v2693, 2
    %v2695 = vadd.f32 %v2693, %v2694
    %v2696 = vrot.slane %v2695, 1
    %v2697 = vadd.f32 %v2695, %v2696
    %v2698 = vsel %vm2479, %v2622, 0.0
    %v2699 = vrot.slane %v2698, 4
    %v2700 = vadd.f32 %v2698, %v2699
    %v2701 = vrot.slane %v2700, 2
    %v2702 = vadd.f32 %v2700, %v2701
    %v2703 = vrot.slane %v2702, 1
    %v2704 = vadd.f32 %v2702, %v2703
    %v2705 = vsel %vm2479, %v2623, 0.0
    %v2706 = vrot.slane %v2705, 4
    %v2707 = vadd.f32 %v2705, %v2706
    %v2708 = vrot.slane %v2707, 2
    %v2709 = vadd.f32 %v2707, %v2708
    %v2710 = vrot.slane %v2709, 1
    %v2711 = vadd.f32 %v2709, %v2710
    %v2712 = vsel %vm2479, %v2624, 0.0
    %v2713 = vrot.slane %v2712, 4
    %v2714 = vadd.f32 %v2712, %v2713
    %v2715 = vrot.slane %v2714, 2
    %v2716 = vadd.f32 %v2714, %v2715
    %v2717 = vrot.slane %v2716, 1
    %v2718 = vadd.f32 %v2716, %v2717
    %v2719 = vsel %vm2479, %v2625, 0.0
    %v2720 = vrot.slane %v2719, 4
    %v2721 = vadd.f32 %v2719, %v2720
    %v2722 = vrot.slane %v2721, 2
    %v2723 = vadd.f32 %v2721, %v2722
    %v2724 = vrot.slane %v2723, 1
    %v2725 = vadd.f32 %v2723, %v2724
    %v2726 = vsel %vm2479, %v2626, 0.0
    %v2727 = vrot.slane %v2726, 4
    %v2728 = vadd.f32 %v2726, %v2727
    %v2729 = vrot.slane %v2728, 2
    %v2730 = vadd.f32 %v2728, %v2729
    %v2731 = vrot.slane %v2730, 1
    %v2732 = vadd.f32 %v2730, %v2731
    %v2733 = vsel %vm2479, %v2627, 0.0
    %v2734 = vrot.slane %v2733, 4
    %v2735 = vadd.f32 %v2733, %v2734
    %v2736 = vrot.slane %v2735, 2
    %v2737 = vadd.f32 %v2735, %v2736
    %v2738 = vrot.slane %v2737, 1
    %v2739 = vadd.f32 %v2737, %v2738
    %s2740 = sld [smem:[#allocation2]]
    %v2741 = vstv %s2740
    %v2742 = vadd.f32 %v2634, %v2741
    %v2743 = vadd.f32 %v2641, %v2741
    %v2744 = vadd.f32 %v2648, %v2741
    %v2745 = vadd.f32 %v2655, %v2741
    %v2746 = vadd.f32 %v2662, %v2741
    %v2747 = vadd.f32 %v2669, %v2741
    %v2748 = vadd.f32 %v2676, %v2741
    %v2749 = vadd.f32 %v2683, %v2741
    %v2750 = vadd.f32 %v2690, %v2741
    %v2751 = vadd.f32 %v2697, %v2741
    %v2752 = vadd.f32 %v2704, %v2741
    %v2753 = vadd.f32 %v2711, %v2741
    %v2754 = vadd.f32 %v2718, %v2741
    %v2755 = vadd.f32 %v2725, %v2741
    %v2756 = vadd.f32 %v2732, %v2741
    %v2757 = vadd.f32 %v2739, %v2741
    %v2758 = vadd.f32 %v2742, %v2743
    %v2759 = vadd.f32 %v2758, %v2744
    %v2760 = vadd.f32 %v2759, %v2745
    %v2761 = vadd.f32 %v2760, %v2746
    %v2762 = vadd.f32 %v2761, %v2747
    %v2763 = vadd.f32 %v2762, %v2748
    %v2764 = vadd.f32 %v2763, %v2749
    %v2765 = vadd.f32 %v2764, %v2750
    %v2766 = vadd.f32 %v2765, %v2751
    %v2767 = vadd.f32 %v2766, %v2752
    %v2768 = vadd.f32 %v2767, %v2753
    %v2769 = vadd.f32 %v2768, %v2754
    %v2770 = vadd.f32 %v2769, %v2755
    %v2771 = vadd.f32 %v2770, %v2756
    %v2772 = vadd.f32 %v2771, %v2757
    %2773 = vadd.xlane.f32.xlu0 %v2772
    %v2774 = vpop.xlane.xlu0 %2773
    %v2775 = vmul.f32 %v2774, %v2489
    %v2776 = vsub.f32 %v2742, %v2775
    %v2777 = vsub.f32 %v2743, %v2775
    %v2778 = vsub.f32 %v2744, %v2775
    %v2779 = vsub.f32 %v2745, %v2775
    %v2780 = vsub.f32 %v2746, %v2775
    %v2781 = vsub.f32 %v2747, %v2775
    %v2782 = vsub.f32 %v2748, %v2775
    %v2783 = vsub.f32 %v2749, %v2775
    %v2784 = vsub.f32 %v2750, %v2775
    %v2785 = vsub.f32 %v2751, %v2775
    %v2786 = vsub.f32 %v2752, %v2775
    %v2787 = vsub.f32 %v2753, %v2775
    %v2788 = vsub.f32 %v2754, %v2775
    %v2789 = vsub.f32 %v2755, %v2775
    %v2790 = vsub.f32 %v2756, %v2775
    %v2791 = vsub.f32 %v2757, %v2775
    %v2792 = vmul.f32 %v2776, %v2776
    %v2793 = vmul.f32 %v2777, %v2777
    %v2794 = vmul.f32 %v2778, %v2778
    %v2795 = vmul.f32 %v2779, %v2779
    %v2796 = vmul.f32 %v2780, %v2780
    %v2797 = vmul.f32 %v2781, %v2781
    %v2798 = vmul.f32 %v2782, %v2782
    %v2799 = vmul.f32 %v2783, %v2783
    %v2800 = vmul.f32 %v2784, %v2784
    %v2801 = vmul.f32 %v2785, %v2785
    %v2802 = vmul.f32 %v2786, %v2786
    %v2803 = vmul.f32 %v2787, %v2787
    %v2804 = vmul.f32 %v2788, %v2788
    %v2805 = vmul.f32 %v2789, %v2789
    %v2806 = vmul.f32 %v2790, %v2790
    %v2807 = vmul.f32 %v2791, %v2791
    %v2808 = vadd.f32 %v2792, %v2793
    %v2809 = vadd.f32 %v2808, %v2794
    %v2810 = vadd.f32 %v2809, %v2795
    %v2811 = vadd.f32 %v2810, %v2796
    %v2812 = vadd.f32 %v2811, %v2797
    %v2813 = vadd.f32 %v2812, %v2798
    %v2814 = vadd.f32 %v2813, %v2799
    %v2815 = vadd.f32 %v2814, %v2800
    %v2816 = vadd.f32 %v2815, %v2801
    %v2817 = vadd.f32 %v2816, %v2802
    %v2818 = vadd.f32 %v2817, %v2803
    %v2819 = vadd.f32 %v2818, %v2804
    %v2820 = vadd.f32 %v2819, %v2805
    %v2821 = vadd.f32 %v2820, %v2806
    %v2822 = vadd.f32 %v2821, %v2807
    %2823 = vadd.xlane.f32.xlu0 %v2822
    %v2824 = vpop.xlane.xlu0 %2823
    %v2825 = vmul.f32 %v2824, %v2489
    %v2826 = vadd.f32 %v2825, 1e-05
    %v2827 = vrsqrt.pop %v2826
    %s2828 = sld [smem:[#allocation2 + $0x1]]
    %v2829 = vstv %s2828
    %v2830 = vmul.f32 %v2829, %v2827
    %v2831 = vmul.f32 %v2776, %v2830
    %v2832 = vmul.f32 %v2777, %v2830
    %v2833 = vmul.f32 %v2778, %v2830
    %v2834 = vmul.f32 %v2779, %v2830
    %v2835 = vmul.f32 %v2780, %v2830
    %v2836 = vmul.f32 %v2781, %v2830
    %v2837 = vmul.f32 %v2782, %v2830
    %v2838 = vmul.f32 %v2783, %v2830
    %v2839 = vmul.f32 %v2784, %v2830
    %v2840 = vmul.f32 %v2785, %v2830
    %v2841 = vmul.f32 %v2786, %v2830
    %v2842 = vmul.f32 %v2787, %v2830
    %v2843 = vmul.f32 %v2788, %v2830
    %v2844 = vmul.f32 %v2789, %v2830
    %v2845 = vmul.f32 %v2790, %v2830
    %v2846 = vmul.f32 %v2791, %v2830
    %s2847 = sld [smem:[#allocation2 + $0x2]]
    %v2848 = vstv %s2847
    %v2849 = vadd.f32 %v2831, %v2848
    %v2850 = vadd.f32 %v2832, %v2848
    %v2851 = vadd.f32 %v2833, %v2848
    %v2852 = vadd.f32 %v2834, %v2848
    %v2853 = vadd.f32 %v2835, %v2848
    %v2854 = vadd.f32 %v2836, %v2848
    %v2855 = vadd.f32 %v2837, %v2848
    %v2856 = vadd.f32 %v2838, %v2848
    %v2857 = vadd.f32 %v2839, %v2848
    %v2858 = vadd.f32 %v2840, %v2848
    %v2859 = vadd.f32 %v2841, %v2848
    %v2860 = vadd.f32 %v2842, %v2848
    %v2861 = vadd.f32 %v2843, %v2848
    %v2862 = vadd.f32 %v2844, %v2848
    %v2863 = vadd.f32 %v2845, %v2848
    %v2864 = vadd.f32 %v2846, %v2848
    %v2865 = vmax.f32 %v2849, 0.0
    %v2866 = vmax.f32 %v2850, 0.0
    %v2867 = vmax.f32 %v2851, 0.0
    %v2868 = vmax.f32 %v2852, 0.0
    %v2869 = vmax.f32 %v2853, 0.0
    %v2870 = vmax.f32 %v2854, 0.0
    %v2871 = vmax.f32 %v2855, 0.0
    %v2872 = vmax.f32 %v2856, 0.0
    %v2873 = vmax.f32 %v2857, 0.0
    %v2874 = vmax.f32 %v2858, 0.0
    %v2875 = vmax.f32 %v2859, 0.0
    %v2876 = vmax.f32 %v2860, 0.0
    %v2877 = vmax.f32 %v2861, 0.0
    %v2878 = vmax.f32 %v2862, 0.0
    %v2879 = vmax.f32 %v2863, 0.0
    %v2880 = vmax.f32 %v2864, 0.0
    %v2897 = vcombine.low %v2865, %v2866
    %v2898 = vcombine.low %v2867, %v2868
    %v2899 = vcombine.low %v2869, %v2870
    %v2900 = vcombine.low %v2871, %v2872
    %v2902 = vunpack.c.l.s4 1966171168
    %v2903 = vunpack.c.0.s8 %v2902
    %v2904 = vlaneseq
    %v2905 = vshrl.u32 %v2904, 7
    %v2906 = vsub.s32 %v2903, %v2905
    %v2907 = vrot.slane %v2897, %v2906
    %v2909 = vunpack.c.l.s4 1966171168
    %v2910 = vunpack.c.0.s8 %v2909
    %v2911 = vlaneseq
    %v2912 = vshrl.u32 %v2911, 7
    %v2913 = vsub.s32 %v2910, %v2912
    %v2914 = vrot.slane %v2898, %v2913
    %v2916 = vunpack.c.l.s4 1966171168
    %v2917 = vunpack.c.0.s8 %v2916
    %v2918 = vlaneseq
    %v2919 = vshrl.u32 %v2918, 7
    %v2920 = vsub.s32 %v2917, %v2919
    %v2921 = vrot.slane %v2899, %v2920
    %v2923 = vunpack.c.l.s4 1966171168
    %v2924 = vunpack.c.0.s8 %v2923
    %v2925 = vlaneseq
    %v2926 = vshrl.u32 %v2925, 7
    %v2927 = vsub.s32 %v2924, %v2926
    %v2928 = vrot.slane %v2900, %v2927
    %v2929 = vcombine.low %v2907, %v2914
    %v2930 = vcombine.low %v2921, %v2928
    %v2932 = vunpack.c.l.s4 1966171168
    %v2933 = vunpack.c.0.s8 %v2932
    %v2934 = vlaneseq
    %v2935 = vshrl.u32 %v2934, 7
    %v2936 = vsub.s32 %v2933, %v2935
    %v2937 = vrot.slane %v2929, %v2936
    %v2939 = vunpack.c.l.s4 1966171168
    %v2940 = vunpack.c.0.s8 %v2939
    %v2941 = vlaneseq
    %v2942 = vshrl.u32 %v2941, 7
    %v2943 = vsub.s32 %v2940, %v2942
    %v2944 = vrot.slane %v2930, %v2943
    %v2945 = vcombine.low %v2937, %v2944
    %v2946 = vcombine.low %v2873, %v2874
    %v2947 = vcombine.low %v2875, %v2876
    %v2948 = vcombine.low %v2877, %v2878
    %v2949 = vcombine.low %v2879, %v2880
    %v2951 = vunpack.c.l.s4 1966171168
    %v2952 = vunpack.c.0.s8 %v2951
    %v2953 = vlaneseq
    %v2954 = vshrl.u32 %v2953, 7
    %v2955 = vsub.s32 %v2952, %v2954
    %v2956 = vrot.slane %v2946, %v2955
    %v2958 = vunpack.c.l.s4 1966171168
    %v2959 = vunpack.c.0.s8 %v2958
    %v2960 = vlaneseq
    %v2961 = vshrl.u32 %v2960, 7
    %v2962 = vsub.s32 %v2959, %v2961
    %v2963 = vrot.slane %v2947, %v2962
    %v2965 = vunpack.c.l.s4 1966171168
    %v2966 = vunpack.c.0.s8 %v2965
    %v2967 = vlaneseq
    %v2968 = vshrl.u32 %v2967, 7
    %v2969 = vsub.s32 %v2966, %v2968
    %v2970 = vrot.slane %v2948, %v2969
    %v2972 = vunpack.c.l.s4 1966171168
    %v2973 = vunpack.c.0.s8 %v2972
    %v2974 = vlaneseq
    %v2975 = vshrl.u32 %v2974, 7
    %v2976 = vsub.s32 %v2973, %v2975
    %v2977 = vrot.slane %v2949, %v2976
    %v2978 = vcombine.low %v2956, %v2963
    %v2979 = vcombine.low %v2970, %v2977
    %v2981 = vunpack.c.l.s4 1966171168
    %v2982 = vunpack.c.0.s8 %v2981
    %v2983 = vlaneseq
    %v2984 = vshrl.u32 %v2983, 7
    %v2985 = vsub.s32 %v2982, %v2984
    %v2986 = vrot.slane %v2978, %v2985
    %v2988 = vunpack.c.l.s4 1966171168
    %v2989 = vunpack.c.0.s8 %v2988
    %v2990 = vlaneseq
    %v2991 = vshrl.u32 %v2990, 7
    %v2992 = vsub.s32 %v2989, %v2991
    %v2993 = vrot.slane %v2979, %v2992
    %v2994 = vcombine.low %v2986, %v2993
    %2997 = vst [vmem:[%s13] sm:$0xff] %v2945
    %2998 = vst [vmem:[%s13 + $0x8] sm:$0xff] %v2994
    // Predicated region
    $region58: #{policy_decoder_forward.1} parent=1 // pred_check
      _
    $region59: #{policy_decoder_forward.1} parent=1 // pred_check_branch
      %3000 = sbr.rel (0) target = $region61
    $region60: #{policy_decoder_forward.1} parent=1 // pred_region
      _
    $region61: #{policy_decoder_forward.1} parent=1 // pred_fallthru
      _
    // Predicated region
    $region62: #{policy_decoder_forward.1} parent=1 // pred_check
      _
    $region63: #{policy_decoder_forward.1} parent=1 // pred_check_branch
      %3002 = sbr.rel (0) target = $region65
    $region64: #{policy_decoder_forward.1} parent=1 // pred_region
      _
    $region65: #{policy_decoder_forward.1} parent=1 // pred_fallthru
      _
    %3003 = vsyncpa [#allocation3], 1

</llo_original>
